<compile_context>
chip_gen: v6e
topology: v6e:2x2x1
jax: 0.10.0
libtpu: 0.0.40
codegen_flags: <defaults>
</compile_context>

<pallas_src>
import math

import jax
import jax.numpy as jnp
from jax.experimental import pallas as pl
from jax.experimental.pallas import tpu as pltpu

LN_EPS = 1e-5
RMS_EPS = 1e-5


# ----------------------------- in-kernel helpers -----------------------------

def _gelu(x):
    # TODO(synk): PyTorch nn.GELU() default is the exact erf form; the tanh
    # approximation keeps the lowering to plain VPU/EUP ops (~1e-3 mismatch).
    c = math.sqrt(2.0 / math.pi)
    return 0.5 * x * (1.0 + jnp.tanh(c * (x + 0.044715 * x * x * x)))


def _layernorm(x, gamma, beta):
    mu = jnp.mean(x, axis=-1, keepdims=True)
    var = jnp.mean((x - mu) ** 2, axis=-1, keepdims=True)
    return (x - mu) * jax.lax.rsqrt(var + LN_EPS) * gamma + beta


def _silu(x):
    return x * jax.nn.sigmoid(x)


def _softplus(x):
    return jnp.maximum(x, 0.0) + jnp.log(1.0 + jnp.exp(-jnp.abs(x)))


# ------------------------------ fused kernel ---------------------------------

def _net_kernel(x_ref, w_in0_ref, pack_in_ref,
                lw_in_ref, lw_dtf_ref, lw_bc_ref, lw_out_ref, lpack_ref, la_ref,
                w_o1_ref, w_o2_ref, pack_out_ref,
                o_ref,
                da_scr, dbx_scr):
    f32, bf16 = jnp.float32, jnp.bfloat16
    L = x_ref.shape[0]
    H = w_in0_ref.shape[1]
    n_layers = lw_in_ref.shape[0]
    ED = lw_dtf_ref.shape[1]
    N = lw_bc_ref.shape[2] // 2
    K = lpack_ref.shape[1] - 4
    Hh = w_o1_ref.shape[1]
    LN = L * N

    # ---- input projection: Linear -> LayerNorm -> GELU (Dropout = identity) ----
    pin = pack_in_ref[...]                                    # (3, H) f32
    h = jnp.dot(x_ref[...].astype(bf16), w_in0_ref[...],
                preferred_element_type=f32) + pin[0:1, :]
    h = _gelu(_layernorm(h, pin[1:2, :], pin[2:3, :]))

    # ---- hoisted scan-domain constants (built once, shared across layers) ----
    # sel_t replicates per-timestep rows into the flat (L*N) domain; sel
    # contracts the flat domain back to L rows.
    rowt = jax.lax.broadcasted_iota(jnp.int32, (LN, L), 0)
    colt = jax.lax.broadcasted_iota(jnp.int32, (LN, L), 1)
    sel_t = jnp.where((rowt >= colt * N) & (rowt < (colt + 1) * N), 1.0, 0.0)
    row = jax.lax.broadcasted_iota(jnp.int32, (L, LN), 0)
    col = jax.lax.broadcasted_iota(jnp.int32, (L, LN), 1)
    sel = jnp.where((col >= row * N) & (col < (row + 1) * N), 1.0, 0.0)
    # mask2n[r, m] = (m mod N == r mod N): picks B[l,n]/C[l,n] out of the
    # replicated bc rows (r = l*N + n); onesblk broadcasts them over ED lanes.
    ri = jax.lax.broadcasted_iota(jnp.int32, (LN, 2 * N), 0)
    mi = jax.lax.broadcasted_iota(jnp.int32, (LN, 2 * N), 1)
    if N & (N - 1) == 0:
        mask2n = jnp.where((mi & (N - 1)) == (ri & (N - 1)), 1.0, 0.0)
    else:  # TODO(synk): non power-of-two d_state falls back to integer remainder
        mask2n = jnp.where((mi % N) == (ri % N), 1.0, 0.0)
    oi = jax.lax.broadcasted_iota(jnp.int32, (2 * N, 2 * ED), 0)
    oj = jax.lax.broadcasted_iota(jnp.int32, (2 * N, 2 * ED), 1)
    onesblk = jnp.where(((oi < N) & (oj < ED)) | ((oi >= N) & (oj >= ED)), 1.0, 0.0)
    trow = jax.lax.broadcasted_iota(jnp.int32, (L, ED), 0)     # conv causal mask

    # ---- Mamba residual blocks ----
    for l in range(n_layers):
        pack = lpack_ref[l]                    # (4+K, ED) packed small params
        rms_w = pack[0:1, :H]
        conv_w = pack[1:1 + K, :]
        conv_b = pack[1 + K:2 + K, :]
        b_dt = pack[2 + K:3 + K, :]
        d_vec = pack[3 + K:4 + K, :]

        x_res = h

        # RMSNorm (f32)
        xn = x_res * jax.lax.rsqrt(
            jnp.mean(x_res * x_res, axis=-1, keepdims=True) + RMS_EPS) * rms_w

        # in_proj (bf16 weights, f32 accumulation), split conv branch / gate
        xz = jnp.dot(xn.astype(bf16), lw_in_ref[l],
                     preferred_element_type=f32)                         # (L, 2ED)
        xp = xz[:, :ED]
        z = xz[:, ED:]

        # depthwise causal conv1d: XLU roll + iota mask (no pad/concat copies)
        conv = conv_b + xp * conv_w[K - 1:K, :]
        for s in range(1, K):                  # out[t] += w[K-1-s] * x[t - s]
            shifted = jnp.where(trow >= s, pltpu.roll(xp, shift=s, axis=0), 0.0)
            conv = conv + shifted * conv_w[K - 1 - s:K - s, :]
        x_act = _silu(conv)                                              # (L, ED)

        # SSM parameters. dt_rank bottleneck folded into lw_dtf on the host.
        xab = x_act.astype(bf16)
        delta = _softplus(
            jnp.dot(xab, lw_dtf_ref[l], preferred_element_type=f32) + b_dt)
        bc = jnp.dot(xab, lw_bc_ref[l], preferred_element_type=f32)      # (L, 2N)

        # One fused, lane-dense replication matmul:
        #   rep[l*N+n, :ED] = delta[l], rep[l*N+n, ED:] = delta[l] * x_act[l]
        rep = jnp.dot(sel_t, jnp.concatenate([delta, delta * x_act], axis=1),
                      preferred_element_type=f32)                        # (LN, 2ED)
        # Broadcast B[l,n]/C[l,n] over ED lanes (bcb[:, :ED]=B, bcb[:, ED:]=C)
        bc_rep = jnp.dot(sel_t, bc, preferred_element_type=f32)          # (LN, 2N)
        bcb = jnp.dot(bc_rep * mask2n, onesblk, preferred_element_type=f32)

        # Hoisted scan coefficients; -exp(A_log) pre-tiled on the host (la_ref).
        da_scr[...] = jnp.exp(rep[:, :ED] * la_ref[l])     # one batched EUP pass
        dbx_scr[...] = rep[:, ED:] * bcb[:, :ED]

        # Serial scan over time: L is small & static, states stay in registers
        # (no per-step masked stores, no scratch round trip).
        hstate = jnp.zeros((N, ED), f32)
        states = []
        for t in range(L):
            hstate = (da_scr[t * N:(t + 1) * N, :] * hstate
                      + dbx_scr[t * N:(t + 1) * N, :])
            states.append(hstate)
        hs = jnp.concatenate(states, axis=0)                             # (LN, ED)

        # Batched C-contraction: one MXU pass against the hoisted sel matrix.
        y = jnp.dot(sel, hs * bcb[:, ED:], preferred_element_type=f32)   # (L, ED)
        y = (y + d_vec * x_act) * _silu(z)
        h = jnp.dot(y.astype(bf16), lw_out_ref[l],
                    preferred_element_type=f32) + x_res

    # ---- output projection: LN -> Linear -> GELU -> LN -> Linear -> Tanh ----
    pout = pack_out_ref[...]                                   # (6, 128) f32
    g = _layernorm(h, pout[0:1, :H], pout[1:2, :H])
    g = jnp.dot(g.astype(bf16), w_o1_ref[...], preferred_element_type=f32) \
        + pout[2:3, :Hh]
    g = _gelu(g)
    g = _layernorm(g, pout[3:4, :Hh], pout[4:5, :Hh])
    g = jnp.dot(g.astype(bf16), w_o2_ref[...], preferred_element_type=f32) \
        + pout[5:6, :]
    # Lane-dense (L, 128) store; real out_dim columns are sliced in the wrapper.
    o_ref[...] = jnp.tanh(g)


# --------------------------------- wrapper ------------------------------------

def net_forward(x, pp, *, out_dim):
    """x: (1, L, in_dim) float32 -> (L * out_dim,) float32."""
    x2 = x[0]                                          # == x.squeeze(0)
    L = x2.shape[0]
    N = pp["lw_bc"].shape[2] // 2
    ED = pp["lw_dtf"].shape[1]
    out_pad = pp["w_out2"].shape[1]

    def vmem():
        return pl.BlockSpec(memory_space=pltpu.MemorySpace.VMEM)

    inputs = (x2, pp["w_in0"], pp["pack_in"], pp["lw_in"], pp["lw_dtf"],
              pp["lw_bc"], pp["lw_out"], pp["lpack"], pp["la_rep"],
              pp["w_out1"], pp["w_out2"], pp["pack_out"])

    o = pl.pallas_call(
        _net_kernel,
        out_shape=jax.ShapeDtypeStruct((L, out_pad), jnp.float32),
        in_specs=[vmem() for _ in inputs],
        out_specs=vmem(),
        scratch_shapes=[pltpu.VMEM((L * N, ED), jnp.float32) for _ in range(2)],
    )(*inputs)
    return o[:, :out_dim].reshape(-1)                  # == x.flatten()


# --------------------------- deterministic params -----------------------------

def init_params(key, in_dim, out_dim, hidden, n_layers,
                d_state=16, d_conv=4, expand=2):
    H = max(hidden, in_dim)                  # hidden_dim = max(args.hidden, in_dim)
    ED = expand * H                          # d_inner
    R = math.ceil(H / 16)                    # dt_rank = 'auto'
    Hh = H // 2

    ks = iter(jax.random.split(key, 8 + 8 * n_layers))   # generous key budget

    def dense(shape, scale):
        return jax.random.normal(next(ks), shape, jnp.float32) * scale

    params = {
        "w_in": dense((in_dim, H), 1.0 / math.sqrt(in_dim)),
        "b_in": jnp.zeros((1, H), jnp.float32),
        "ln_in_g": jnp.ones((1, H), jnp.float32),
        "ln_in_b": jnp.zeros((1, H), jnp.float32),
    }

    layers = []
    for _ in range(n_layers):
        layers.append({
            "rms_w": jnp.ones((1, H), jnp.float32),
            "w_in": dense((H, 2 * ED), 1.0 / math.sqrt(H)),
            "conv_w": dense((d_conv, ED), 1.0 / math.sqrt(d_conv)),
            "conv_b": jnp.zeros((1, ED), jnp.float32),
            "w_x": dense((ED, R + 2 * d_state), 1.0 / math.sqrt(ED)),
            "w_dt": dense((R, ED), 1.0 / math.sqrt(R)),
            "b_dt": dense((1, ED), 0.1),
            # S4D-real init, stored as (N, ED): A[n, e] = n+1
            "a_log": jnp.log(jnp.tile(
                jnp.arange(1, d_state + 1, dtype=jnp.float32)[:, None], (1, ED))),
            "d": jnp.ones((1, ED), jnp.float32),
            "w_out": dense((ED, H), 1.0 / math.sqrt(ED)),
        })
    params["layers"] = layers

    params.update({
        "ln1_g": jnp.ones((1, H), jnp.float32),
        "ln1_b": jnp.zeros((1, H), jnp.float32),
        "w_out1": dense((H, Hh), 1.0 / math.sqrt(H)),
        "b_out1": jnp.zeros((1, Hh), jnp.float32),
        "ln2_g": jnp.ones((1, Hh), jnp.float32),
        "ln2_b": jnp.zeros((1, Hh), jnp.float32),
        "w_out2": dense((Hh, out_dim), 1.0 / math.sqrt(Hh)),
        "b_out2": jnp.zeros((1, out_dim), jnp.float32),
    })
    return params


def pack_params(p, seq_len):
    """Host-side fusion/packing: fold dt_rank matmul, keep w_bc un-transposed,
    pre-tile -exp(A_log), cast matmul weights to bf16, pad output to 128 lanes."""
    H = p["w_in"].shape[1]
    layers = p["layers"]
    N, ED = layers[0]["a_log"].shape
    R = layers[0]["w_dt"].shape[0]
    bf16 = jnp.bfloat16
    OUTP = max(128, H)                       # lane-dense padded output width

    def pad_lanes(v, width):
        return jnp.pad(v, ((0, 0), (0, width - v.shape[1])))

    lw_in = jnp.stack([l["w_in"] for l in layers]).astype(bf16)             # (nl,H,2ED)
    lw_dtf = jnp.stack([l["w_x"][:, :R] @ l["w_dt"] for l in layers]).astype(bf16)
    lw_bc = jnp.stack([l["w_x"][:, R:] for l in layers]).astype(bf16)       # (nl,ED,2N)
    lw_out = jnp.stack([l["w_out"] for l in layers]).astype(bf16)           # (nl,ED,H)
    lpack = jnp.stack([jnp.concatenate([
        pad_lanes(l["rms_w"], ED), l["conv_w"], l["conv_b"], l["b_dt"], l["d"]],
        axis=0) for l in layers])                                           # (nl,4+K,ED)
    la_rep = jnp.stack([jnp.tile(-jnp.exp(l["a_log"]), (seq_len, 1))
                        for l in layers])                                   # (nl,L*N,ED)

    pack_in = jnp.concatenate([p["b_in"], p["ln_in_g"], p["ln_in_b"]], axis=0)
    pack_out = jnp.concatenate([
        pad_lanes(p["ln1_g"], OUTP), pad_lanes(p["ln1_b"], OUTP),
        pad_lanes(p["b_out1"], OUTP), pad_lanes(p["ln2_g"], OUTP),
        pad_lanes(p["ln2_b"], OUTP), pad_lanes(p["b_out2"], OUTP)], axis=0)  # (6,OUTP)

    return dict(
        w_in0=p["w_in"].astype(bf16), pack_in=pack_in, lw_in=lw_in,
        lw_dtf=lw_dtf, lw_bc=lw_bc, lw_out=lw_out, lpack=lpack, la_rep=la_rep,
        w_out1=p["w_out1"].astype(bf16),
        w_out2=pad_lanes(p["w_out2"], OUTP).astype(bf16),
        pack_out=pack_out)


# ----------------------------------- main --------------------------------------

if __name__ == "__main__":
    in_dim, out_dim = 16, 4
    hidden, n_layers = 32, 2                 # args.hidden=32, args.layer=2
    L = 8                                    # sequence length

    key = jax.random.PRNGKey(0)
    k_x, k_p = jax.random.split(key)
    x = jax.random.normal(k_x, (1, L, in_dim), jnp.float32)

    raw_params = init_params(k_p, in_dim, out_dim, hidden, n_layers)
    pp = pack_params(raw_params, seq_len=L)

    fwd = jax.jit(net_forward, static_argnames=("out_dim",))
    y = fwd(x, pp, out_dim=out_dim)
    jax.block_until_ready(y)

    assert y.shape == (L * out_dim,), y.shape
    assert bool(jnp.all(jnp.isfinite(y)))
    print("KERNEL_OK")
</pallas_src>

<mosaic_0001>
module attributes {stable_mosaic.version = 11 : i64} {
  func.func @_net_kernel(%arg0: memref<8x16xf32, #tpu.memory_space<vmem>>, %arg1: memref<16x32xbf16, #tpu.memory_space<vmem>>, %arg2: memref<3x32xf32, #tpu.memory_space<vmem>>, %arg3: memref<2x32x128xbf16, #tpu.memory_space<vmem>>, %arg4: memref<2x64x64xbf16, #tpu.memory_space<vmem>>, %arg5: memref<2x64x32xbf16, #tpu.memory_space<vmem>>, %arg6: memref<2x64x32xbf16, #tpu.memory_space<vmem>>, %arg7: memref<2x8x64xf32, #tpu.memory_space<vmem>>, %arg8: memref<2x128x64xf32, #tpu.memory_space<vmem>>, %arg9: memref<32x16xbf16, #tpu.memory_space<vmem>>, %arg10: memref<16x128xbf16, #tpu.memory_space<vmem>>, %arg11: memref<6x128xf32, #tpu.memory_space<vmem>>, %arg12: memref<8x128xf32, #tpu.memory_space<vmem>>, %arg13: memref<128x64xf32, #tpu.memory_space<vmem>>, %arg14: memref<128x64xf32, #tpu.memory_space<vmem>>) attributes {dimension_semantics = [], scalar_prefetch = 0 : i64, scratch_operands = 2 : i64, tpu.core_type = #tpu.core_type<tc>} {
    %c0 = arith.constant 0 : index
    %c0_0 = arith.constant 0 : index
    %0 = vector.load %arg2[%c0, %c0_0] : memref<3x32xf32, #tpu.memory_space<vmem>>, vector<3x32xf32>
    %c0_1 = arith.constant 0 : index
    %c0_2 = arith.constant 0 : index
    %1 = vector.load %arg0[%c0_1, %c0_2] : memref<8x16xf32, #tpu.memory_space<vmem>>, vector<8x16xf32>
    %2 = arith.truncf %1 : vector<8x16xf32> to vector<8x16xbf16>
    %c0_3 = arith.constant 0 : index
    %c0_4 = arith.constant 0 : index
    %3 = vector.load %arg1[%c0_3, %c0_4] : memref<16x32xbf16, #tpu.memory_space<vmem>>, vector<16x32xbf16>
    %cst = arith.constant dense<0.000000e+00> : vector<8x32xf32>
    %4 = tpu.matmul %2, %3, %cst {dimension_numbers = #tpu.dot_dimension_numbers<[1], [0], [0], [1], [0, 0, 1, 1], [], []>} : vector<8x16xbf16>, vector<16x32xbf16>, vector<8x32xf32> -> vector<8x32xf32>
    %5 = vector.extract_strided_slice %0 {offsets = [0, 0], sizes = [1, 32], strides = [1, 1]} : vector<3x32xf32> to vector<1x32xf32>
    %6 = vector.broadcast %5 : vector<1x32xf32> to vector<8x32xf32>
    %7 = arith.addf %4, %6 : vector<8x32xf32>
    %8 = vector.extract_strided_slice %0 {offsets = [1, 0], sizes = [1, 32], strides = [1, 1]} : vector<3x32xf32> to vector<1x32xf32>
    %9 = vector.extract_strided_slice %0 {offsets = [2, 0], sizes = [1, 32], strides = [1, 1]} : vector<3x32xf32> to vector<1x32xf32>
    %cst_5 = arith.constant dense<0.000000e+00> : vector<8xf32>
    %10 = vector.multi_reduction <add>, %7, %cst_5 [1] : vector<8x32xf32> to vector<8xf32>
    %11 = vector.shape_cast %10 : vector<8xf32> to vector<8x1xf32>
    %cst_6 = arith.constant 3.200000e+01 : f32
    %12 = vector.broadcast %cst_6 : f32 to vector<8x1xf32>
    %13 = arith.divf %11, %12 : vector<8x1xf32>
    %14 = vector.broadcast %13 : vector<8x1xf32> to vector<8x32xf32>
    %15 = arith.subf %7, %14 : vector<8x32xf32>
    %16 = arith.mulf %15, %15 : vector<8x32xf32>
    %cst_7 = arith.constant dense<0.000000e+00> : vector<8xf32>
    %17 = vector.multi_reduction <add>, %16, %cst_7 [1] : vector<8x32xf32> to vector<8xf32>
    %18 = vector.shape_cast %17 : vector<8xf32> to vector<8x1xf32>
    %cst_8 = arith.constant 3.200000e+01 : f32
    %19 = vector.broadcast %cst_8 : f32 to vector<8x1xf32>
    %20 = arith.divf %18, %19 : vector<8x1xf32>
    %21 = vector.broadcast %13 : vector<8x1xf32> to vector<8x32xf32>
    %22 = arith.subf %7, %21 : vector<8x32xf32>
    %cst_9 = arith.constant 9.99999974E-6 : f32
    %23 = vector.broadcast %cst_9 : f32 to vector<8x1xf32>
    %24 = arith.addf %20, %23 : vector<8x1xf32>
    %25 = math.rsqrt %24 : vector<8x1xf32>
    %26 = vector.broadcast %25 : vector<8x1xf32> to vector<8x32xf32>
    %27 = arith.mulf %22, %26 : vector<8x32xf32>
    %28 = vector.broadcast %8 : vector<1x32xf32> to vector<8x32xf32>
    %29 = arith.mulf %27, %28 : vector<8x32xf32>
    %30 = vector.broadcast %9 : vector<1x32xf32> to vector<8x32xf32>
    %31 = arith.addf %29, %30 : vector<8x32xf32>
    %cst_10 = arith.constant 5.000000e-01 : f32
    %32 = vector.broadcast %cst_10 : f32 to vector<8x32xf32>
    %33 = arith.mulf %32, %31 : vector<8x32xf32>
    %cst_11 = arith.constant 4.471500e-02 : f32
    %34 = vector.broadcast %cst_11 : f32 to vector<8x32xf32>
    %35 = arith.mulf %34, %31 : vector<8x32xf32>
    %36 = arith.mulf %35, %31 : vector<8x32xf32>
    %37 = arith.mulf %36, %31 : vector<8x32xf32>
    %38 = arith.addf %31, %37 : vector<8x32xf32>
    %cst_12 = arith.constant 0.797884583 : f32
    %39 = vector.broadcast %cst_12 : f32 to vector<8x32xf32>
    %40 = arith.mulf %39, %38 : vector<8x32xf32>
    %41 = math.tanh %40 : vector<8x32xf32>
    %cst_13 = arith.constant 1.000000e+00 : f32
    %42 = vector.broadcast %cst_13 : f32 to vector<8x32xf32>
    %43 = arith.addf %42, %41 : vector<8x32xf32>
    %44 = arith.mulf %33, %43 : vector<8x32xf32>
    %45 = tpu.iota {dimensions = array<i32: 0>} : vector<128x8xi32>
    %46 = tpu.iota {dimensions = array<i32: 1>} : vector<128x8xi32>
    %c16_i32 = arith.constant 16 : i32
    %47 = vector.broadcast %c16_i32 : i32 to vector<128x8xi32>
    %48 = arith.muli %46, %47 : vector<128x8xi32>
    %49 = arith.cmpi sge, %45, %48 : vector<128x8xi32>
    %c1_i32 = arith.constant 1 : i32
    %50 = vector.broadcast %c1_i32 : i32 to vector<128x8xi32>
    %51 = arith.addi %46, %50 : vector<128x8xi32>
    %c16_i32_14 = arith.constant 16 : i32
    %52 = vector.broadcast %c16_i32_14 : i32 to vector<128x8xi32>
    %53 = arith.muli %51, %52 : vector<128x8xi32>
    %54 = arith.cmpi slt, %45, %53 : vector<128x8xi32>
    %55 = arith.andi %49, %54 : vector<128x8xi1>
    %cst_15 = arith.constant 1.000000e+00 : f32
    %cst_16 = arith.constant 0.000000e+00 : f32
    %56 = vector.broadcast %cst_15 : f32 to vector<128x8xf32>
    %57 = vector.broadcast %cst_16 : f32 to vector<128x8xf32>
    %58 = arith.select %55, %56, %57 : vector<128x8xi1>, vector<128x8xf32>
    %59 = tpu.iota {dimensions = array<i32: 0>} : vector<8x128xi32>
    %60 = tpu.iota {dimensions = array<i32: 1>} : vector<8x128xi32>
    %c16_i32_17 = arith.constant 16 : i32
    %61 = vector.broadcast %c16_i32_17 : i32 to vector<8x128xi32>
    %62 = arith.muli %59, %61 : vector<8x128xi32>
    %63 = arith.cmpi sge, %60, %62 : vector<8x128xi32>
    %c1_i32_18 = arith.constant 1 : i32
    %64 = vector.broadcast %c1_i32_18 : i32 to vector<8x128xi32>
    %65 = arith.addi %59, %64 : vector<8x128xi32>
    %c16_i32_19 = arith.constant 16 : i32
    %66 = vector.broadcast %c16_i32_19 : i32 to vector<8x128xi32>
    %67 = arith.muli %65, %66 : vector<8x128xi32>
    %68 = arith.cmpi slt, %60, %67 : vector<8x128xi32>
    %69 = arith.andi %63, %68 : vector<8x128xi1>
    %cst_20 = arith.constant 1.000000e+00 : f32
    %cst_21 = arith.constant 0.000000e+00 : f32
    %70 = vector.broadcast %cst_20 : f32 to vector<8x128xf32>
    %71 = vector.broadcast %cst_21 : f32 to vector<8x128xf32>
    %72 = arith.select %69, %70, %71 : vector<8x128xi1>, vector<8x128xf32>
    %73 = tpu.iota {dimensions = array<i32: 0>} : vector<128x32xi32>
    %74 = tpu.iota {dimensions = array<i32: 1>} : vector<128x32xi32>
    %c15_i32 = arith.constant 15 : i32
    %75 = vector.broadcast %c15_i32 : i32 to vector<128x32xi32>
    %76 = arith.andi %74, %75 : vector<128x32xi32>
    %c15_i32_22 = arith.constant 15 : i32
    %77 = vector.broadcast %c15_i32_22 : i32 to vector<128x32xi32>
    %78 = arith.andi %73, %77 : vector<128x32xi32>
    %79 = arith.cmpi eq, %76, %78 : vector<128x32xi32>
    %cst_23 = arith.constant 1.000000e+00 : f32
    %cst_24 = arith.constant 0.000000e+00 : f32
    %80 = vector.broadcast %cst_23 : f32 to vector<128x32xf32>
    %81 = vector.broadcast %cst_24 : f32 to vector<128x32xf32>
    %82 = arith.select %79, %80, %81 : vector<128x32xi1>, vector<128x32xf32>
    %83 = tpu.iota {dimensions = array<i32: 0>} : vector<32x128xi32>
    %84 = tpu.iota {dimensions = array<i32: 1>} : vector<32x128xi32>
    %c16_i32_25 = arith.constant 16 : i32
    %85 = vector.broadcast %c16_i32_25 : i32 to vector<32x128xi32>
    %86 = arith.cmpi slt, %83, %85 : vector<32x128xi32>
    %c64_i32 = arith.constant 64 : i32
    %87 = vector.broadcast %c64_i32 : i32 to vector<32x128xi32>
    %88 = arith.cmpi slt, %84, %87 : vector<32x128xi32>
    %89 = arith.andi %86, %88 : vector<32x128xi1>
    %c16_i32_26 = arith.constant 16 : i32
    %90 = vector.broadcast %c16_i32_26 : i32 to vector<32x128xi32>
    %91 = arith.cmpi sge, %83, %90 : vector<32x128xi32>
    %c64_i32_27 = arith.constant 64 : i32
    %92 = vector.broadcast %c64_i32_27 : i32 to vector<32x128xi32>
    %93 = arith.cmpi sge, %84, %92 : vector<32x128xi32>
    %94 = arith.andi %91, %93 : vector<32x128xi1>
    %95 = arith.ori %89, %94 : vector<32x128xi1>
    %cst_28 = arith.constant 1.000000e+00 : f32
    %cst_29 = arith.constant 0.000000e+00 : f32
    %96 = vector.broadcast %cst_28 : f32 to vector<32x128xf32>
    %97 = vector.broadcast %cst_29 : f32 to vector<32x128xf32>
    %98 = arith.select %95, %96, %97 : vector<32x128xi1>, vector<32x128xf32>
    %99 = tpu.iota {dimensions = array<i32: 0>} : vector<8x64xi32>
    %c0_30 = arith.constant 0 : index
    %c0_31 = arith.constant 0 : index
    %c0_32 = arith.constant 0 : index
    %100 = vector.load %arg7[%c0_30, %c0_31, %c0_32] : memref<2x8x64xf32, #tpu.memory_space<vmem>>, vector<1x8x64xf32>
    %101 = vector.shape_cast %100 : vector<1x8x64xf32> to vector<8x64xf32>
    %102 = vector.extract_strided_slice %101 {offsets = [0, 0], sizes = [1, 32], strides = [1, 1]} : vector<8x64xf32> to vector<1x32xf32>
    %103 = vector.extract_strided_slice %101 {offsets = [1, 0], sizes = [4, 64], strides = [1, 1]} : vector<8x64xf32> to vector<4x64xf32>
    %104 = vector.extract_strided_slice %101 {offsets = [5, 0], sizes = [1, 64], strides = [1, 1]} : vector<8x64xf32> to vector<1x64xf32>
    %105 = vector.extract_strided_slice %101 {offsets = [6, 0], sizes = [1, 64], strides = [1, 1]} : vector<8x64xf32> to vector<1x64xf32>
    %106 = vector.extract_strided_slice %101 {offsets = [7, 0], sizes = [1, 64], strides = [1, 1]} : vector<8x64xf32> to vector<1x64xf32>
    %107 = arith.mulf %44, %44 : vector<8x32xf32>
    %cst_33 = arith.constant dense<0.000000e+00> : vector<8xf32>
    %108 = vector.multi_reduction <add>, %107, %cst_33 [1] : vector<8x32xf32> to vector<8xf32>
    %109 = vector.shape_cast %108 : vector<8xf32> to vector<8x1xf32>
    %cst_34 = arith.constant 3.200000e+01 : f32
    %110 = vector.broadcast %cst_34 : f32 to vector<8x1xf32>
    %111 = arith.divf %109, %110 : vector<8x1xf32>
    %cst_35 = arith.constant 9.99999974E-6 : f32
    %112 = vector.broadcast %cst_35 : f32 to vector<8x1xf32>
    %113 = arith.addf %111, %112 : vector<8x1xf32>
    %114 = math.rsqrt %113 : vector<8x1xf32>
    %115 = vector.broadcast %114 : vector<8x1xf32> to vector<8x32xf32>
    %116 = arith.mulf %44, %115 : vector<8x32xf32>
    %117 = vector.broadcast %102 : vector<1x32xf32> to vector<8x32xf32>
    %118 = arith.mulf %116, %117 : vector<8x32xf32>
    %119 = arith.truncf %118 : vector<8x32xf32> to vector<8x32xbf16>
    %c0_36 = arith.constant 0 : index
    %c0_37 = arith.constant 0 : index
    %c0_38 = arith.constant 0 : index
    %120 = vector.load %arg3[%c0_36, %c0_37, %c0_38] : memref<2x32x128xbf16, #tpu.memory_space<vmem>>, vector<1x32x128xbf16>
    %121 = vector.shape_cast %120 : vector<1x32x128xbf16> to vector<32x128xbf16>
    %cst_39 = arith.constant dense<0.000000e+00> : vector<8x128xf32>
    %122 = tpu.matmul %119, %121, %cst_39 {dimension_numbers = #tpu.dot_dimension_numbers<[1], [0], [0], [1], [0, 0, 1, 1], [], []>} : vector<8x32xbf16>, vector<32x128xbf16>, vector<8x128xf32> -> vector<8x128xf32>
    %123 = vector.extract_strided_slice %122 {offsets = [0, 0], sizes = [8, 64], strides = [1, 1]} : vector<8x128xf32> to vector<8x64xf32>
    %124 = vector.extract_strided_slice %122 {offsets = [0, 64], sizes = [8, 64], strides = [1, 1]} : vector<8x128xf32> to vector<8x64xf32>
    %125 = vector.extract_strided_slice %103 {offsets = [3, 0], sizes = [1, 64], strides = [1, 1]} : vector<4x64xf32> to vector<1x64xf32>
    %126 = vector.broadcast %125 : vector<1x64xf32> to vector<8x64xf32>
    %127 = arith.mulf %123, %126 : vector<8x64xf32>
    %128 = vector.broadcast %104 : vector<1x64xf32> to vector<8x64xf32>
    %129 = arith.addf %128, %127 : vector<8x64xf32>
    %c1_i32_40 = arith.constant 1 : i32
    %130 = vector.broadcast %c1_i32_40 : i32 to vector<8x64xi32>
    %131 = arith.cmpi sge, %99, %130 : vector<8x64xi32>
    %c1_i32_41 = arith.constant 1 : i32
    %132 = tpu.dynamic_rotate %123 by %c1_i32_41 dim 0 : vector<8x64xf32>, i32 -> vector<8x64xf32>
    %cst_42 = arith.constant 0.000000e+00 : f32
    %133 = vector.broadcast %cst_42 : f32 to vector<8x64xf32>
    %134 = arith.select %131, %132, %133 : vector<8x64xi1>, vector<8x64xf32>
    %135 = vector.extract_strided_slice %103 {offsets = [2, 0], sizes = [1, 64], strides = [1, 1]} : vector<4x64xf32> to vector<1x64xf32>
    %136 = vector.broadcast %135 : vector<1x64xf32> to vector<8x64xf32>
    %137 = arith.mulf %134, %136 : vector<8x64xf32>
    %138 = arith.addf %129, %137 : vector<8x64xf32>
    %c2_i32 = arith.constant 2 : i32
    %139 = vector.broadcast %c2_i32 : i32 to vector<8x64xi32>
    %140 = arith.cmpi sge, %99, %139 : vector<8x64xi32>
    %c2_i32_43 = arith.constant 2 : i32
    %141 = tpu.dynamic_rotate %123 by %c2_i32_43 dim 0 : vector<8x64xf32>, i32 -> vector<8x64xf32>
    %cst_44 = arith.constant 0.000000e+00 : f32
    %142 = vector.broadcast %cst_44 : f32 to vector<8x64xf32>
    %143 = arith.select %140, %141, %142 : vector<8x64xi1>, vector<8x64xf32>
    %144 = vector.extract_strided_slice %103 {offsets = [1, 0], sizes = [1, 64], strides = [1, 1]} : vector<4x64xf32> to vector<1x64xf32>
    %145 = vector.broadcast %144 : vector<1x64xf32> to vector<8x64xf32>
    %146 = arith.mulf %143, %145 : vector<8x64xf32>
    %147 = arith.addf %138, %146 : vector<8x64xf32>
    %c3_i32 = arith.constant 3 : i32
    %148 = vector.broadcast %c3_i32 : i32 to vector<8x64xi32>
    %149 = arith.cmpi sge, %99, %148 : vector<8x64xi32>
    %c3_i32_45 = arith.constant 3 : i32
    %150 = tpu.dynamic_rotate %123 by %c3_i32_45 dim 0 : vector<8x64xf32>, i32 -> vector<8x64xf32>
    %cst_46 = arith.constant 0.000000e+00 : f32
    %151 = vector.broadcast %cst_46 : f32 to vector<8x64xf32>
    %152 = arith.select %149, %150, %151 : vector<8x64xi1>, vector<8x64xf32>
    %153 = vector.extract_strided_slice %103 {offsets = [0, 0], sizes = [1, 64], strides = [1, 1]} : vector<4x64xf32> to vector<1x64xf32>
    %154 = vector.broadcast %153 : vector<1x64xf32> to vector<8x64xf32>
    %155 = arith.mulf %152, %154 : vector<8x64xf32>
    %156 = arith.addf %147, %155 : vector<8x64xf32>
    %157 = arith.negf %156 : vector<8x64xf32>
    %158 = math.exp %157 : vector<8x64xf32>
    %cst_47 = arith.constant 1.000000e+00 : f32
    %159 = vector.broadcast %cst_47 : f32 to vector<8x64xf32>
    %160 = arith.addf %159, %158 : vector<8x64xf32>
    %161 = arith.divf %159, %160 : vector<8x64xf32>
    %162 = arith.mulf %156, %161 : vector<8x64xf32>
    %163 = arith.truncf %162 : vector<8x64xf32> to vector<8x64xbf16>
    %c0_48 = arith.constant 0 : index
    %c0_49 = arith.constant 0 : index
    %c0_50 = arith.constant 0 : index
    %164 = vector.load %arg4[%c0_48, %c0_49, %c0_50] : memref<2x64x64xbf16, #tpu.memory_space<vmem>>, vector<1x64x64xbf16>
    %165 = vector.shape_cast %164 : vector<1x64x64xbf16> to vector<64x64xbf16>
    %cst_51 = arith.constant dense<0.000000e+00> : vector<8x64xf32>
    %166 = tpu.matmul %163, %165, %cst_51 {dimension_numbers = #tpu.dot_dimension_numbers<[1], [0], [0], [1], [0, 0, 1, 1], [], []>} : vector<8x64xbf16>, vector<64x64xbf16>, vector<8x64xf32> -> vector<8x64xf32>
    %167 = vector.broadcast %105 : vector<1x64xf32> to vector<8x64xf32>
    %168 = arith.addf %166, %167 : vector<8x64xf32>
    %cst_52 = arith.constant 0.000000e+00 : f32
    %169 = vector.broadcast %cst_52 : f32 to vector<8x64xf32>
    %170 = arith.maximumf %168, %169 : vector<8x64xf32>
    %171 = math.absf %168 : vector<8x64xf32>
    %cst_53 = arith.constant 0.000000e+00 : f32
    %172 = vector.broadcast %cst_53 : f32 to vector<8x64xf32>
    %173 = arith.subf %172, %171 : vector<8x64xf32>
    %174 = math.exp %173 : vector<8x64xf32>
    %cst_54 = arith.constant 1.000000e+00 : f32
    %175 = vector.broadcast %cst_54 : f32 to vector<8x64xf32>
    %176 = arith.addf %175, %174 : vector<8x64xf32>
    %177 = math.log %176 : vector<8x64xf32>
    %178 = arith.addf %170, %177 : vector<8x64xf32>
    %c0_55 = arith.constant 0 : index
    %c0_56 = arith.constant 0 : index
    %c0_57 = arith.constant 0 : index
    %179 = vector.load %arg5[%c0_55, %c0_56, %c0_57] : memref<2x64x32xbf16, #tpu.memory_space<vmem>>, vector<1x64x32xbf16>
    %180 = vector.shape_cast %179 : vector<1x64x32xbf16> to vector<64x32xbf16>
    %cst_58 = arith.constant dense<0.000000e+00> : vector<8x32xf32>
    %181 = tpu.matmul %163, %180, %cst_58 {dimension_numbers = #tpu.dot_dimension_numbers<[1], [0], [0], [1], [0, 0, 1, 1], [], []>} : vector<8x64xbf16>, vector<64x32xbf16>, vector<8x32xf32> -> vector<8x32xf32>
    %182 = arith.mulf %178, %162 : vector<8x64xf32>
    %183 = tpu.concatenate %178, %182 in 1 : vector<8x64xf32>, vector<8x64xf32> -> vector<8x128xf32>
    %cst_59 = arith.constant dense<0.000000e+00> : vector<128x128xf32>
    %184 = tpu.matmul %58, %183, %cst_59 {dimension_numbers = #tpu.dot_dimension_numbers<[1], [0], [0], [1], [0, 0, 1, 1], [], []>} : vector<128x8xf32>, vector<8x128xf32>, vector<128x128xf32> -> vector<128x128xf32>
    %cst_60 = arith.constant dense<0.000000e+00> : vector<128x32xf32>
    %185 = tpu.matmul %58, %181, %cst_60 {dimension_numbers = #tpu.dot_dimension_numbers<[1], [0], [0], [1], [0, 0, 1, 1], [], []>} : vector<128x8xf32>, vector<8x32xf32>, vector<128x32xf32> -> vector<128x32xf32>
    %186 = arith.mulf %185, %82 : vector<128x32xf32>
    %cst_61 = arith.constant dense<0.000000e+00> : vector<128x128xf32>
    %187 = tpu.matmul %186, %98, %cst_61 {dimension_numbers = #tpu.dot_dimension_numbers<[1], [0], [0], [1], [0, 0, 1, 1], [], []>} : vector<128x32xf32>, vector<32x128xf32>, vector<128x128xf32> -> vector<128x128xf32>
    %188 = vector.extract_strided_slice %184 {offsets = [0, 0], sizes = [128, 64], strides = [1, 1]} : vector<128x128xf32> to vector<128x64xf32>
    %c0_62 = arith.constant 0 : index
    %c0_63 = arith.constant 0 : index
    %c0_64 = arith.constant 0 : index
    %189 = vector.load %arg8[%c0_62, %c0_63, %c0_64] : memref<2x128x64xf32, #tpu.memory_space<vmem>>, vector<1x128x64xf32>
    %190 = vector.shape_cast %189 : vector<1x128x64xf32> to vector<128x64xf32>
    %191 = arith.mulf %188, %190 : vector<128x64xf32>
    %192 = math.exp %191 : vector<128x64xf32>
    %c0_65 = arith.constant 0 : index
    %c0_66 = arith.constant 0 : index
    %193 = vector.load %arg13[%c0_65, %c0_66] : memref<128x64xf32, #tpu.memory_space<vmem>>, vector<128x64xf32>
    tpu.vector_store %arg13[%c0_65, %c0_66], %192 {strides = array<i32>} : memref<128x64xf32, #tpu.memory_space<vmem>>, vector<128x64xf32>,
    %194 = vector.extract_strided_slice %184 {offsets = [0, 64], sizes = [128, 64], strides = [1, 1]} : vector<128x128xf32> to vector<128x64xf32>
    %195 = vector.extract_strided_slice %187 {offsets = [0, 0], sizes = [128, 64], strides = [1, 1]} : vector<128x128xf32> to vector<128x64xf32>
    %196 = arith.mulf %194, %195 : vector<128x64xf32>
    %c0_67 = arith.constant 0 : index
    %c0_68 = arith.constant 0 : index
    %197 = vector.load %arg14[%c0_67, %c0_68] : memref<128x64xf32, #tpu.memory_space<vmem>>, vector<128x64xf32>
    tpu.vector_store %arg14[%c0_67, %c0_68], %196 {strides = array<i32>} : memref<128x64xf32, #tpu.memory_space<vmem>>, vector<128x64xf32>,
    %cst_69 = arith.constant 0.000000e+00 : f32
    %198 = vector.broadcast %cst_69 : f32 to vector<16x64xf32>
    %c0_70 = arith.constant 0 : index
    %c0_71 = arith.constant 0 : index
    %199 = vector.load %arg13[%c0_70, %c0_71] : memref<128x64xf32, #tpu.memory_space<vmem>>, vector<16x64xf32>
    %200 = arith.mulf %199, %198 : vector<16x64xf32>
    %c0_72 = arith.constant 0 : index
    %c0_73 = arith.constant 0 : index
    %201 = vector.load %arg14[%c0_72, %c0_73] : memref<128x64xf32, #tpu.memory_space<vmem>>, vector<16x64xf32>
    %202 = arith.addf %200, %201 : vector<16x64xf32>
    %c16 = arith.constant 16 : index
    %c0_74 = arith.constant 0 : index
    %203 = vector.load %arg13[%c16, %c0_74] : memref<128x64xf32, #tpu.memory_space<vmem>>, vector<16x64xf32>
    %204 = arith.mulf %203, %202 : vector<16x64xf32>
    %c16_75 = arith.constant 16 : index
    %c0_76 = arith.constant 0 : index
    %205 = vector.load %arg14[%c16_75, %c0_76] : memref<128x64xf32, #tpu.memory_space<vmem>>, vector<16x64xf32>
    %206 = arith.addf %204, %205 : vector<16x64xf32>
    %c32 = arith.constant 32 : index
    %c0_77 = arith.constant 0 : index
    %207 = vector.load %arg13[%c32, %c0_77] : memref<128x64xf32, #tpu.memory_space<vmem>>, vector<16x64xf32>
    %208 = arith.mulf %207, %206 : vector<16x64xf32>
    %c32_78 = arith.constant 32 : index
    %c0_79 = arith.constant 0 : index
    %209 = vector.load %arg14[%c32_78, %c0_79] : memref<128x64xf32, #tpu.memory_space<vmem>>, vector<16x64xf32>
    %210 = arith.addf %208, %209 : vector<16x64xf32>
    %c48 = arith.constant 48 : index
    %c0_80 = arith.constant 0 : index
    %211 = vector.load %arg13[%c48, %c0_80] : memref<128x64xf32, #tpu.memory_space<vmem>>, vector<16x64xf32>
    %212 = arith.mulf %211, %210 : vector<16x64xf32>
    %c48_81 = arith.constant 48 : index
    %c0_82 = arith.constant 0 : index
    %213 = vector.load %arg14[%c48_81, %c0_82] : memref<128x64xf32, #tpu.memory_space<vmem>>, vector<16x64xf32>
    %214 = arith.addf %212, %213 : vector<16x64xf32>
    %c64 = arith.constant 64 : index
    %c0_83 = arith.constant 0 : index
    %215 = vector.load %arg13[%c64, %c0_83] : memref<128x64xf32, #tpu.memory_space<vmem>>, vector<16x64xf32>
    %216 = arith.mulf %215, %214 : vector<16x64xf32>
    %c64_84 = arith.constant 64 : index
    %c0_85 = arith.constant 0 : index
    %217 = vector.load %arg14[%c64_84, %c0_85] : memref<128x64xf32, #tpu.memory_space<vmem>>, vector<16x64xf32>
    %218 = arith.addf %216, %217 : vector<16x64xf32>
    %c80 = arith.constant 80 : index
    %c0_86 = arith.constant 0 : index
    %219 = vector.load %arg13[%c80, %c0_86] : memref<128x64xf32, #tpu.memory_space<vmem>>, vector<16x64xf32>
    %220 = arith.mulf %219, %218 : vector<16x64xf32>
    %c80_87 = arith.constant 80 : index
    %c0_88 = arith.constant 0 : index
    %221 = vector.load %arg14[%c80_87, %c0_88] : memref<128x64xf32, #tpu.memory_space<vmem>>, vector<16x64xf32>
    %222 = arith.addf %220, %221 : vector<16x64xf32>
    %c96 = arith.constant 96 : index
    %c0_89 = arith.constant 0 : index
    %223 = vector.load %arg13[%c96, %c0_89] : memref<128x64xf32, #tpu.memory_space<vmem>>, vector<16x64xf32>
    %224 = arith.mulf %223, %222 : vector<16x64xf32>
    %c96_90 = arith.constant 96 : index
    %c0_91 = arith.constant 0 : index
    %225 = vector.load %arg14[%c96_90, %c0_91] : memref<128x64xf32, #tpu.memory_space<vmem>>, vector<16x64xf32>
    %226 = arith.addf %224, %225 : vector<16x64xf32>
    %c112 = arith.constant 112 : index
    %c0_92 = arith.constant 0 : index
    %227 = vector.load %arg13[%c112, %c0_92] : memref<128x64xf32, #tpu.memory_space<vmem>>, vector<16x64xf32>
    %228 = arith.mulf %227, %226 : vector<16x64xf32>
    %c112_93 = arith.constant 112 : index
    %c0_94 = arith.constant 0 : index
    %229 = vector.load %arg14[%c112_93, %c0_94] : memref<128x64xf32, #tpu.memory_space<vmem>>, vector<16x64xf32>
    %230 = arith.addf %228, %229 : vector<16x64xf32>
    %231 = tpu.concatenate %202, %206, %210, %214, %218, %222, %226, %230 in 0 : vector<16x64xf32>, vector<16x64xf32>, vector<16x64xf32>, vector<16x64xf32>, vector<16x64xf32>, vector<16x64xf32>, vector<16x64xf32>, vector<16x64xf32> -> vector<128x64xf32>
    %232 = vector.extract_strided_slice %187 {offsets = [0, 64], sizes = [128, 64], strides = [1, 1]} : vector<128x128xf32> to vector<128x64xf32>
    %233 = arith.mulf %231, %232 : vector<128x64xf32>
    %cst_95 = arith.constant dense<0.000000e+00> : vector<8x64xf32>
    %234 = tpu.matmul %72, %233, %cst_95 {dimension_numbers = #tpu.dot_dimension_numbers<[1], [0], [0], [1], [0, 0, 1, 1], [], []>} : vector<8x128xf32>, vector<128x64xf32>, vector<8x64xf32> -> vector<8x64xf32>
    %235 = vector.broadcast %106 : vector<1x64xf32> to vector<8x64xf32>
    %236 = arith.mulf %235, %162 : vector<8x64xf32>
    %237 = arith.addf %234, %236 : vector<8x64xf32>
    %238 = arith.negf %124 : vector<8x64xf32>
    %239 = math.exp %238 : vector<8x64xf32>
    %cst_96 = arith.constant 1.000000e+00 : f32
    %240 = vector.broadcast %cst_96 : f32 to vector<8x64xf32>
    %241 = arith.addf %240, %239 : vector<8x64xf32>
    %242 = arith.divf %240, %241 : vector<8x64xf32>
    %243 = arith.mulf %124, %242 : vector<8x64xf32>
    %244 = arith.mulf %237, %243 : vector<8x64xf32>
    %245 = arith.truncf %244 : vector<8x64xf32> to vector<8x64xbf16>
    %c0_97 = arith.constant 0 : index
    %c0_98 = arith.constant 0 : index
    %c0_99 = arith.constant 0 : index
    %246 = vector.load %arg6[%c0_97, %c0_98, %c0_99] : memref<2x64x32xbf16, #tpu.memory_space<vmem>>, vector<1x64x32xbf16>
    %247 = vector.shape_cast %246 : vector<1x64x32xbf16> to vector<64x32xbf16>
    %cst_100 = arith.constant dense<0.000000e+00> : vector<8x32xf32>
    %248 = tpu.matmul %245, %247, %cst_100 {dimension_numbers = #tpu.dot_dimension_numbers<[1], [0], [0], [1], [0, 0, 1, 1], [], []>} : vector<8x64xbf16>, vector<64x32xbf16>, vector<8x32xf32> -> vector<8x32xf32>
    %249 = arith.addf %248, %44 : vector<8x32xf32>
    %c1 = arith.constant 1 : index
    %c0_101 = arith.constant 0 : index
    %c0_102 = arith.constant 0 : index
    %250 = vector.load %arg7[%c1, %c0_101, %c0_102] : memref<2x8x64xf32, #tpu.memory_space<vmem>>, vector<1x8x64xf32>
    %251 = vector.shape_cast %250 : vector<1x8x64xf32> to vector<8x64xf32>
    %252 = vector.extract_strided_slice %251 {offsets = [0, 0], sizes = [1, 32], strides = [1, 1]} : vector<8x64xf32> to vector<1x32xf32>
    %253 = vector.extract_strided_slice %251 {offsets = [1, 0], sizes = [4, 64], strides = [1, 1]} : vector<8x64xf32> to vector<4x64xf32>
    %254 = vector.extract_strided_slice %251 {offsets = [5, 0], sizes = [1, 64], strides = [1, 1]} : vector<8x64xf32> to vector<1x64xf32>
    %255 = vector.extract_strided_slice %251 {offsets = [6, 0], sizes = [1, 64], strides = [1, 1]} : vector<8x64xf32> to vector<1x64xf32>
    %256 = vector.extract_strided_slice %251 {offsets = [7, 0], sizes = [1, 64], strides = [1, 1]} : vector<8x64xf32> to vector<1x64xf32>
    %257 = arith.mulf %249, %249 : vector<8x32xf32>
    %cst_103 = arith.constant dense<0.000000e+00> : vector<8xf32>
    %258 = vector.multi_reduction <add>, %257, %cst_103 [1] : vector<8x32xf32> to vector<8xf32>
    %259 = vector.shape_cast %258 : vector<8xf32> to vector<8x1xf32>
    %cst_104 = arith.constant 3.200000e+01 : f32
    %260 = vector.broadcast %cst_104 : f32 to vector<8x1xf32>
    %261 = arith.divf %259, %260 : vector<8x1xf32>
    %cst_105 = arith.constant 9.99999974E-6 : f32
    %262 = vector.broadcast %cst_105 : f32 to vector<8x1xf32>
    %263 = arith.addf %261, %262 : vector<8x1xf32>
    %264 = math.rsqrt %263 : vector<8x1xf32>
    %265 = vector.broadcast %264 : vector<8x1xf32> to vector<8x32xf32>
    %266 = arith.mulf %249, %265 : vector<8x32xf32>
    %267 = vector.broadcast %252 : vector<1x32xf32> to vector<8x32xf32>
    %268 = arith.mulf %266, %267 : vector<8x32xf32>
    %269 = arith.truncf %268 : vector<8x32xf32> to vector<8x32xbf16>
    %c1_106 = arith.constant 1 : index
    %c0_107 = arith.constant 0 : index
    %c0_108 = arith.constant 0 : index
    %270 = vector.load %arg3[%c1_106, %c0_107, %c0_108] : memref<2x32x128xbf16, #tpu.memory_space<vmem>>, vector<1x32x128xbf16>
    %271 = vector.shape_cast %270 : vector<1x32x128xbf16> to vector<32x128xbf16>
    %cst_109 = arith.constant dense<0.000000e+00> : vector<8x128xf32>
    %272 = tpu.matmul %269, %271, %cst_109 {dimension_numbers = #tpu.dot_dimension_numbers<[1], [0], [0], [1], [0, 0, 1, 1], [], []>} : vector<8x32xbf16>, vector<32x128xbf16>, vector<8x128xf32> -> vector<8x128xf32>
    %273 = vector.extract_strided_slice %272 {offsets = [0, 0], sizes = [8, 64], strides = [1, 1]} : vector<8x128xf32> to vector<8x64xf32>
    %274 = vector.extract_strided_slice %272 {offsets = [0, 64], sizes = [8, 64], strides = [1, 1]} : vector<8x128xf32> to vector<8x64xf32>
    %275 = vector.extract_strided_slice %253 {offsets = [3, 0], sizes = [1, 64], strides = [1, 1]} : vector<4x64xf32> to vector<1x64xf32>
    %276 = vector.broadcast %275 : vector<1x64xf32> to vector<8x64xf32>
    %277 = arith.mulf %273, %276 : vector<8x64xf32>
    %278 = vector.broadcast %254 : vector<1x64xf32> to vector<8x64xf32>
    %279 = arith.addf %278, %277 : vector<8x64xf32>
    %c1_i32_110 = arith.constant 1 : i32
    %280 = vector.broadcast %c1_i32_110 : i32 to vector<8x64xi32>
    %281 = arith.cmpi sge, %99, %280 : vector<8x64xi32>
    %c1_i32_111 = arith.constant 1 : i32
    %282 = tpu.dynamic_rotate %273 by %c1_i32_111 dim 0 : vector<8x64xf32>, i32 -> vector<8x64xf32>
    %cst_112 = arith.constant 0.000000e+00 : f32
    %283 = vector.broadcast %cst_112 : f32 to vector<8x64xf32>
    %284 = arith.select %281, %282, %283 : vector<8x64xi1>, vector<8x64xf32>
    %285 = vector.extract_strided_slice %253 {offsets = [2, 0], sizes = [1, 64], strides = [1, 1]} : vector<4x64xf32> to vector<1x64xf32>
    %286 = vector.broadcast %285 : vector<1x64xf32> to vector<8x64xf32>
    %287 = arith.mulf %284, %286 : vector<8x64xf32>
    %288 = arith.addf %279, %287 : vector<8x64xf32>
    %c2_i32_113 = arith.constant 2 : i32
    %289 = vector.broadcast %c2_i32_113 : i32 to vector<8x64xi32>
    %290 = arith.cmpi sge, %99, %289 : vector<8x64xi32>
    %c2_i32_114 = arith.constant 2 : i32
    %291 = tpu.dynamic_rotate %273 by %c2_i32_114 dim 0 : vector<8x64xf32>, i32 -> vector<8x64xf32>
    %cst_115 = arith.constant 0.000000e+00 : f32
    %292 = vector.broadcast %cst_115 : f32 to vector<8x64xf32>
    %293 = arith.select %290, %291, %292 : vector<8x64xi1>, vector<8x64xf32>
    %294 = vector.extract_strided_slice %253 {offsets = [1, 0], sizes = [1, 64], strides = [1, 1]} : vector<4x64xf32> to vector<1x64xf32>
    %295 = vector.broadcast %294 : vector<1x64xf32> to vector<8x64xf32>
    %296 = arith.mulf %293, %295 : vector<8x64xf32>
    %297 = arith.addf %288, %296 : vector<8x64xf32>
    %c3_i32_116 = arith.constant 3 : i32
    %298 = vector.broadcast %c3_i32_116 : i32 to vector<8x64xi32>
    %299 = arith.cmpi sge, %99, %298 : vector<8x64xi32>
    %c3_i32_117 = arith.constant 3 : i32
    %300 = tpu.dynamic_rotate %273 by %c3_i32_117 dim 0 : vector<8x64xf32>, i32 -> vector<8x64xf32>
    %cst_118 = arith.constant 0.000000e+00 : f32
    %301 = vector.broadcast %cst_118 : f32 to vector<8x64xf32>
    %302 = arith.select %299, %300, %301 : vector<8x64xi1>, vector<8x64xf32>
    %303 = vector.extract_strided_slice %253 {offsets = [0, 0], sizes = [1, 64], strides = [1, 1]} : vector<4x64xf32> to vector<1x64xf32>
    %304 = vector.broadcast %303 : vector<1x64xf32> to vector<8x64xf32>
    %305 = arith.mulf %302, %304 : vector<8x64xf32>
    %306 = arith.addf %297, %305 : vector<8x64xf32>
    %307 = arith.negf %306 : vector<8x64xf32>
    %308 = math.exp %307 : vector<8x64xf32>
    %cst_119 = arith.constant 1.000000e+00 : f32
    %309 = vector.broadcast %cst_119 : f32 to vector<8x64xf32>
    %310 = arith.addf %309, %308 : vector<8x64xf32>
    %311 = arith.divf %309, %310 : vector<8x64xf32>
    %312 = arith.mulf %306, %311 : vector<8x64xf32>
    %313 = arith.truncf %312 : vector<8x64xf32> to vector<8x64xbf16>
    %c1_120 = arith.constant 1 : index
    %c0_121 = arith.constant 0 : index
    %c0_122 = arith.constant 0 : index
    %314 = vector.load %arg4[%c1_120, %c0_121, %c0_122] : memref<2x64x64xbf16, #tpu.memory_space<vmem>>, vector<1x64x64xbf16>
    %315 = vector.shape_cast %314 : vector<1x64x64xbf16> to vector<64x64xbf16>
    %cst_123 = arith.constant dense<0.000000e+00> : vector<8x64xf32>
    %316 = tpu.matmul %313, %315, %cst_123 {dimension_numbers = #tpu.dot_dimension_numbers<[1], [0], [0], [1], [0, 0, 1, 1], [], []>} : vector<8x64xbf16>, vector<64x64xbf16>, vector<8x64xf32> -> vector<8x64xf32>
    %317 = vector.broadcast %255 : vector<1x64xf32> to vector<8x64xf32>
    %318 = arith.addf %316, %317 : vector<8x64xf32>
    %cst_124 = arith.constant 0.000000e+00 : f32
    %319 = vector.broadcast %cst_124 : f32 to vector<8x64xf32>
    %320 = arith.maximumf %318, %319 : vector<8x64xf32>
    %321 = math.absf %318 : vector<8x64xf32>
    %cst_125 = arith.constant 0.000000e+00 : f32
    %322 = vector.broadcast %cst_125 : f32 to vector<8x64xf32>
    %323 = arith.subf %322, %321 : vector<8x64xf32>
    %324 = math.exp %323 : vector<8x64xf32>
    %cst_126 = arith.constant 1.000000e+00 : f32
    %325 = vector.broadcast %cst_126 : f32 to vector<8x64xf32>
    %326 = arith.addf %325, %324 : vector<8x64xf32>
    %327 = math.log %326 : vector<8x64xf32>
    %328 = arith.addf %320, %327 : vector<8x64xf32>
    %c1_127 = arith.constant 1 : index
    %c0_128 = arith.constant 0 : index
    %c0_129 = arith.constant 0 : index
    %329 = vector.load %arg5[%c1_127, %c0_128, %c0_129] : memref<2x64x32xbf16, #tpu.memory_space<vmem>>, vector<1x64x32xbf16>
    %330 = vector.shape_cast %329 : vector<1x64x32xbf16> to vector<64x32xbf16>
    %cst_130 = arith.constant dense<0.000000e+00> : vector<8x32xf32>
    %331 = tpu.matmul %313, %330, %cst_130 {dimension_numbers = #tpu.dot_dimension_numbers<[1], [0], [0], [1], [0, 0, 1, 1], [], []>} : vector<8x64xbf16>, vector<64x32xbf16>, vector<8x32xf32> -> vector<8x32xf32>
    %332 = arith.mulf %328, %312 : vector<8x64xf32>
    %333 = tpu.concatenate %328, %332 in 1 : vector<8x64xf32>, vector<8x64xf32> -> vector<8x128xf32>
    %cst_131 = arith.constant dense<0.000000e+00> : vector<128x128xf32>
    %334 = tpu.matmul %58, %333, %cst_131 {dimension_numbers = #tpu.dot_dimension_numbers<[1], [0], [0], [1], [0, 0, 1, 1], [], []>} : vector<128x8xf32>, vector<8x128xf32>, vector<128x128xf32> -> vector<128x128xf32>
    %cst_132 = arith.constant dense<0.000000e+00> : vector<128x32xf32>
    %335 = tpu.matmul %58, %331, %cst_132 {dimension_numbers = #tpu.dot_dimension_numbers<[1], [0], [0], [1], [0, 0, 1, 1], [], []>} : vector<128x8xf32>, vector<8x32xf32>, vector<128x32xf32> -> vector<128x32xf32>
    %336 = arith.mulf %335, %82 : vector<128x32xf32>
    %cst_133 = arith.constant dense<0.000000e+00> : vector<128x128xf32>
    %337 = tpu.matmul %336, %98, %cst_133 {dimension_numbers = #tpu.dot_dimension_numbers<[1], [0], [0], [1], [0, 0, 1, 1], [], []>} : vector<128x32xf32>, vector<32x128xf32>, vector<128x128xf32> -> vector<128x128xf32>
    %338 = vector.extract_strided_slice %334 {offsets = [0, 0], sizes = [128, 64], strides = [1, 1]} : vector<128x128xf32> to vector<128x64xf32>
    %c1_134 = arith.constant 1 : index
    %c0_135 = arith.constant 0 : index
    %c0_136 = arith.constant 0 : index
    %339 = vector.load %arg8[%c1_134, %c0_135, %c0_136] : memref<2x128x64xf32, #tpu.memory_space<vmem>>, vector<1x128x64xf32>
    %340 = vector.shape_cast %339 : vector<1x128x64xf32> to vector<128x64xf32>
    %341 = arith.mulf %338, %340 : vector<128x64xf32>
    %342 = math.exp %341 : vector<128x64xf32>
    %c0_137 = arith.constant 0 : index
    %c0_138 = arith.constant 0 : index
    %343 = vector.load %arg13[%c0_137, %c0_138] : memref<128x64xf32, #tpu.memory_space<vmem>>, vector<128x64xf32>
    tpu.vector_store %arg13[%c0_137, %c0_138], %342 {strides = array<i32>} : memref<128x64xf32, #tpu.memory_space<vmem>>, vector<128x64xf32>,
    %344 = vector.extract_strided_slice %334 {offsets = [0, 64], sizes = [128, 64], strides = [1, 1]} : vector<128x128xf32> to vector<128x64xf32>
    %345 = vector.extract_strided_slice %337 {offsets = [0, 0], sizes = [128, 64], strides = [1, 1]} : vector<128x128xf32> to vector<128x64xf32>
    %346 = arith.mulf %344, %345 : vector<128x64xf32>
    %c0_139 = arith.constant 0 : index
    %c0_140 = arith.constant 0 : index
    %347 = vector.load %arg14[%c0_139, %c0_140] : memref<128x64xf32, #tpu.memory_space<vmem>>, vector<128x64xf32>
    tpu.vector_store %arg14[%c0_139, %c0_140], %346 {strides = array<i32>} : memref<128x64xf32, #tpu.memory_space<vmem>>, vector<128x64xf32>,
    %cst_141 = arith.constant 0.000000e+00 : f32
    %348 = vector.broadcast %cst_141 : f32 to vector<16x64xf32>
    %c0_142 = arith.constant 0 : index
    %c0_143 = arith.constant 0 : index
    %349 = vector.load %arg13[%c0_142, %c0_143] : memref<128x64xf32, #tpu.memory_space<vmem>>, vector<16x64xf32>
    %350 = arith.mulf %349, %348 : vector<16x64xf32>
    %c0_144 = arith.constant 0 : index
    %c0_145 = arith.constant 0 : index
    %351 = vector.load %arg14[%c0_144, %c0_145] : memref<128x64xf32, #tpu.memory_space<vmem>>, vector<16x64xf32>
    %352 = arith.addf %350, %351 : vector<16x64xf32>
    %c16_146 = arith.constant 16 : index
    %c0_147 = arith.constant 0 : index
    %353 = vector.load %arg13[%c16_146, %c0_147] : memref<128x64xf32, #tpu.memory_space<vmem>>, vector<16x64xf32>
    %354 = arith.mulf %353, %352 : vector<16x64xf32>
    %c16_148 = arith.constant 16 : index
    %c0_149 = arith.constant 0 : index
    %355 = vector.load %arg14[%c16_148, %c0_149] : memref<128x64xf32, #tpu.memory_space<vmem>>, vector<16x64xf32>
    %356 = arith.addf %354, %355 : vector<16x64xf32>
    %c32_150 = arith.constant 32 : index
    %c0_151 = arith.constant 0 : index
    %357 = vector.load %arg13[%c32_150, %c0_151] : memref<128x64xf32, #tpu.memory_space<vmem>>, vector<16x64xf32>
    %358 = arith.mulf %357, %356 : vector<16x64xf32>
    %c32_152 = arith.constant 32 : index
    %c0_153 = arith.constant 0 : index
    %359 = vector.load %arg14[%c32_152, %c0_153] : memref<128x64xf32, #tpu.memory_space<vmem>>, vector<16x64xf32>
    %360 = arith.addf %358, %359 : vector<16x64xf32>
    %c48_154 = arith.constant 48 : index
    %c0_155 = arith.constant 0 : index
    %361 = vector.load %arg13[%c48_154, %c0_155] : memref<128x64xf32, #tpu.memory_space<vmem>>, vector<16x64xf32>
    %362 = arith.mulf %361, %360 : vector<16x64xf32>
    %c48_156 = arith.constant 48 : index
    %c0_157 = arith.constant 0 : index
    %363 = vector.load %arg14[%c48_156, %c0_157] : memref<128x64xf32, #tpu.memory_space<vmem>>, vector<16x64xf32>
    %364 = arith.addf %362, %363 : vector<16x64xf32>
    %c64_158 = arith.constant 64 : index
    %c0_159 = arith.constant 0 : index
    %365 = vector.load %arg13[%c64_158, %c0_159] : memref<128x64xf32, #tpu.memory_space<vmem>>, vector<16x64xf32>
    %366 = arith.mulf %365, %364 : vector<16x64xf32>
    %c64_160 = arith.constant 64 : index
    %c0_161 = arith.constant 0 : index
    %367 = vector.load %arg14[%c64_160, %c0_161] : memref<128x64xf32, #tpu.memory_space<vmem>>, vector<16x64xf32>
    %368 = arith.addf %366, %367 : vector<16x64xf32>
    %c80_162 = arith.constant 80 : index
    %c0_163 = arith.constant 0 : index
    %369 = vector.load %arg13[%c80_162, %c0_163] : memref<128x64xf32, #tpu.memory_space<vmem>>, vector<16x64xf32>
    %370 = arith.mulf %369, %368 : vector<16x64xf32>
    %c80_164 = arith.constant 80 : index
    %c0_165 = arith.constant 0 : index
    %371 = vector.load %arg14[%c80_164, %c0_165] : memref<128x64xf32, #tpu.memory_space<vmem>>, vector<16x64xf32>
    %372 = arith.addf %370, %371 : vector<16x64xf32>
    %c96_166 = arith.constant 96 : index
    %c0_167 = arith.constant 0 : index
    %373 = vector.load %arg13[%c96_166, %c0_167] : memref<128x64xf32, #tpu.memory_space<vmem>>, vector<16x64xf32>
    %374 = arith.mulf %373, %372 : vector<16x64xf32>
    %c96_168 = arith.constant 96 : index
    %c0_169 = arith.constant 0 : index
    %375 = vector.load %arg14[%c96_168, %c0_169] : memref<128x64xf32, #tpu.memory_space<vmem>>, vector<16x64xf32>
    %376 = arith.addf %374, %375 : vector<16x64xf32>
    %c112_170 = arith.constant 112 : index
    %c0_171 = arith.constant 0 : index
    %377 = vector.load %arg13[%c112_170, %c0_171] : memref<128x64xf32, #tpu.memory_space<vmem>>, vector<16x64xf32>
    %378 = arith.mulf %377, %376 : vector<16x64xf32>
    %c112_172 = arith.constant 112 : index
    %c0_173 = arith.constant 0 : index
    %379 = vector.load %arg14[%c112_172, %c0_173] : memref<128x64xf32, #tpu.memory_space<vmem>>, vector<16x64xf32>
    %380 = arith.addf %378, %379 : vector<16x64xf32>
    %381 = tpu.concatenate %352, %356, %360, %364, %368, %372, %376, %380 in 0 : vector<16x64xf32>, vector<16x64xf32>, vector<16x64xf32>, vector<16x64xf32>, vector<16x64xf32>, vector<16x64xf32>, vector<16x64xf32>, vector<16x64xf32> -> vector<128x64xf32>
    %382 = vector.extract_strided_slice %337 {offsets = [0, 64], sizes = [128, 64], strides = [1, 1]} : vector<128x128xf32> to vector<128x64xf32>
    %383 = arith.mulf %381, %382 : vector<128x64xf32>
    %cst_174 = arith.constant dense<0.000000e+00> : vector<8x64xf32>
    %384 = tpu.matmul %72, %383, %cst_174 {dimension_numbers = #tpu.dot_dimension_numbers<[1], [0], [0], [1], [0, 0, 1, 1], [], []>} : vector<8x128xf32>, vector<128x64xf32>, vector<8x64xf32> -> vector<8x64xf32>
    %385 = vector.broadcast %256 : vector<1x64xf32> to vector<8x64xf32>
    %386 = arith.mulf %385, %312 : vector<8x64xf32>
    %387 = arith.addf %384, %386 : vector<8x64xf32>
    %388 = arith.negf %274 : vector<8x64xf32>
    %389 = math.exp %388 : vector<8x64xf32>
    %cst_175 = arith.constant 1.000000e+00 : f32
    %390 = vector.broadcast %cst_175 : f32 to vector<8x64xf32>
    %391 = arith.addf %390, %389 : vector<8x64xf32>
    %392 = arith.divf %390, %391 : vector<8x64xf32>
    %393 = arith.mulf %274, %392 : vector<8x64xf32>
    %394 = arith.mulf %387, %393 : vector<8x64xf32>
    %395 = arith.truncf %394 : vector<8x64xf32> to vector<8x64xbf16>
    %c1_176 = arith.constant 1 : index
    %c0_177 = arith.constant 0 : index
    %c0_178 = arith.constant 0 : index
    %396 = vector.load %arg6[%c1_176, %c0_177, %c0_178] : memref<2x64x32xbf16, #tpu.memory_space<vmem>>, vector<1x64x32xbf16>
    %397 = vector.shape_cast %396 : vector<1x64x32xbf16> to vector<64x32xbf16>
    %cst_179 = arith.constant dense<0.000000e+00> : vector<8x32xf32>
    %398 = tpu.matmul %395, %397, %cst_179 {dimension_numbers = #tpu.dot_dimension_numbers<[1], [0], [0], [1], [0, 0, 1, 1], [], []>} : vector<8x64xbf16>, vector<64x32xbf16>, vector<8x32xf32> -> vector<8x32xf32>
    %399 = arith.addf %398, %249 : vector<8x32xf32>
    %c0_180 = arith.constant 0 : index
    %c0_181 = arith.constant 0 : index
    %400 = vector.load %arg11[%c0_180, %c0_181] : memref<6x128xf32, #tpu.memory_space<vmem>>, vector<6x128xf32>
    %401 = vector.extract_strided_slice %400 {offsets = [0, 0], sizes = [1, 32], strides = [1, 1]} : vector<6x128xf32> to vector<1x32xf32>
    %402 = vector.extract_strided_slice %400 {offsets = [1, 0], sizes = [1, 32], strides = [1, 1]} : vector<6x128xf32> to vector<1x32xf32>
    %cst_182 = arith.constant dense<0.000000e+00> : vector<8xf32>
    %403 = vector.multi_reduction <add>, %399, %cst_182 [1] : vector<8x32xf32> to vector<8xf32>
    %404 = vector.shape_cast %403 : vector<8xf32> to vector<8x1xf32>
    %cst_183 = arith.constant 3.200000e+01 : f32
    %405 = vector.broadcast %cst_183 : f32 to vector<8x1xf32>
    %406 = arith.divf %404, %405 : vector<8x1xf32>
    %407 = vector.broadcast %406 : vector<8x1xf32> to vector<8x32xf32>
    %408 = arith.subf %399, %407 : vector<8x32xf32>
    %409 = arith.mulf %408, %408 : vector<8x32xf32>
    %cst_184 = arith.constant dense<0.000000e+00> : vector<8xf32>
    %410 = vector.multi_reduction <add>, %409, %cst_184 [1] : vector<8x32xf32> to vector<8xf32>
    %411 = vector.shape_cast %410 : vector<8xf32> to vector<8x1xf32>
    %cst_185 = arith.constant 3.200000e+01 : f32
    %412 = vector.broadcast %cst_185 : f32 to vector<8x1xf32>
    %413 = arith.divf %411, %412 : vector<8x1xf32>
    %414 = vector.broadcast %406 : vector<8x1xf32> to vector<8x32xf32>
    %415 = arith.subf %399, %414 : vector<8x32xf32>
    %cst_186 = arith.constant 9.99999974E-6 : f32
    %416 = vector.broadcast %cst_186 : f32 to vector<8x1xf32>
    %417 = arith.addf %413, %416 : vector<8x1xf32>
    %418 = math.rsqrt %417 : vector<8x1xf32>
    %419 = vector.broadcast %418 : vector<8x1xf32> to vector<8x32xf32>
    %420 = arith.mulf %415, %419 : vector<8x32xf32>
    %421 = vector.broadcast %401 : vector<1x32xf32> to vector<8x32xf32>
    %422 = arith.mulf %420, %421 : vector<8x32xf32>
    %423 = vector.broadcast %402 : vector<1x32xf32> to vector<8x32xf32>
    %424 = arith.addf %422, %423 : vector<8x32xf32>
    %425 = arith.truncf %424 : vector<8x32xf32> to vector<8x32xbf16>
    %c0_187 = arith.constant 0 : index
    %c0_188 = arith.constant 0 : index
    %426 = vector.load %arg9[%c0_187, %c0_188] : memref<32x16xbf16, #tpu.memory_space<vmem>>, vector<32x16xbf16>
    %cst_189 = arith.constant dense<0.000000e+00> : vector<8x16xf32>
    %427 = tpu.matmul %425, %426, %cst_189 {dimension_numbers = #tpu.dot_dimension_numbers<[1], [0], [0], [1], [0, 0, 1, 1], [], []>} : vector<8x32xbf16>, vector<32x16xbf16>, vector<8x16xf32> -> vector<8x16xf32>
    %428 = vector.extract_strided_slice %400 {offsets = [2, 0], sizes = [1, 16], strides = [1, 1]} : vector<6x128xf32> to vector<1x16xf32>
    %429 = vector.broadcast %428 : vector<1x16xf32> to vector<8x16xf32>
    %430 = arith.addf %427, %429 : vector<8x16xf32>
    %cst_190 = arith.constant 5.000000e-01 : f32
    %431 = vector.broadcast %cst_190 : f32 to vector<8x16xf32>
    %432 = arith.mulf %431, %430 : vector<8x16xf32>
    %cst_191 = arith.constant 4.471500e-02 : f32
    %433 = vector.broadcast %cst_191 : f32 to vector<8x16xf32>
    %434 = arith.mulf %433, %430 : vector<8x16xf32>
    %435 = arith.mulf %434, %430 : vector<8x16xf32>
    %436 = arith.mulf %435, %430 : vector<8x16xf32>
    %437 = arith.addf %430, %436 : vector<8x16xf32>
    %cst_192 = arith.constant 0.797884583 : f32
    %438 = vector.broadcast %cst_192 : f32 to vector<8x16xf32>
    %439 = arith.mulf %438, %437 : vector<8x16xf32>
    %440 = math.tanh %439 : vector<8x16xf32>
    %cst_193 = arith.constant 1.000000e+00 : f32
    %441 = vector.broadcast %cst_193 : f32 to vector<8x16xf32>
    %442 = arith.addf %441, %440 : vector<8x16xf32>
    %443 = arith.mulf %432, %442 : vector<8x16xf32>
    %444 = vector.extract_strided_slice %400 {offsets = [3, 0], sizes = [1, 16], strides = [1, 1]} : vector<6x128xf32> to vector<1x16xf32>
    %445 = vector.extract_strided_slice %400 {offsets = [4, 0], sizes = [1, 16], strides = [1, 1]} : vector<6x128xf32> to vector<1x16xf32>
    %cst_194 = arith.constant dense<0.000000e+00> : vector<8xf32>
    %446 = vector.multi_reduction <add>, %443, %cst_194 [1] : vector<8x16xf32> to vector<8xf32>
    %447 = vector.shape_cast %446 : vector<8xf32> to vector<8x1xf32>
    %cst_195 = arith.constant 1.600000e+01 : f32
    %448 = vector.broadcast %cst_195 : f32 to vector<8x1xf32>
    %449 = arith.divf %447, %448 : vector<8x1xf32>
    %450 = vector.broadcast %449 : vector<8x1xf32> to vector<8x16xf32>
    %451 = arith.subf %443, %450 : vector<8x16xf32>
    %452 = arith.mulf %451, %451 : vector<8x16xf32>
    %cst_196 = arith.constant dense<0.000000e+00> : vector<8xf32>
    %453 = vector.multi_reduction <add>, %452, %cst_196 [1] : vector<8x16xf32> to vector<8xf32>
    %454 = vector.shape_cast %453 : vector<8xf32> to vector<8x1xf32>
    %cst_197 = arith.constant 1.600000e+01 : f32
    %455 = vector.broadcast %cst_197 : f32 to vector<8x1xf32>
    %456 = arith.divf %454, %455 : vector<8x1xf32>
    %457 = vector.broadcast %449 : vector<8x1xf32> to vector<8x16xf32>
    %458 = arith.subf %443, %457 : vector<8x16xf32>
    %cst_198 = arith.constant 9.99999974E-6 : f32
    %459 = vector.broadcast %cst_198 : f32 to vector<8x1xf32>
    %460 = arith.addf %456, %459 : vector<8x1xf32>
    %461 = math.rsqrt %460 : vector<8x1xf32>
    %462 = vector.broadcast %461 : vector<8x1xf32> to vector<8x16xf32>
    %463 = arith.mulf %458, %462 : vector<8x16xf32>
    %464 = vector.broadcast %444 : vector<1x16xf32> to vector<8x16xf32>
    %465 = arith.mulf %463, %464 : vector<8x16xf32>
    %466 = vector.broadcast %445 : vector<1x16xf32> to vector<8x16xf32>
    %467 = arith.addf %465, %466 : vector<8x16xf32>
    %468 = arith.truncf %467 : vector<8x16xf32> to vector<8x16xbf16>
    %c0_199 = arith.constant 0 : index
    %c0_200 = arith.constant 0 : index
    %469 = vector.load %arg10[%c0_199, %c0_200] : memref<16x128xbf16, #tpu.memory_space<vmem>>, vector<16x128xbf16>
    %cst_201 = arith.constant dense<0.000000e+00> : vector<8x128xf32>
    %470 = tpu.matmul %468, %469, %cst_201 {dimension_numbers = #tpu.dot_dimension_numbers<[1], [0], [0], [1], [0, 0, 1, 1], [], []>} : vector<8x16xbf16>, vector<16x128xbf16>, vector<8x128xf32> -> vector<8x128xf32>
    %471 = vector.extract_strided_slice %400 {offsets = [5, 0], sizes = [1, 128], strides = [1, 1]} : vector<6x128xf32> to vector<1x128xf32>
    %472 = vector.broadcast %471 : vector<1x128xf32> to vector<8x128xf32>
    %473 = arith.addf %470, %472 : vector<8x128xf32>
    %474 = math.tanh %473 : vector<8x128xf32>
    %c0_202 = arith.constant 0 : index
    %c0_203 = arith.constant 0 : index
    %475 = vector.load %arg12[%c0_202, %c0_203] : memref<8x128xf32, #tpu.memory_space<vmem>>, vector<8x128xf32>
    tpu.vector_store %arg12[%c0_202, %c0_203], %474 {strides = array<i32>} : memref<8x128xf32, #tpu.memory_space<vmem>>, vector<8x128xf32>,
    return
  }
}

</mosaic_0001>

<llo_original>
// kernel: net_forward.1
$region0: #{net_forward.1}
  #allocation0 [shape = 'u32[]', space=smem, size = 0x4, offset = 0x4, fixed_abs, tag = 'smem constant byte address 0x4 - core index']
  #allocation1 [shape = 'u32[144,128]{1,0:T(1,128)}', space=vmem, size = 0x12000, scoped, tag = 'internal scratch']
  #allocation2 [shape = 'f32[128,64]{1,0:T(8,128)}', space=vmem, size = 0x10000, scoped, tag = 'scratch operand']
  #allocation3 [shape = 'f32[128,64]{1,0:T(8,128)}', space=vmem, size = 0x10000, scoped, tag = 'scratch operand']
  %s0 = inlined_call_operand.vmem [shape: f32[8,16], index: 0, kind: input, shape index: {}]
  %s1 = inlined_call_operand.vmem [shape: bf16[16,32], index: 1, kind: input, shape index: {}]
  %s2 = inlined_call_operand.vmem [shape: f32[3,32], index: 2, kind: input, shape index: {}]
  %s3 = inlined_call_operand.vmem [shape: bf16[2,32,128], index: 3, kind: input, shape index: {}]
  %s4 = inlined_call_operand.vmem [shape: bf16[2,64,64], index: 4, kind: input, shape index: {}]
  %s5 = inlined_call_operand.vmem [shape: bf16[2,64,32], index: 5, kind: input, shape index: {}]
  %s6 = inlined_call_operand.vmem [shape: bf16[2,64,32], index: 6, kind: input, shape index: {}]
  %s7 = inlined_call_operand.vmem [shape: f32[2,8,64], index: 7, kind: input, shape index: {}]
  %s8 = inlined_call_operand.vmem [shape: f32[2,128,64], index: 8, kind: input, shape index: {}]
  %s9 = inlined_call_operand.vmem [shape: bf16[32,16], index: 9, kind: input, shape index: {}]
  %s10 = inlined_call_operand.vmem [shape: bf16[16,128], index: 10, kind: input, shape index: {}]
  %s11 = inlined_call_operand.vmem [shape: f32[6,128], index: 11, kind: input, shape index: {}]
  %s12 = inlined_call_operand.vmem [shape: f32[8,128], index: 12, kind: output, shape index: {}]
  %s13 = sld [smem:[#allocation0]]
  $region58: #{net_forward.1} parent=0
    _
  %s15 = ssub.s32 1, %s13
  %s16 = scalar_select 0, %s15, %s13
  // Predicated region
  $region2: #{net_forward.1} parent=0 // pred_check
    _
  $region3: #{net_forward.1} parent=0 // pred_check_branch
    %18 = sbr.rel (0) target = $region5
  $region4: #{net_forward.1} parent=0 // pred_region
    _
  $region5: #{net_forward.1} parent=0 // pred_fallthru
    _
  // Predicated region
  $region6: #{net_forward.1} parent=0 // pred_check
    _
  $region7: #{net_forward.1} parent=0 // pred_check_branch
    %20 = sbr.rel (0) target = $region9
  $region8: #{net_forward.1} parent=0 // pred_region
    _
  $region9: #{net_forward.1} parent=0 // pred_fallthru
    _
  // Predicated region
  $region10: #{net_forward.1} parent=0 // pred_check
    _
  $region11: #{net_forward.1} parent=0 // pred_check_branch
    %22 = sbr.rel (0) target = $region13
  $region12: #{net_forward.1} parent=0 // pred_region
    _
  $region13: #{net_forward.1} parent=0 // pred_fallthru
    _
  // Predicated region
  $region14: #{net_forward.1} parent=0 // pred_check
    _
  $region15: #{net_forward.1} parent=0 // pred_check_branch
    %24 = sbr.rel (0) target = $region17
  $region16: #{net_forward.1} parent=0 // pred_region
    _
  $region17: #{net_forward.1} parent=0 // pred_fallthru
    _
  // Predicated region
  $region18: #{net_forward.1} parent=0 // pred_check
    _
  $region19: #{net_forward.1} parent=0 // pred_check_branch
    %26 = sbr.rel (0) target = $region21
  $region20: #{net_forward.1} parent=0 // pred_region
    _
  $region21: #{net_forward.1} parent=0 // pred_fallthru
    _
  // Predicated region
  $region22: #{net_forward.1} parent=0 // pred_check
    _
  $region23: #{net_forward.1} parent=0 // pred_check_branch
    %28 = sbr.rel (0) target = $region25
  $region24: #{net_forward.1} parent=0 // pred_region
    _
  $region25: #{net_forward.1} parent=0 // pred_fallthru
    _
  // Predicated region
  $region26: #{net_forward.1} parent=0 // pred_check
    _
  $region27: #{net_forward.1} parent=0 // pred_check_branch
    %30 = sbr.rel (0) target = $region29
  $region28: #{net_forward.1} parent=0 // pred_region
    _
  $region29: #{net_forward.1} parent=0 // pred_fallthru
    _
  // Predicated region
  $region30: #{net_forward.1} parent=0 // pred_check
    _
  $region31: #{net_forward.1} parent=0 // pred_check_branch
    %32 = sbr.rel (0) target = $region33
  $region32: #{net_forward.1} parent=0 // pred_region
    _
  $region33: #{net_forward.1} parent=0 // pred_fallthru
    _
  // Predicated region
  $region34: #{net_forward.1} parent=0 // pred_check
    _
  $region35: #{net_forward.1} parent=0 // pred_check_branch
    %34 = sbr.rel (0) target = $region37
  $region36: #{net_forward.1} parent=0 // pred_region
    _
  $region37: #{net_forward.1} parent=0 // pred_fallthru
    _
  // Predicated region
  $region38: #{net_forward.1} parent=0 // pred_check
    _
  $region39: #{net_forward.1} parent=0 // pred_check_branch
    %36 = sbr.rel (0) target = $region41
  $region40: #{net_forward.1} parent=0 // pred_region
    _
  $region41: #{net_forward.1} parent=0 // pred_fallthru
    _
  // Predicated region
  $region42: #{net_forward.1} parent=0 // pred_check
    _
  $region43: #{net_forward.1} parent=0 // pred_check_branch
    %38 = sbr.rel (0) target = $region45
  $region44: #{net_forward.1} parent=0 // pred_region
    _
  $region45: #{net_forward.1} parent=0 // pred_fallthru
    _
  // Predicated region
  $region46: #{net_forward.1} parent=0 // pred_check
    _
  $region47: #{net_forward.1} parent=0 // pred_check_branch
    %40 = sbr.rel (0) target = $region49
  $region48: #{net_forward.1} parent=0 // pred_region
    _
  $region49: #{net_forward.1} parent=0 // pred_fallthru
    _
  %v42 = vld [vmem:[%s2] sm:$0x7]
  %v43 = vld [vmem:[%s0] sm:$0xff]
  %v44 = vpack.c.bf16 %v43, %v43
  %v45 = vld [vmem:[%s1] sm:$0xf]
  %v46 = vld [vmem:[%s1 + $0x4] sm:$0xf]
  %v47 = vlaneseq
  %v48 = vshrl.u32 %v47, 7
  %v49 = vsub.s32 0, %v48
  %v50 = vrot.slane %v42, %v49
  %v53 = vunpack.c.l.b16 %v45
  %v54 = vunpack.c.l.b16 %v46
  %v55 = vpack.c.b16 %v54, %v53
  %vm57 = vcmask 130048
  %v59 = vsel %vm57, %v44, 0
  %61 = vmatprep.subr.bf16.mxu0 0
  %62 = vmatpush1.bf16.msra.mxu0 0
  %63 = vmatprep.subr.bf16.mxu0 0
  %64 = vmatpush1.bf16.msra.mxu0 0
  %65 = vmatprep.subr.bf16.mxu0 0
  %66 = vmatpush1.bf16.msra.mxu0 0
  %67 = vmatprep.subr.bf16.mxu0 0
  %68 = vmatpush1.bf16.msra.mxu0 0
  %69 = vmatprep.subr.bf16.mxu0 0
  %70 = vmatpush1.bf16.msra.mxu0 0
  %71 = vmatprep.subr.bf16.mxu0 0
  %72 = vmatpush1.bf16.msra.mxu0 0
  %73 = vmatprep.subr.bf16.mxu0 0
  %74 = vmatpush1.bf16.msra.mxu0 0
  %75 = vmatprep.subr.bf16.mxu0 0
  %76 = vmatpush1.bf16.msra.mxu0 %v55
  %77 = vmatprep.subr.bf16.mxu0 0
  %78 = vmatpush2.bf16.msra.mxu0 0
  %79 = vmatprep.subr.bf16.mxu0 0
  %80 = vmatpush2.bf16.msra.mxu0 0
  %81 = vmatprep.subr.bf16.mxu0 0
  %82 = vmatpush2.bf16.msra.mxu0 0
  %83 = vmatprep.subr.bf16.mxu0 0
  %84 = vmatpush2.bf16.msra.mxu0 0
  %85 = vmatprep.subr.bf16.mxu0 0
  %86 = vmatpush2.bf16.msra.mxu0 0
  %87 = vmatprep.subr.bf16.mxu0 0
  %88 = vmatpush2.bf16.msra.mxu0 0
  %89 = vmatprep.subr.bf16.mxu0 0
  %90 = vmatpush2.bf16.msra.mxu0 0
  %91 = vmatprep.subr.bf16.mxu0 0
  %92 = vmatpush2.bf16.msra.mxu0 0
  %93 = vmatprep.mubr.bf16.mxu0 0
  %94 = vmatmul.mubr.bf16.gmra.mxu0 %v59
  %v95 = vpop.f32.mrf.mxu0
  %v96 = vadd.f32 %v50, %v95
  %v97 = vpop.f32.mrf.mxu0
  %v98 = vpop.f32.mrf.mxu0
  %v99 = vpop.f32.mrf.mxu0
  %100 = vdwg.mxu0
  %vm101 = vcmask 261120
  %v102 = vsel %vm101, %v96, 0.0
  %103 = vadd.xlane.f32.xlu0 %v102
  %v104 = vpop.xlane.xlu0 %103
  %v105 = vrcp.pop 32.0
  %v106 = vmul.f32 %v104, %v105
  %v107 = vsub.f32 %v96, %v106
  %v108 = vmul.f32 %v107, %v107
  %v109 = vsel %vm101, %v108, 0.0
  %110 = vadd.xlane.f32.xlu0 %v109
  %v111 = vpop.xlane.xlu0 %110
  %v112 = vmul.f32 %v111, %v105
  %v113 = vadd.f32 %v112, 1e-05
  %v114 = vrsqrt.pop %v113
  %v115 = vmul.f32 %v107, %v114
  %v116 = vlaneseq
  %v117 = vshrl.u32 %v116, 7
  %v118 = vsub.s32 1, %v117
  %v119 = vrot.slane %v42, %v118
  %v120 = vmul.f32 %v115, %v119
  %v121 = vlaneseq
  %v122 = vshrl.u32 %v121, 7
  %v123 = vsub.s32 2, %v122
  %v124 = vrot.slane %v42, %v123
  %v125 = vadd.f32 %v120, %v124
  %v126 = vmul.f32 %v125, 0.5
  %v127 = vmul.f32 %v125, 0.044715
  %v128 = vmul.f32 %v127, %v125
  %v129 = vmul.f32 %v128, %v125
  %v130 = vadd.f32 %v125, %v129
  %v131 = vmul.f32 %v130, 0.7978846
  %v132 = vtanh.pop %v131
  %v133 = vadd.f32 %v132, 1.0
  %v134 = vmul.f32 %v126, %v133
  %v135 = vlaneseq
  %v136 = vshrl.u32 %v135, 7
  %v137 = vadd.s32 %v136, 8
  %v138 = vadd.s32 %v136, 16
  %v139 = vadd.s32 %v136, 24
  %v140 = vadd.s32 %v136, 32
  %v141 = vadd.s32 %v136, 40
  %v142 = vadd.s32 %v136, 48
  %v143 = vadd.s32 %v136, 56
  %v144 = vadd.s32 %v136, 64
  %v145 = vadd.s32 %v136, 72
  %v146 = vadd.s32 %v136, 80
  %v147 = vadd.s32 %v136, 88
  %v148 = vadd.s32 %v136, 96
  %v149 = vadd.s32 %v136, 104
  %v150 = vadd.s32 %v136, 112
  %v151 = vadd.s32 %v136, 120
  %v152 = vlaneseq
  %v153 = vand.u32 %v152, 127
  %v154 = vmul.u32 %v153, 16
  %vm155 = vcmp.ge.s32.totalorder %v136, %v154
  %vm156 = vcmp.ge.s32.totalorder %v137, %v154
  %vm157 = vcmp.ge.s32.totalorder %v138, %v154
  %vm158 = vcmp.ge.s32.totalorder %v139, %v154
  %vm159 = vcmp.ge.s32.totalorder %v140, %v154
  %vm160 = vcmp.ge.s32.totalorder %v141, %v154
  %vm161 = vcmp.ge.s32.totalorder %v142, %v154
  %vm162 = vcmp.ge.s32.totalorder %v143, %v154
  %vm163 = vcmp.ge.s32.totalorder %v144, %v154
  %vm164 = vcmp.ge.s32.totalorder %v145, %v154
  %vm165 = vcmp.ge.s32.totalorder %v146, %v154
  %vm166 = vcmp.ge.s32.totalorder %v147, %v154
  %vm167 = vcmp.ge.s32.totalorder %v148, %v154
  %vm168 = vcmp.ge.s32.totalorder %v149, %v154
  %vm169 = vcmp.ge.s32.totalorder %v150, %v154
  %vm170 = vcmp.ge.s32.totalorder %v151, %v154
  %v171 = vadd.s32 %v153, 1
  %v172 = vmul.u32 %v171, 16
  %vm173 = vcmp.lt.s32.totalorder %v136, %v172
  %vm174 = vcmp.lt.s32.totalorder %v137, %v172
  %vm175 = vcmp.lt.s32.totalorder %v138, %v172
  %vm176 = vcmp.lt.s32.totalorder %v139, %v172
  %vm177 = vcmp.lt.s32.totalorder %v140, %v172
  %vm178 = vcmp.lt.s32.totalorder %v141, %v172
  %vm179 = vcmp.lt.s32.totalorder %v142, %v172
  %vm180 = vcmp.lt.s32.totalorder %v143, %v172
  %vm181 = vcmp.lt.s32.totalorder %v144, %v172
  %vm182 = vcmp.lt.s32.totalorder %v145, %v172
  %vm183 = vcmp.lt.s32.totalorder %v146, %v172
  %vm184 = vcmp.lt.s32.totalorder %v147, %v172
  %vm185 = vcmp.lt.s32.totalorder %v148, %v172
  %vm186 = vcmp.lt.s32.totalorder %v149, %v172
  %vm187 = vcmp.lt.s32.totalorder %v150, %v172
  %vm188 = vcmp.lt.s32.totalorder %v151, %v172
  %vm189 = vmand %vm155, %vm173
  %vm190 = vmand %vm156, %vm174
  %vm191 = vmand %vm157, %vm175
  %vm192 = vmand %vm158, %vm176
  %vm193 = vmand %vm159, %vm177
  %vm194 = vmand %vm160, %vm178
  %vm195 = vmand %vm161, %vm179
  %vm196 = vmand %vm162, %vm180
  %vm197 = vmand %vm163, %vm181
  %vm198 = vmand %vm164, %vm182
  %vm199 = vmand %vm165, %vm183
  %vm200 = vmand %vm166, %vm184
  %vm201 = vmand %vm167, %vm185
  %vm202 = vmand %vm168, %vm186
  %vm203 = vmand %vm169, %vm187
  %vm204 = vmand %vm170, %vm188
  %v205 = vsel %vm189, 1.0, 0.0
  %v206 = vsel %vm190, 1.0, 0.0
  %v207 = vsel %vm191, 1.0, 0.0
  %v208 = vsel %vm192, 1.0, 0.0
  %v209 = vsel %vm193, 1.0, 0.0
  %v210 = vsel %vm194, 1.0, 0.0
  %v211 = vsel %vm195, 1.0, 0.0
  %v212 = vsel %vm196, 1.0, 0.0
  %v213 = vsel %vm197, 1.0, 0.0
  %v214 = vsel %vm198, 1.0, 0.0
  %v215 = vsel %vm199, 1.0, 0.0
  %v216 = vsel %vm200, 1.0, 0.0
  %v217 = vsel %vm201, 1.0, 0.0
  %v218 = vsel %vm202, 1.0, 0.0
  %v219 = vsel %vm203, 1.0, 0.0
  %v220 = vsel %vm204, 1.0, 0.0
  %v221 = vmul.u32 %v136, 16
  %vm222 = vcmp.ge.s32.totalorder %v153, %v221
  %v223 = vadd.s32 %v136, 1
  %v224 = vmul.u32 %v223, 16
  %vm225 = vcmp.lt.s32.totalorder %v153, %v224
  %vm226 = vmand %vm222, %vm225
  %v227 = vsel %vm226, 1.0, 0.0
  %v228 = vand.u32 %v153, 15
  %v229 = vand.u32 %v136, 15
  %v230 = vand.u32 %v137, 15
  %v231 = vand.u32 %v138, 15
  %v232 = vand.u32 %v139, 15
  %v233 = vand.u32 %v140, 15
  %v234 = vand.u32 %v141, 15
  %v235 = vand.u32 %v142, 15
  %v236 = vand.u32 %v143, 15
  %v237 = vand.u32 %v144, 15
  %v238 = vand.u32 %v145, 15
  %v239 = vand.u32 %v146, 15
  %v240 = vand.u32 %v147, 15
  %v241 = vand.u32 %v148, 15
  %v242 = vand.u32 %v149, 15
  %v243 = vand.u32 %v150, 15
  %v244 = vand.u32 %v151, 15
  %vm245 = vcmp.eq.s32.totalorder %v228, %v229
  %vm246 = vcmp.eq.s32.totalorder %v228, %v230
  %vm247 = vcmp.eq.s32.totalorder %v228, %v231
  %vm248 = vcmp.eq.s32.totalorder %v228, %v232
  %vm249 = vcmp.eq.s32.totalorder %v228, %v233
  %vm250 = vcmp.eq.s32.totalorder %v228, %v234
  %vm251 = vcmp.eq.s32.totalorder %v228, %v235
  %vm252 = vcmp.eq.s32.totalorder %v228, %v236
  %vm253 = vcmp.eq.s32.totalorder %v228, %v237
  %vm254 = vcmp.eq.s32.totalorder %v228, %v238
  %vm255 = vcmp.eq.s32.totalorder %v228, %v239
  %vm256 = vcmp.eq.s32.totalorder %v228, %v240
  %vm257 = vcmp.eq.s32.totalorder %v228, %v241
  %vm258 = vcmp.eq.s32.totalorder %v228, %v242
  %vm259 = vcmp.eq.s32.totalorder %v228, %v243
  %vm260 = vcmp.eq.s32.totalorder %v228, %v244
  %v261 = vsel %vm245, 1.0, 0.0
  %v262 = vsel %vm246, 1.0, 0.0
  %v263 = vsel %vm247, 1.0, 0.0
  %v264 = vsel %vm248, 1.0, 0.0
  %v265 = vsel %vm249, 1.0, 0.0
  %v266 = vsel %vm250, 1.0, 0.0
  %v267 = vsel %vm251, 1.0, 0.0
  %v268 = vsel %vm252, 1.0, 0.0
  %v269 = vsel %vm253, 1.0, 0.0
  %v270 = vsel %vm254, 1.0, 0.0
  %v271 = vsel %vm255, 1.0, 0.0
  %v272 = vsel %vm256, 1.0, 0.0
  %v273 = vsel %vm257, 1.0, 0.0
  %v274 = vsel %vm258, 1.0, 0.0
  %v275 = vsel %vm259, 1.0, 0.0
  %v276 = vsel %vm260, 1.0, 0.0
  %vm277 = vcmp.lt.s32.totalorder %v136, 16
  %vm278 = vcmp.lt.s32.totalorder %v137, 16
  %vm279 = vcmp.lt.s32.totalorder %v138, 16
  %vm280 = vcmp.lt.s32.totalorder %v139, 16
  %vm281 = vcmp.lt.s32.totalorder %v153, 64
  %vm282 = vmand %vm277, %vm281
  %vm283 = vmand %vm278, %vm281
  %vm284 = vmand %vm279, %vm281
  %vm285 = vmand %vm280, %vm281
  %vm286 = vcmp.ge.s32.totalorder %v136, 16
  %vm287 = vcmp.ge.s32.totalorder %v137, 16
  %vm288 = vcmp.ge.s32.totalorder %v138, 16
  %vm289 = vcmp.ge.s32.totalorder %v139, 16
  %vm290 = vcmp.ge.s32.totalorder %v153, 64
  %vm291 = vmand %vm286, %vm290
  %vm292 = vmand %vm287, %vm290
  %vm293 = vmand %vm288, %vm290
  %vm294 = vmand %vm289, %vm290
  %vm295 = vmor %vm282, %vm291
  %vm296 = vmor %vm283, %vm292
  %vm297 = vmor %vm284, %vm293
  %vm298 = vmor %vm285, %vm294
  %v299 = vsel %vm295, 1.0, 0.0
  %v300 = vsel %vm296, 1.0, 0.0
  %v301 = vsel %vm297, 1.0, 0.0
  %v302 = vsel %vm298, 1.0, 0.0
  %v303 = vld [vmem:[%s7] sm:$0xff]
  %v304 = vmul.f32 %v134, %v134
  %v305 = vsel %vm101, %v304, 0.0
  %306 = vadd.xlane.f32.xlu0 %v305
  %v307 = vpop.xlane.xlu0 %306
  %v308 = vmul.f32 %v307, %v105
  %v309 = vadd.f32 %v308, 1e-05
  %v310 = vrsqrt.pop %v309
  %v311 = vmul.f32 %v134, %v310
  %v312 = vlaneseq
  %v313 = vshrl.u32 %v312, 7
  %v314 = vsub.s32 0, %v313
  %v315 = vrot.slane %v303, %v314
  %v316 = vmul.f32 %v311, %v315
  %v317 = vpack.c.bf16 %v316, %v316
  %v318 = vld [vmem:[%s3] sm:$0xf]
  %v319 = vld [vmem:[%s3 + $0x4] sm:$0xf]
  %v320 = vld [vmem:[%s3 + $0x8] sm:$0xf]
  %v321 = vld [vmem:[%s3 + $0xc] sm:$0xf]
  %v326 = vunpack.c.l.b16 %v318
  %v327 = vunpack.c.l.b16 %v319
  %v328 = vunpack.c.l.b16 %v320
  %v329 = vunpack.c.l.b16 %v321
  %v330 = vpack.c.b16 %v327, %v326
  %v331 = vpack.c.b16 %v329, %v328
  %v335 = vsel %vm101, %v317, 0
  %337 = vmatprep.subr.bf16.mxu0 0
  %338 = vmatpush1.bf16.msra.mxu0 0
  %339 = vmatprep.subr.bf16.mxu0 0
  %340 = vmatpush1.bf16.msra.mxu0 0
  %341 = vmatprep.subr.bf16.mxu0 0
  %342 = vmatpush1.bf16.msra.mxu0 0
  %343 = vmatprep.subr.bf16.mxu0 0
  %344 = vmatpush1.bf16.msra.mxu0 0
  %345 = vmatprep.subr.bf16.mxu0 0
  %346 = vmatpush1.bf16.msra.mxu0 0
  %347 = vmatprep.subr.bf16.mxu0 0
  %348 = vmatpush1.bf16.msra.mxu0 0
  %349 = vmatprep.subr.bf16.mxu0 0
  %350 = vmatpush1.bf16.msra.mxu0 %v331
  %351 = vmatprep.subr.bf16.mxu0 0
  %352 = vmatpush1.bf16.msra.mxu0 %v330
  %353 = vmatprep.subr.bf16.mxu0 0
  %354 = vmatpush2.bf16.msra.mxu0 0
  %355 = vmatprep.subr.bf16.mxu0 0
  %356 = vmatpush2.bf16.msra.mxu0 0
  %357 = vmatprep.subr.bf16.mxu0 0
  %358 = vmatpush2.bf16.msra.mxu0 0
  %359 = vmatprep.subr.bf16.mxu0 0
  %360 = vmatpush2.bf16.msra.mxu0 0
  %361 = vmatprep.subr.bf16.mxu0 0
  %362 = vmatpush2.bf16.msra.mxu0 0
  %363 = vmatprep.subr.bf16.mxu0 0
  %364 = vmatpush2.bf16.msra.mxu0 0
  %365 = vmatprep.subr.bf16.mxu0 0
  %366 = vmatpush2.bf16.msra.mxu0 0
  %367 = vmatprep.subr.bf16.mxu0 0
  %368 = vmatpush2.bf16.msra.mxu0 0
  %369 = vmatprep.mubr.bf16.mxu0 0
  %370 = vmatmul.mubr.bf16.gmra.mxu0 %v335
  %v371 = vpop.f32.mrf.mxu0
  %v372 = vadd.f32 0.0, %v371
  %v373 = vpop.f32.mrf.mxu0
  %v374 = vpop.f32.mrf.mxu0
  %v375 = vpop.f32.mrf.mxu0
  %376 = vdwg.mxu0
  %v377 = vlaneseq
  %v378 = vshrl.u32 %v377, 7
  %v379 = vsub.s32 4, %v378
  %v380 = vrot.slane %v303, %v379
  %v381 = vmul.f32 %v372, %v380
  %v382 = vlaneseq
  %v383 = vshrl.u32 %v382, 7
  %v384 = vsub.s32 5, %v383
  %v385 = vrot.slane %v303, %v384
  %v386 = vadd.f32 %v385, %v381
  %vm387 = vcmp.ge.s32.totalorder %v136, 1
  %v388 = vrot.slane %v372, 7
  %v389 = vsel %vm387, %v388, 0.0
  %v390 = vlaneseq
  %v391 = vshrl.u32 %v390, 7
  %v392 = vsub.s32 3, %v391
  %v393 = vrot.slane %v303, %v392
  %v394 = vmul.f32 %v389, %v393
  %v395 = vadd.f32 %v386, %v394
  %vm396 = vcmp.ge.s32.totalorder %v136, 2
  %v397 = vrot.slane %v372, 6
  %v398 = vsel %vm396, %v397, 0.0
  %v399 = vlaneseq
  %v400 = vshrl.u32 %v399, 7
  %v401 = vsub.s32 2, %v400
  %v402 = vrot.slane %v303, %v401
  %v403 = vmul.f32 %v398, %v402
  %v404 = vadd.f32 %v395, %v403
  %vm405 = vcmp.ge.s32.totalorder %v136, 3
  %v406 = vrot.slane %v372, 5
  %v407 = vsel %vm405, %v406, 0.0
  %v408 = vlaneseq
  %v409 = vshrl.u32 %v408, 7
  %v410 = vsub.s32 1, %v409
  %v411 = vrot.slane %v303, %v410
  %v412 = vmul.f32 %v407, %v411
  %v413 = vadd.f32 %v404, %v412
  %v414 = vxor.u32 %v413, 2147483648
  %v415 = vmul.f32 %v414, 1.442695
  %v416 = vpow.pop %v415
  %v417 = vadd.f32 %v416, 1.0
  %v418 = vrcp.pop %v417
  %v419 = vmul.f32 1.0, %v418
  %v420 = vmul.f32 %v413, %v419
  %v421 = vpack.c.bf16 %v420, %v420
  %v422 = vld [vmem:[%s4] sm:$0xf]
  %v423 = vld [vmem:[%s4 + $0x4] sm:$0xf]
  %v424 = vld [vmem:[%s4 + $0x8] sm:$0xf]
  %v425 = vld [vmem:[%s4 + $0xc] sm:$0xf]
  %v426 = vld [vmem:[%s4 + $0x10] sm:$0xf]
  %v427 = vld [vmem:[%s4 + $0x14] sm:$0xf]
  %v428 = vld [vmem:[%s4 + $0x18] sm:$0xf]
  %v429 = vld [vmem:[%s4 + $0x1c] sm:$0xf]
  %v430 = vlaneseq
  %v431 = vshrl.u32 %v430, 7
  %v432 = vsub.s32 6, %v431
  %v433 = vrot.slane %v303, %v432
  %v442 = vunpack.c.l.b16 %v422
  %v443 = vunpack.c.l.b16 %v423
  %v444 = vunpack.c.l.b16 %v424
  %v445 = vunpack.c.l.b16 %v425
  %v446 = vunpack.c.l.b16 %v426
  %v447 = vunpack.c.l.b16 %v427
  %v448 = vunpack.c.l.b16 %v428
  %v449 = vunpack.c.l.b16 %v429
  %v450 = vpack.c.b16 %v443, %v442
  %v451 = vpack.c.b16 %v445, %v444
  %v452 = vpack.c.b16 %v447, %v446
  %v453 = vpack.c.b16 %v449, %v448
  %vm458 = vcmask 523264
  %v460 = vsel %vm458, %v421, 0
  %462 = vmatprep.subr.bf16.mxu0 0
  %463 = vmatpush1.bf16.msra.mxu0 0
  %464 = vmatprep.subr.bf16.mxu0 0
  %465 = vmatpush1.bf16.msra.mxu0 0
  %466 = vmatprep.subr.bf16.mxu0 0
  %467 = vmatpush1.bf16.msra.mxu0 0
  %468 = vmatprep.subr.bf16.mxu0 0
  %469 = vmatpush1.bf16.msra.mxu0 0
  %470 = vmatprep.subr.bf16.mxu0 0
  %471 = vmatpush1.bf16.msra.mxu0 %v453
  %472 = vmatprep.subr.bf16.mxu0 0
  %473 = vmatpush1.bf16.msra.mxu0 %v452
  %474 = vmatprep.subr.bf16.mxu0 0
  %475 = vmatpush1.bf16.msra.mxu0 %v451
  %476 = vmatprep.subr.bf16.mxu0 0
  %477 = vmatpush1.bf16.msra.mxu0 %v450
  %478 = vmatprep.subr.bf16.mxu0 0
  %479 = vmatpush2.bf16.msra.mxu0 0
  %480 = vmatprep.subr.bf16.mxu0 0
  %481 = vmatpush2.bf16.msra.mxu0 0
  %482 = vmatprep.subr.bf16.mxu0 0
  %483 = vmatpush2.bf16.msra.mxu0 0
  %484 = vmatprep.subr.bf16.mxu0 0
  %485 = vmatpush2.bf16.msra.mxu0 0
  %486 = vmatprep.subr.bf16.mxu0 0
  %487 = vmatpush2.bf16.msra.mxu0 0
  %488 = vmatprep.subr.bf16.mxu0 0
  %489 = vmatpush2.bf16.msra.mxu0 0
  %490 = vmatprep.subr.bf16.mxu0 0
  %491 = vmatpush2.bf16.msra.mxu0 0
  %492 = vmatprep.subr.bf16.mxu0 0
  %493 = vmatpush2.bf16.msra.mxu0 0
  %494 = vmatprep.mubr.bf16.mxu0 0
  %495 = vmatmul.mubr.bf16.gmra.mxu0 %v460
  %v496 = vpop.f32.mrf.mxu0
  %v497 = vadd.f32 %v433, %v496
  %v498 = vpop.f32.mrf.mxu0
  %v499 = vpop.f32.mrf.mxu0
  %v500 = vpop.f32.mrf.mxu0
  %501 = vdwg.mxu0
  %v502 = vmax.f32 %v497, 0.0
  %v503 = vand.u32 2147483647, %v497
  %v504 = vsub.f32 0.0, %v503
  %v505 = vmul.f32 %v504, 1.442695
  %v506 = vpow.pop %v505
  %v507 = vadd.f32 %v506, 1.0
  %v508 = vlog2.pop %v507
  %v509 = vmul.f32 %v508, 0.6931472
  %v510 = vadd.f32 %v502, %v509
  %v511 = vld [vmem:[%s5] sm:$0xf]
  %v512 = vld [vmem:[%s5 + $0x4] sm:$0xf]
  %v513 = vld [vmem:[%s5 + $0x8] sm:$0xf]
  %v514 = vld [vmem:[%s5 + $0xc] sm:$0xf]
  %v515 = vld [vmem:[%s5 + $0x10] sm:$0xf]
  %v516 = vld [vmem:[%s5 + $0x14] sm:$0xf]
  %v517 = vld [vmem:[%s5 + $0x18] sm:$0xf]
  %v518 = vld [vmem:[%s5 + $0x1c] sm:$0xf]
  %v527 = vunpack.c.l.b16 %v511
  %v528 = vunpack.c.l.b16 %v512
  %v529 = vunpack.c.l.b16 %v513
  %v530 = vunpack.c.l.b16 %v514
  %v531 = vunpack.c.l.b16 %v515
  %v532 = vunpack.c.l.b16 %v516
  %v533 = vunpack.c.l.b16 %v517
  %v534 = vunpack.c.l.b16 %v518
  %v535 = vpack.c.b16 %v528, %v527
  %v536 = vpack.c.b16 %v530, %v529
  %v537 = vpack.c.b16 %v532, %v531
  %v538 = vpack.c.b16 %v534, %v533
  %543 = vmatprep.subr.bf16.mxu0 0
  %544 = vmatpush1.bf16.msra.mxu0 0
  %545 = vmatprep.subr.bf16.mxu0 0
  %546 = vmatpush1.bf16.msra.mxu0 0
  %547 = vmatprep.subr.bf16.mxu0 0
  %548 = vmatpush1.bf16.msra.mxu0 0
  %549 = vmatprep.subr.bf16.mxu0 0
  %550 = vmatpush1.bf16.msra.mxu0 0
  %551 = vmatprep.subr.bf16.mxu0 0
  %552 = vmatpush1.bf16.msra.mxu0 %v538
  %553 = vmatprep.subr.bf16.mxu0 0
  %554 = vmatpush1.bf16.msra.mxu0 %v537
  %555 = vmatprep.subr.bf16.mxu0 0
  %556 = vmatpush1.bf16.msra.mxu0 %v536
  %557 = vmatprep.subr.bf16.mxu0 0
  %558 = vmatpush1.bf16.msra.mxu0 %v535
  %559 = vmatprep.subr.bf16.mxu0 0
  %560 = vmatpush2.bf16.msra.mxu0 0
  %561 = vmatprep.subr.bf16.mxu0 0
  %562 = vmatpush2.bf16.msra.mxu0 0
  %563 = vmatprep.subr.bf16.mxu0 0
  %564 = vmatpush2.bf16.msra.mxu0 0
  %565 = vmatprep.subr.bf16.mxu0 0
  %566 = vmatpush2.bf16.msra.mxu0 0
  %567 = vmatprep.subr.bf16.mxu0 0
  %568 = vmatpush2.bf16.msra.mxu0 0
  %569 = vmatprep.subr.bf16.mxu0 0
  %570 = vmatpush2.bf16.msra.mxu0 0
  %571 = vmatprep.subr.bf16.mxu0 0
  %572 = vmatpush2.bf16.msra.mxu0 0
  %573 = vmatprep.subr.bf16.mxu0 0
  %574 = vmatpush2.bf16.msra.mxu0 0
  %575 = vmatprep.mubr.bf16.mxu0 0
  %576 = vmatmul.mubr.bf16.gmra.mxu0 %v460
  %v577 = vpop.f32.mrf.mxu0
  %v578 = vadd.f32 0.0, %v577
  %v579 = vpop.f32.mrf.mxu0
  %v580 = vpop.f32.mrf.mxu0
  %v581 = vpop.f32.mrf.mxu0
  %582 = vdwg.mxu0
  %v583 = vmul.f32 %v510, %v420
  %585 = vrot.lane.b32.xlu0 %v583, 64
  %v586 = vpop.permute.xlu0 %585
  %v588 = vsel %vm458, %v510, %v586
  %vm589 = vcmask 64512
  %v591 = vsel %vm589, %v205, 0
  %v594 = vsel %vm589, %v206, 0
  %v597 = vsel %vm589, %v207, 0
  %v600 = vsel %vm589, %v208, 0
  %v603 = vsel %vm589, %v209, 0
  %v606 = vsel %vm589, %v210, 0
  %v609 = vsel %vm589, %v211, 0
  %v612 = vsel %vm589, %v212, 0
  %v615 = vsel %vm589, %v213, 0
  %v618 = vsel %vm589, %v214, 0
  %v621 = vsel %vm589, %v215, 0
  %v624 = vsel %vm589, %v216, 0
  %v627 = vsel %vm589, %v217, 0
  %v630 = vsel %vm589, %v218, 0
  %v633 = vsel %vm589, %v219, 0
  %v636 = vsel %vm589, %v220, 0
  %638 = vmatprep.subr.mxu0 0.0
  %639 = vmatpush1.msra.mxu0 0.0
  %640 = vmatprep.subr.mxu0 0.0
  %641 = vmatpush1.msra.mxu0 0.0
  %642 = vmatprep.subr.mxu0 0.0
  %643 = vmatpush1.msra.mxu0 0.0
  %644 = vmatprep.subr.mxu0 0.0
  %645 = vmatpush1.msra.mxu0 0.0
  %646 = vmatprep.subr.mxu0 0.0
  %647 = vmatpush1.msra.mxu0 0.0
  %648 = vmatprep.subr.mxu0 0.0
  %649 = vmatpush1.msra.mxu0 0.0
  %650 = vmatprep.subr.mxu0 0.0
  %651 = vmatpush1.msra.mxu0 0.0
  %652 = vmatprep.subr.mxu0 0.0
  %653 = vmatpush1.msra.mxu0 0.0
  %654 = vmatprep.subr.mxu0 0.0
  %655 = vmatpush1.msra.mxu0 0.0
  %656 = vmatprep.subr.mxu0 0.0
  %657 = vmatpush1.msra.mxu0 0.0
  %658 = vmatprep.subr.mxu0 0.0
  %659 = vmatpush1.msra.mxu0 0.0
  %660 = vmatprep.subr.mxu0 0.0
  %661 = vmatpush1.msra.mxu0 0.0
  %662 = vmatprep.subr.mxu0 0.0
  %663 = vmatpush1.msra.mxu0 0.0
  %664 = vmatprep.subr.mxu0 0.0
  %665 = vmatpush1.msra.mxu0 0.0
  %666 = vmatprep.subr.mxu0 0.0
  %667 = vmatpush1.msra.mxu0 0.0
  %668 = vmatprep.subr.mxu0 0.0
  %669 = vmatpush1.msra.mxu0 %v588
  %670 = vmatprep.subr.mxu0 0.0
  %671 = vmatpush2.msra.mxu0 0.0
  %672 = vmatprep.subr.mxu0 0.0
  %673 = vmatpush2.msra.mxu0 0.0
  %674 = vmatprep.subr.mxu0 0.0
  %675 = vmatpush2.msra.mxu0 0.0
  %676 = vmatprep.subr.mxu0 0.0
  %677 = vmatpush2.msra.mxu0 0.0
  %678 = vmatprep.subr.mxu0 0.0
  %679 = vmatpush2.msra.mxu0 0.0
  %680 = vmatprep.subr.mxu0 0.0
  %681 = vmatpush2.msra.mxu0 0.0
  %682 = vmatprep.subr.mxu0 0.0
  %683 = vmatpush2.msra.mxu0 0.0
  %684 = vmatprep.subr.mxu0 0.0
  %685 = vmatpush2.msra.mxu0 0.0
  %686 = vmatprep.subr.mxu0 0.0
  %687 = vmatpush2.msra.mxu0 0.0
  %688 = vmatprep.subr.mxu0 0.0
  %689 = vmatpush2.msra.mxu0 0.0
  %690 = vmatprep.subr.mxu0 0.0
  %691 = vmatpush2.msra.mxu0 0.0
  %692 = vmatprep.subr.mxu0 0.0
  %693 = vmatpush2.msra.mxu0 0.0
  %694 = vmatprep.subr.mxu0 0.0
  %695 = vmatpush2.msra.mxu0 0.0
  %696 = vmatprep.subr.mxu0 0.0
  %697 = vmatpush2.msra.mxu0 0.0
  %698 = vmatprep.subr.mxu0 0.0
  %699 = vmatpush2.msra.mxu0 0.0
  %700 = vmatprep.subr.mxu0 0.0
  %701 = vmatpush2.msra.mxu0 0.0
  %702 = vmatprep.mubr.f32.mxu0 0.0
  %703 = vmatmul.mubr.f32.gmra.mxu0 %v591
  %v704 = vpop.f32.mrf.mxu0
  %v705 = vadd.f32 0.0, %v704
  %v706 = vpop.f32.mrf.mxu0
  %707 = vmatprep.mubr.f32.mxu0 0.0
  %708 = vmatmul.mubr.f32.gmra.mxu0 %v594
  %v709 = vpop.f32.mrf.mxu0
  %v710 = vadd.f32 0.0, %v709
  %v711 = vpop.f32.mrf.mxu0
  %712 = vmatprep.mubr.f32.mxu0 0.0
  %713 = vmatmul.mubr.f32.gmra.mxu0 %v597
  %v714 = vpop.f32.mrf.mxu0
  %v715 = vadd.f32 0.0, %v714
  %v716 = vpop.f32.mrf.mxu0
  %717 = vmatprep.mubr.f32.mxu0 0.0
  %718 = vmatmul.mubr.f32.gmra.mxu0 %v600
  %v719 = vpop.f32.mrf.mxu0
  %v720 = vadd.f32 0.0, %v719
  %v721 = vpop.f32.mrf.mxu0
  %722 = vmatprep.mubr.f32.mxu0 0.0
  %723 = vmatmul.mubr.f32.gmra.mxu0 %v603
  %v724 = vpop.f32.mrf.mxu0
  %v725 = vadd.f32 0.0, %v724
  %v726 = vpop.f32.mrf.mxu0
  %727 = vmatprep.mubr.f32.mxu0 0.0
  %728 = vmatmul.mubr.f32.gmra.mxu0 %v606
  %v729 = vpop.f32.mrf.mxu0
  %v730 = vadd.f32 0.0, %v729
  %v731 = vpop.f32.mrf.mxu0
  %732 = vmatprep.mubr.f32.mxu0 0.0
  %733 = vmatmul.mubr.f32.gmra.mxu0 %v609
  %v734 = vpop.f32.mrf.mxu0
  %v735 = vadd.f32 0.0, %v734
  %v736 = vpop.f32.mrf.mxu0
  %737 = vmatprep.mubr.f32.mxu0 0.0
  %738 = vmatmul.mubr.f32.gmra.mxu0 %v612
  %v739 = vpop.f32.mrf.mxu0
  %v740 = vadd.f32 0.0, %v739
  %v741 = vpop.f32.mrf.mxu0
  %742 = vmatprep.mubr.f32.mxu0 0.0
  %743 = vmatmul.mubr.f32.gmra.mxu0 %v615
  %v744 = vpop.f32.mrf.mxu0
  %v745 = vadd.f32 0.0, %v744
  %v746 = vpop.f32.mrf.mxu0
  %747 = vmatprep.mubr.f32.mxu0 0.0
  %748 = vmatmul.mubr.f32.gmra.mxu0 %v618
  %v749 = vpop.f32.mrf.mxu0
  %v750 = vadd.f32 0.0, %v749
  %v751 = vpop.f32.mrf.mxu0
  %752 = vmatprep.mubr.f32.mxu0 0.0
  %753 = vmatmul.mubr.f32.gmra.mxu0 %v621
  %v754 = vpop.f32.mrf.mxu0
  %v755 = vadd.f32 0.0, %v754
  %v756 = vpop.f32.mrf.mxu0
  %757 = vmatprep.mubr.f32.mxu0 0.0
  %758 = vmatmul.mubr.f32.gmra.mxu0 %v624
  %v759 = vpop.f32.mrf.mxu0
  %v760 = vadd.f32 0.0, %v759
  %v761 = vpop.f32.mrf.mxu0
  %762 = vmatprep.mubr.f32.mxu0 0.0
  %763 = vmatmul.mubr.f32.gmra.mxu0 %v627
  %v764 = vpop.f32.mrf.mxu0
  %v765 = vadd.f32 0.0, %v764
  %v766 = vpop.f32.mrf.mxu0
  %767 = vmatprep.mubr.f32.mxu0 0.0
  %768 = vmatmul.mubr.f32.gmra.mxu0 %v630
  %v769 = vpop.f32.mrf.mxu0
  %v770 = vadd.f32 0.0, %v769
  %v771 = vpop.f32.mrf.mxu0
  %772 = vmatprep.mubr.f32.mxu0 0.0
  %773 = vmatmul.mubr.f32.gmra.mxu0 %v633
  %v774 = vpop.f32.mrf.mxu0
  %v775 = vadd.f32 0.0, %v774
  %v776 = vpop.f32.mrf.mxu0
  %777 = vmatprep.mubr.f32.mxu0 0.0
  %778 = vmatmul.mubr.f32.gmra.mxu0 %v636
  %v779 = vpop.f32.mrf.mxu0
  %v780 = vadd.f32 0.0, %v779
  %v781 = vpop.f32.mrf.mxu0
  %782 = vdwg.mxu0
  %783 = vmatprep.subr.mxu0 0.0
  %784 = vmatpush1.msra.mxu0 0.0
  %785 = vmatprep.subr.mxu0 0.0
  %786 = vmatpush1.msra.mxu0 0.0
  %787 = vmatprep.subr.mxu0 0.0
  %788 = vmatpush1.msra.mxu0 0.0
  %789 = vmatprep.subr.mxu0 0.0
  %790 = vmatpush1.msra.mxu0 0.0
  %791 = vmatprep.subr.mxu0 0.0
  %792 = vmatpush1.msra.mxu0 0.0
  %793 = vmatprep.subr.mxu0 0.0
  %794 = vmatpush1.msra.mxu0 0.0
  %795 = vmatprep.subr.mxu0 0.0
  %796 = vmatpush1.msra.mxu0 0.0
  %797 = vmatprep.subr.mxu0 0.0
  %798 = vmatpush1.msra.mxu0 0.0
  %799 = vmatprep.subr.mxu0 0.0
  %800 = vmatpush1.msra.mxu0 0.0
  %801 = vmatprep.subr.mxu0 0.0
  %802 = vmatpush1.msra.mxu0 0.0
  %803 = vmatprep.subr.mxu0 0.0
  %804 = vmatpush1.msra.mxu0 0.0
  %805 = vmatprep.subr.mxu0 0.0
  %806 = vmatpush1.msra.mxu0 0.0
  %807 = vmatprep.subr.mxu0 0.0
  %808 = vmatpush1.msra.mxu0 0.0
  %809 = vmatprep.subr.mxu0 0.0
  %810 = vmatpush1.msra.mxu0 0.0
  %811 = vmatprep.subr.mxu0 0.0
  %812 = vmatpush1.msra.mxu0 0.0
  %813 = vmatprep.subr.mxu0 0.0
  %814 = vmatpush1.msra.mxu0 %v578
  %815 = vmatprep.subr.mxu0 0.0
  %816 = vmatpush2.msra.mxu0 0.0
  %817 = vmatprep.subr.mxu0 0.0
  %818 = vmatpush2.msra.mxu0 0.0
  %819 = vmatprep.subr.mxu0 0.0
  %820 = vmatpush2.msra.mxu0 0.0
  %821 = vmatprep.subr.mxu0 0.0
  %822 = vmatpush2.msra.mxu0 0.0
  %823 = vmatprep.subr.mxu0 0.0
  %824 = vmatpush2.msra.mxu0 0.0
  %825 = vmatprep.subr.mxu0 0.0
  %826 = vmatpush2.msra.mxu0 0.0
  %827 = vmatprep.subr.mxu0 0.0
  %828 = vmatpush2.msra.mxu0 0.0
  %829 = vmatprep.subr.mxu0 0.0
  %830 = vmatpush2.msra.mxu0 0.0
  %831 = vmatprep.subr.mxu0 0.0
  %832 = vmatpush2.msra.mxu0 0.0
  %833 = vmatprep.subr.mxu0 0.0
  %834 = vmatpush2.msra.mxu0 0.0
  %835 = vmatprep.subr.mxu0 0.0
  %836 = vmatpush2.msra.mxu0 0.0
  %837 = vmatprep.subr.mxu0 0.0
  %838 = vmatpush2.msra.mxu0 0.0
  %839 = vmatprep.subr.mxu0 0.0
  %840 = vmatpush2.msra.mxu0 0.0
  %841 = vmatprep.subr.mxu0 0.0
  %842 = vmatpush2.msra.mxu0 0.0
  %843 = vmatprep.subr.mxu0 0.0
  %844 = vmatpush2.msra.mxu0 0.0
  %845 = vmatprep.subr.mxu0 0.0
  %846 = vmatpush2.msra.mxu0 0.0
  %847 = vmatprep.mubr.f32.mxu0 0.0
  %848 = vmatmul.mubr.f32.gmra.mxu0 %v591
  %v849 = vpop.f32.mrf.mxu0
  %v850 = vadd.f32 0.0, %v849
  %v851 = vpop.f32.mrf.mxu0
  %852 = vmatprep.mubr.f32.mxu0 0.0
  %853 = vmatmul.mubr.f32.gmra.mxu0 %v594
  %v854 = vpop.f32.mrf.mxu0
  %v855 = vadd.f32 0.0, %v854
  %v856 = vpop.f32.mrf.mxu0
  %857 = vmatprep.mubr.f32.mxu0 0.0
  %858 = vmatmul.mubr.f32.gmra.mxu0 %v597
  %v859 = vpop.f32.mrf.mxu0
  %v860 = vadd.f32 0.0, %v859
  %v861 = vpop.f32.mrf.mxu0
  %862 = vmatprep.mubr.f32.mxu0 0.0
  %863 = vmatmul.mubr.f32.gmra.mxu0 %v600
  %v864 = vpop.f32.mrf.mxu0
  %v865 = vadd.f32 0.0, %v864
  %v866 = vpop.f32.mrf.mxu0
  %867 = vmatprep.mubr.f32.mxu0 0.0
  %868 = vmatmul.mubr.f32.gmra.mxu0 %v603
  %v869 = vpop.f32.mrf.mxu0
  %v870 = vadd.f32 0.0, %v869
  %v871 = vpop.f32.mrf.mxu0
  %872 = vmatprep.mubr.f32.mxu0 0.0
  %873 = vmatmul.mubr.f32.gmra.mxu0 %v606
  %v874 = vpop.f32.mrf.mxu0
  %v875 = vadd.f32 0.0, %v874
  %v876 = vpop.f32.mrf.mxu0
  %877 = vmatprep.mubr.f32.mxu0 0.0
  %878 = vmatmul.mubr.f32.gmra.mxu0 %v609
  %v879 = vpop.f32.mrf.mxu0
  %v880 = vadd.f32 0.0, %v879
  %v881 = vpop.f32.mrf.mxu0
  %882 = vmatprep.mubr.f32.mxu0 0.0
  %883 = vmatmul.mubr.f32.gmra.mxu0 %v612
  %v884 = vpop.f32.mrf.mxu0
  %v885 = vadd.f32 0.0, %v884
  %v886 = vpop.f32.mrf.mxu0
  %887 = vmatprep.mubr.f32.mxu0 0.0
  %888 = vmatmul.mubr.f32.gmra.mxu0 %v615
  %v889 = vpop.f32.mrf.mxu0
  %v890 = vadd.f32 0.0, %v889
  %v891 = vpop.f32.mrf.mxu0
  %892 = vmatprep.mubr.f32.mxu0 0.0
  %893 = vmatmul.mubr.f32.gmra.mxu0 %v618
  %v894 = vpop.f32.mrf.mxu0
  %v895 = vadd.f32 0.0, %v894
  %v896 = vpop.f32.mrf.mxu0
  %897 = vmatprep.mubr.f32.mxu0 0.0
  %898 = vmatmul.mubr.f32.gmra.mxu0 %v621
  %v899 = vpop.f32.mrf.mxu0
  %v900 = vadd.f32 0.0, %v899
  %v901 = vpop.f32.mrf.mxu0
  %902 = vmatprep.mubr.f32.mxu0 0.0
  %903 = vmatmul.mubr.f32.gmra.mxu0 %v624
  %v904 = vpop.f32.mrf.mxu0
  %v905 = vadd.f32 0.0, %v904
  %v906 = vpop.f32.mrf.mxu0
  %907 = vmatprep.mubr.f32.mxu0 0.0
  %908 = vmatmul.mubr.f32.gmra.mxu0 %v627
  %v909 = vpop.f32.mrf.mxu0
  %v910 = vadd.f32 0.0, %v909
  %v911 = vpop.f32.mrf.mxu0
  %912 = vmatprep.mubr.f32.mxu0 0.0
  %913 = vmatmul.mubr.f32.gmra.mxu0 %v630
  %v914 = vpop.f32.mrf.mxu0
  %v915 = vadd.f32 0.0, %v914
  %v916 = vpop.f32.mrf.mxu0
  %917 = vmatprep.mubr.f32.mxu0 0.0
  %918 = vmatmul.mubr.f32.gmra.mxu0 %v633
  %v919 = vpop.f32.mrf.mxu0
  %v920 = vadd.f32 0.0, %v919
  %v921 = vpop.f32.mrf.mxu0
  %922 = vmatprep.mubr.f32.mxu0 0.0
  %923 = vmatmul.mubr.f32.gmra.mxu0 %v636
  %v924 = vpop.f32.mrf.mxu0
  %v925 = vadd.f32 0.0, %v924
  %v926 = vpop.f32.mrf.mxu0
  %927 = vdwg.mxu0
  %v928 = vmul.f32 %v850, %v261
  %v929 = vmul.f32 %v855, %v262
  %v930 = vmul.f32 %v860, %v263
  %v931 = vmul.f32 %v865, %v264
  %v932 = vmul.f32 %v870, %v265
  %v933 = vmul.f32 %v875, %v266
  %v934 = vmul.f32 %v880, %v267
  %v935 = vmul.f32 %v885, %v268
  %v936 = vmul.f32 %v890, %v269
  %v937 = vmul.f32 %v895, %v270
  %v938 = vmul.f32 %v900, %v271
  %v939 = vmul.f32 %v905, %v272
  %v940 = vmul.f32 %v910, %v273
  %v941 = vmul.f32 %v915, %v274
  %v942 = vmul.f32 %v920, %v275
  %v943 = vmul.f32 %v925, %v276
  %v945 = vsel %vm101, %v928, 0
  %v948 = vsel %vm101, %v929, 0
  %v951 = vsel %vm101, %v930, 0
  %v954 = vsel %vm101, %v931, 0
  %v957 = vsel %vm101, %v932, 0
  %v960 = vsel %vm101, %v933, 0
  %v963 = vsel %vm101, %v934, 0
  %v966 = vsel %vm101, %v935, 0
  %v969 = vsel %vm101, %v936, 0
  %v972 = vsel %vm101, %v937, 0
  %v975 = vsel %vm101, %v938, 0
  %v978 = vsel %vm101, %v939, 0
  %v981 = vsel %vm101, %v940, 0
  %v984 = vsel %vm101, %v941, 0
  %v987 = vsel %vm101, %v942, 0
  %v990 = vsel %vm101, %v943, 0
  %992 = vmatprep.subr.mxu0 0.0
  %993 = vmatpush1.msra.mxu0 0.0
  %994 = vmatprep.subr.mxu0 0.0
  %995 = vmatpush1.msra.mxu0 0.0
  %996 = vmatprep.subr.mxu0 0.0
  %997 = vmatpush1.msra.mxu0 0.0
  %998 = vmatprep.subr.mxu0 0.0
  %999 = vmatpush1.msra.mxu0 0.0
  %1000 = vmatprep.subr.mxu0 0.0
  %1001 = vmatpush1.msra.mxu0 0.0
  %1002 = vmatprep.subr.mxu0 0.0
  %1003 = vmatpush1.msra.mxu0 0.0
  %1004 = vmatprep.subr.mxu0 0.0
  %1005 = vmatpush1.msra.mxu0 0.0
  %1006 = vmatprep.subr.mxu0 0.0
  %1007 = vmatpush1.msra.mxu0 0.0
  %1008 = vmatprep.subr.mxu0 0.0
  %1009 = vmatpush1.msra.mxu0 0.0
  %1010 = vmatprep.subr.mxu0 0.0
  %1011 = vmatpush1.msra.mxu0 0.0
  %1012 = vmatprep.subr.mxu0 0.0
  %1013 = vmatpush1.msra.mxu0 0.0
  %1014 = vmatprep.subr.mxu0 0.0
  %1015 = vmatpush1.msra.mxu0 0.0
  %1016 = vmatprep.subr.mxu0 0.0
  %1017 = vmatpush1.msra.mxu0 %v302
  %1018 = vmatprep.subr.mxu0 0.0
  %1019 = vmatpush1.msra.mxu0 %v301
  %1020 = vmatprep.subr.mxu0 0.0
  %1021 = vmatpush1.msra.mxu0 %v300
  %1022 = vmatprep.subr.mxu0 0.0
  %1023 = vmatpush1.msra.mxu0 %v299
  %1024 = vmatprep.subr.mxu0 0.0
  %1025 = vmatpush2.msra.mxu0 0.0
  %1026 = vmatprep.subr.mxu0 0.0
  %1027 = vmatpush2.msra.mxu0 0.0
  %1028 = vmatprep.subr.mxu0 0.0
  %1029 = vmatpush2.msra.mxu0 0.0
  %1030 = vmatprep.subr.mxu0 0.0
  %1031 = vmatpush2.msra.mxu0 0.0
  %1032 = vmatprep.subr.mxu0 0.0
  %1033 = vmatpush2.msra.mxu0 0.0
  %1034 = vmatprep.subr.mxu0 0.0
  %1035 = vmatpush2.msra.mxu0 0.0
  %1036 = vmatprep.subr.mxu0 0.0
  %1037 = vmatpush2.msra.mxu0 0.0
  %1038 = vmatprep.subr.mxu0 0.0
  %1039 = vmatpush2.msra.mxu0 0.0
  %1040 = vmatprep.subr.mxu0 0.0
  %1041 = vmatpush2.msra.mxu0 0.0
  %1042 = vmatprep.subr.mxu0 0.0
  %1043 = vmatpush2.msra.mxu0 0.0
  %1044 = vmatprep.subr.mxu0 0.0
  %1045 = vmatpush2.msra.mxu0 0.0
  %1046 = vmatprep.subr.mxu0 0.0
  %1047 = vmatpush2.msra.mxu0 0.0
  %1048 = vmatprep.subr.mxu0 0.0
  %1049 = vmatpush2.msra.mxu0 0.0
  %1050 = vmatprep.subr.mxu0 0.0
  %1051 = vmatpush2.msra.mxu0 0.0
  %1052 = vmatprep.subr.mxu0 0.0
  %1053 = vmatpush2.msra.mxu0 0.0
  %1054 = vmatprep.subr.mxu0 0.0
  %1055 = vmatpush2.msra.mxu0 0.0
  %1056 = vmatprep.mubr.f32.mxu0 0.0
  %1057 = vmatmul.mubr.f32.gmra.mxu0 %v945
  %v1058 = vpop.f32.mrf.mxu0
  %v1059 = vadd.f32 0.0, %v1058
  %v1060 = vpop.f32.mrf.mxu0
  %1061 = vmatprep.mubr.f32.mxu0 0.0
  %1062 = vmatmul.mubr.f32.gmra.mxu0 %v948
  %v1063 = vpop.f32.mrf.mxu0
  %v1064 = vadd.f32 0.0, %v1063
  %v1065 = vpop.f32.mrf.mxu0
  %1066 = vmatprep.mubr.f32.mxu0 0.0
  %1067 = vmatmul.mubr.f32.gmra.mxu0 %v951
  %v1068 = vpop.f32.mrf.mxu0
  %v1069 = vadd.f32 0.0, %v1068
  %v1070 = vpop.f32.mrf.mxu0
  %1071 = vmatprep.mubr.f32.mxu0 0.0
  %1072 = vmatmul.mubr.f32.gmra.mxu0 %v954
  %v1073 = vpop.f32.mrf.mxu0
  %v1074 = vadd.f32 0.0, %v1073
  %v1075 = vpop.f32.mrf.mxu0
  %1076 = vmatprep.mubr.f32.mxu0 0.0
  %1077 = vmatmul.mubr.f32.gmra.mxu0 %v957
  %v1078 = vpop.f32.mrf.mxu0
  %v1079 = vadd.f32 0.0, %v1078
  %v1080 = vpop.f32.mrf.mxu0
  %1081 = vmatprep.mubr.f32.mxu0 0.0
  %1082 = vmatmul.mubr.f32.gmra.mxu0 %v960
  %v1083 = vpop.f32.mrf.mxu0
  %v1084 = vadd.f32 0.0, %v1083
  %v1085 = vpop.f32.mrf.mxu0
  %1086 = vmatprep.mubr.f32.mxu0 0.0
  %1087 = vmatmul.mubr.f32.gmra.mxu0 %v963
  %v1088 = vpop.f32.mrf.mxu0
  %v1089 = vadd.f32 0.0, %v1088
  %v1090 = vpop.f32.mrf.mxu0
  %1091 = vmatprep.mubr.f32.mxu0 0.0
  %1092 = vmatmul.mubr.f32.gmra.mxu0 %v966
  %v1093 = vpop.f32.mrf.mxu0
  %v1094 = vadd.f32 0.0, %v1093
  %v1095 = vpop.f32.mrf.mxu0
  %1096 = vmatprep.mubr.f32.mxu0 0.0
  %1097 = vmatmul.mubr.f32.gmra.mxu0 %v969
  %v1098 = vpop.f32.mrf.mxu0
  %v1099 = vadd.f32 0.0, %v1098
  %v1100 = vpop.f32.mrf.mxu0
  %1101 = vmatprep.mubr.f32.mxu0 0.0
  %1102 = vmatmul.mubr.f32.gmra.mxu0 %v972
  %v1103 = vpop.f32.mrf.mxu0
  %v1104 = vadd.f32 0.0, %v1103
  %v1105 = vpop.f32.mrf.mxu0
  %1106 = vmatprep.mubr.f32.mxu0 0.0
  %1107 = vmatmul.mubr.f32.gmra.mxu0 %v975
  %v1108 = vpop.f32.mrf.mxu0
  %v1109 = vadd.f32 0.0, %v1108
  %v1110 = vpop.f32.mrf.mxu0
  %1111 = vmatprep.mubr.f32.mxu0 0.0
  %1112 = vmatmul.mubr.f32.gmra.mxu0 %v978
  %v1113 = vpop.f32.mrf.mxu0
  %v1114 = vadd.f32 0.0, %v1113
  %v1115 = vpop.f32.mrf.mxu0
  %1116 = vmatprep.mubr.f32.mxu0 0.0
  %1117 = vmatmul.mubr.f32.gmra.mxu0 %v981
  %v1118 = vpop.f32.mrf.mxu0
  %v1119 = vadd.f32 0.0, %v1118
  %v1120 = vpop.f32.mrf.mxu0
  %1121 = vmatprep.mubr.f32.mxu0 0.0
  %1122 = vmatmul.mubr.f32.gmra.mxu0 %v984
  %v1123 = vpop.f32.mrf.mxu0
  %v1124 = vadd.f32 0.0, %v1123
  %v1125 = vpop.f32.mrf.mxu0
  %1126 = vmatprep.mubr.f32.mxu0 0.0
  %1127 = vmatmul.mubr.f32.gmra.mxu0 %v987
  %v1128 = vpop.f32.mrf.mxu0
  %v1129 = vadd.f32 0.0, %v1128
  %v1130 = vpop.f32.mrf.mxu0
  %1131 = vmatprep.mubr.f32.mxu0 0.0
  %1132 = vmatmul.mubr.f32.gmra.mxu0 %v990
  %v1133 = vpop.f32.mrf.mxu0
  %v1134 = vadd.f32 0.0, %v1133
  %v1135 = vpop.f32.mrf.mxu0
  %1136 = vdwg.mxu0
  %v1137 = vld [vmem:[%s8] sm:$0xff]
  %v1138 = vld [vmem:[%s8 + $0x8] sm:$0xff]
  %v1139 = vld [vmem:[%s8 + $0x10] sm:$0xff]
  %v1140 = vld [vmem:[%s8 + $0x18] sm:$0xff]
  %v1141 = vld [vmem:[%s8 + $0x20] sm:$0xff]
  %v1142 = vld [vmem:[%s8 + $0x28] sm:$0xff]
  %v1143 = vld [vmem:[%s8 + $0x30] sm:$0xff]
  %v1144 = vld [vmem:[%s8 + $0x38] sm:$0xff]
  %v1145 = vld [vmem:[%s8 + $0x40] sm:$0xff]
  %v1146 = vld [vmem:[%s8 + $0x48] sm:$0xff]
  %v1147 = vld [vmem:[%s8 + $0x50] sm:$0xff]
  %v1148 = vld [vmem:[%s8 + $0x58] sm:$0xff]
  %v1149 = vld [vmem:[%s8 + $0x60] sm:$0xff]
  %v1150 = vld [vmem:[%s8 + $0x68] sm:$0xff]
  %v1151 = vld [vmem:[%s8 + $0x70] sm:$0xff]
  %v1152 = vld [vmem:[%s8 + $0x78] sm:$0xff]
  %v1153 = vmul.f32 %v705, %v1137
  %v1154 = vmul.f32 %v710, %v1138
  %v1155 = vmul.f32 %v715, %v1139
  %v1156 = vmul.f32 %v720, %v1140
  %v1157 = vmul.f32 %v725, %v1141
  %v1158 = vmul.f32 %v730, %v1142
  %v1159 = vmul.f32 %v735, %v1143
  %v1160 = vmul.f32 %v740, %v1144
  %v1161 = vmul.f32 %v745, %v1145
  %v1162 = vmul.f32 %v750, %v1146
  %v1163 = vmul.f32 %v755, %v1147
  %v1164 = vmul.f32 %v760, %v1148
  %v1165 = vmul.f32 %v765, %v1149
  %v1166 = vmul.f32 %v770, %v1150
  %v1167 = vmul.f32 %v775, %v1151
  %v1168 = vmul.f32 %v780, %v1152
  %v1169 = vmul.f32 %v1153, 1.442695
  %v1170 = vpow.pop %v1169
  %v1171 = vmul.f32 %v1154, 1.442695
  %v1172 = vpow.pop %v1171
  %v1173 = vmul.f32 %v1155, 1.442695
  %v1174 = vpow.pop %v1173
  %v1175 = vmul.f32 %v1156, 1.442695
  %v1176 = vpow.pop %v1175
  %v1177 = vmul.f32 %v1157, 1.442695
  %v1178 = vpow.pop %v1177
  %v1179 = vmul.f32 %v1158, 1.442695
  %v1180 = vpow.pop %v1179
  %v1181 = vmul.f32 %v1159, 1.442695
  %v1182 = vpow.pop %v1181
  %v1183 = vmul.f32 %v1160, 1.442695
  %v1184 = vpow.pop %v1183
  %v1185 = vmul.f32 %v1161, 1.442695
  %v1186 = vpow.pop %v1185
  %v1187 = vmul.f32 %v1162, 1.442695
  %v1188 = vpow.pop %v1187
  %v1189 = vmul.f32 %v1163, 1.442695
  %v1190 = vpow.pop %v1189
  %v1191 = vmul.f32 %v1164, 1.442695
  %v1192 = vpow.pop %v1191
  %v1193 = vmul.f32 %v1165, 1.442695
  %v1194 = vpow.pop %v1193
  %v1195 = vmul.f32 %v1166, 1.442695
  %v1196 = vpow.pop %v1195
  %v1197 = vmul.f32 %v1167, 1.442695
  %v1198 = vpow.pop %v1197
  %v1199 = vmul.f32 %v1168, 1.442695
  %v1200 = vpow.pop %v1199
  %1201 = vst.msk [vmem:[#allocation2] sm:$0xff] %vm458, %v1170
  %1202 = vst.msk [vmem:[#allocation2 + $0x8] sm:$0xff] %vm458, %v1172
  %1203 = vst.msk [vmem:[#allocation2 + $0x10] sm:$0xff] %vm458, %v1174
  %1204 = vst.msk [vmem:[#allocation2 + $0x18] sm:$0xff] %vm458, %v1176
  %1205 = vst.msk [vmem:[#allocation2 + $0x20] sm:$0xff] %vm458, %v1178
  %1206 = vst.msk [vmem:[#allocation2 + $0x28] sm:$0xff] %vm458, %v1180
  %1207 = vst.msk [vmem:[#allocation2 + $0x30] sm:$0xff] %vm458, %v1182
  %1208 = vst.msk [vmem:[#allocation2 + $0x38] sm:$0xff] %vm458, %v1184
  %1209 = vst.msk [vmem:[#allocation2 + $0x40] sm:$0xff] %vm458, %v1186
  %1210 = vst.msk [vmem:[#allocation2 + $0x48] sm:$0xff] %vm458, %v1188
  %1211 = vst.msk [vmem:[#allocation2 + $0x50] sm:$0xff] %vm458, %v1190
  %1212 = vst.msk [vmem:[#allocation2 + $0x58] sm:$0xff] %vm458, %v1192
  %1213 = vst.msk [vmem:[#allocation2 + $0x60] sm:$0xff] %vm458, %v1194
  %1214 = vst.msk [vmem:[#allocation2 + $0x68] sm:$0xff] %vm458, %v1196
  %1215 = vst.msk [vmem:[#allocation2 + $0x70] sm:$0xff] %vm458, %v1198
  %1216 = vst.msk [vmem:[#allocation2 + $0x78] sm:$0xff] %vm458, %v1200
  %1233 = vrot.lane.b32.xlu0 %v1059, 64
  %v1234 = vpop.permute.xlu0 %1233
  %1235 = vrot.lane.b32.xlu0 %v1064, 64
  %v1236 = vpop.permute.xlu0 %1235
  %1237 = vrot.lane.b32.xlu0 %v1069, 64
  %v1238 = vpop.permute.xlu0 %1237
  %1239 = vrot.lane.b32.xlu0 %v1074, 64
  %v1240 = vpop.permute.xlu0 %1239
  %1241 = vrot.lane.b32.xlu0 %v1079, 64
  %v1242 = vpop.permute.xlu0 %1241
  %1243 = vrot.lane.b32.xlu0 %v1084, 64
  %v1244 = vpop.permute.xlu0 %1243
  %1245 = vrot.lane.b32.xlu0 %v1089, 64
  %v1246 = vpop.permute.xlu0 %1245
  %1247 = vrot.lane.b32.xlu0 %v1094, 64
  %v1248 = vpop.permute.xlu0 %1247
  %1249 = vrot.lane.b32.xlu0 %v1099, 64
  %v1250 = vpop.permute.xlu0 %1249
  %1251 = vrot.lane.b32.xlu0 %v1104, 64
  %v1252 = vpop.permute.xlu0 %1251
  %1253 = vrot.lane.b32.xlu0 %v1109, 64
  %v1254 = vpop.permute.xlu0 %1253
  %1255 = vrot.lane.b32.xlu0 %v1114, 64
  %v1256 = vpop.permute.xlu0 %1255
  %1257 = vrot.lane.b32.xlu0 %v1119, 64
  %v1258 = vpop.permute.xlu0 %1257
  %1259 = vrot.lane.b32.xlu0 %v1124, 64
  %v1260 = vpop.permute.xlu0 %1259
  %1261 = vrot.lane.b32.xlu0 %v1129, 64
  %v1262 = vpop.permute.xlu0 %1261
  %1263 = vrot.lane.b32.xlu0 %v1134, 64
  %v1264 = vpop.permute.xlu0 %1263
  %v1281 = vmul.f32 %v705, %v1234
  %v1282 = vmul.f32 %v710, %v1236
  %v1283 = vmul.f32 %v715, %v1238
  %v1284 = vmul.f32 %v720, %v1240
  %v1285 = vmul.f32 %v725, %v1242
  %v1286 = vmul.f32 %v730, %v1244
  %v1287 = vmul.f32 %v735, %v1246
  %v1288 = vmul.f32 %v740, %v1248
  %v1289 = vmul.f32 %v745, %v1250
  %v1290 = vmul.f32 %v750, %v1252
  %v1291 = vmul.f32 %v755, %v1254
  %v1292 = vmul.f32 %v760, %v1256
  %v1293 = vmul.f32 %v765, %v1258
  %v1294 = vmul.f32 %v770, %v1260
  %v1295 = vmul.f32 %v775, %v1262
  %v1296 = vmul.f32 %v780, %v1264
  %1313 = vrot.lane.b32.xlu0 %v1281, 64
  %v1314 = vpop.permute.xlu0 %1313
  %1315 = vrot.lane.b32.xlu0 %v1282, 64
  %v1316 = vpop.permute.xlu0 %1315
  %1317 = vrot.lane.b32.xlu0 %v1283, 64
  %v1318 = vpop.permute.xlu0 %1317
  %1319 = vrot.lane.b32.xlu0 %v1284, 64
  %v1320 = vpop.permute.xlu0 %1319
  %1321 = vrot.lane.b32.xlu0 %v1285, 64
  %v1322 = vpop.permute.xlu0 %1321
  %1323 = vrot.lane.b32.xlu0 %v1286, 64
  %v1324 = vpop.permute.xlu0 %1323
  %1325 = vrot.lane.b32.xlu0 %v1287, 64
  %v1326 = vpop.permute.xlu0 %1325
  %1327 = vrot.lane.b32.xlu0 %v1288, 64
  %v1328 = vpop.permute.xlu0 %1327
  %1329 = vrot.lane.b32.xlu0 %v1289, 64
  %v1330 = vpop.permute.xlu0 %1329
  %1331 = vrot.lane.b32.xlu0 %v1290, 64
  %v1332 = vpop.permute.xlu0 %1331
  %1333 = vrot.lane.b32.xlu0 %v1291, 64
  %v1334 = vpop.permute.xlu0 %1333
  %1335 = vrot.lane.b32.xlu0 %v1292, 64
  %v1336 = vpop.permute.xlu0 %1335
  %1337 = vrot.lane.b32.xlu0 %v1293, 64
  %v1338 = vpop.permute.xlu0 %1337
  %1339 = vrot.lane.b32.xlu0 %v1294, 64
  %v1340 = vpop.permute.xlu0 %1339
  %1341 = vrot.lane.b32.xlu0 %v1295, 64
  %v1342 = vpop.permute.xlu0 %1341
  %1343 = vrot.lane.b32.xlu0 %v1296, 64
  %v1344 = vpop.permute.xlu0 %1343
  %1361 = vst.msk [vmem:[#allocation3] sm:$0xff] %vm458, %v1314
  %1362 = vst.msk [vmem:[#allocation3 + $0x8] sm:$0xff] %vm458, %v1316
  %1363 = vst.msk [vmem:[#allocation3 + $0x10] sm:$0xff] %vm458, %v1318
  %1364 = vst.msk [vmem:[#allocation3 + $0x18] sm:$0xff] %vm458, %v1320
  %1365 = vst.msk [vmem:[#allocation3 + $0x20] sm:$0xff] %vm458, %v1322
  %1366 = vst.msk [vmem:[#allocation3 + $0x28] sm:$0xff] %vm458, %v1324
  %1367 = vst.msk [vmem:[#allocation3 + $0x30] sm:$0xff] %vm458, %v1326
  %1368 = vst.msk [vmem:[#allocation3 + $0x38] sm:$0xff] %vm458, %v1328
  %1369 = vst.msk [vmem:[#allocation3 + $0x40] sm:$0xff] %vm458, %v1330
  %1370 = vst.msk [vmem:[#allocation3 + $0x48] sm:$0xff] %vm458, %v1332
  %1371 = vst.msk [vmem:[#allocation3 + $0x50] sm:$0xff] %vm458, %v1334
  %1372 = vst.msk [vmem:[#allocation3 + $0x58] sm:$0xff] %vm458, %v1336
  %1373 = vst.msk [vmem:[#allocation3 + $0x60] sm:$0xff] %vm458, %v1338
  %1374 = vst.msk [vmem:[#allocation3 + $0x68] sm:$0xff] %vm458, %v1340
  %1375 = vst.msk [vmem:[#allocation3 + $0x70] sm:$0xff] %vm458, %v1342
  %1376 = vst.msk [vmem:[#allocation3 + $0x78] sm:$0xff] %vm458, %v1344
  %v1377 = vld [vmem:[#allocation2] sm:$0xff]
  %v1378 = vld [vmem:[#allocation2 + $0x8] sm:$0xff]
  %v1379 = vmul.f32 %v1377, 0.0
  %v1380 = vmul.f32 %v1378, 0.0
  %v1381 = vld [vmem:[#allocation3] sm:$0xff]
  %v1382 = vld [vmem:[#allocation3 + $0x8] sm:$0xff]
  %v1383 = vadd.f32 %v1379, %v1381
  %v1384 = vadd.f32 %v1380, %v1382
  %v1385 = vld [vmem:[#allocation2 + $0x10] sm:$0xff]
  %v1386 = vld [vmem:[#allocation2 + $0x18] sm:$0xff]
  %v1387 = vmul.f32 %v1385, %v1383
  %v1388 = vmul.f32 %v1386, %v1384
  %v1389 = vld [vmem:[#allocation3 + $0x10] sm:$0xff]
  %v1390 = vld [vmem:[#allocation3 + $0x18] sm:$0xff]
  %v1391 = vadd.f32 %v1387, %v1389
  %v1392 = vadd.f32 %v1388, %v1390
  %v1393 = vld [vmem:[#allocation2 + $0x20] sm:$0xff]
  %v1394 = vld [vmem:[#allocation2 + $0x28] sm:$0xff]
  %v1395 = vmul.f32 %v1393, %v1391
  %v1396 = vmul.f32 %v1394, %v1392
  %v1397 = vld [vmem:[#allocation3 + $0x20] sm:$0xff]
  %v1398 = vld [vmem:[#allocation3 + $0x28] sm:$0xff]
  %v1399 = vadd.f32 %v1395, %v1397
  %v1400 = vadd.f32 %v1396, %v1398
  %v1401 = vld [vmem:[#allocation2 + $0x30] sm:$0xff]
  %v1402 = vld [vmem:[#allocation2 + $0x38] sm:$0xff]
  %v1403 = vmul.f32 %v1401, %v1399
  %v1404 = vmul.f32 %v1402, %v1400
  %v1405 = vld [vmem:[#allocation3 + $0x30] sm:$0xff]
  %v1406 = vld [vmem:[#allocation3 + $0x38] sm:$0xff]
  %v1407 = vadd.f32 %v1403, %v1405
  %v1408 = vadd.f32 %v1404, %v1406
  %v1409 = vld [vmem:[#allocation2 + $0x40] sm:$0xff]
  %v1410 = vld [vmem:[#allocation2 + $0x48] sm:$0xff]
  %v1411 = vmul.f32 %v1409, %v1407
  %v1412 = vmul.f32 %v1410, %v1408
  %v1413 = vld [vmem:[#allocation3 + $0x40] sm:$0xff]
  %v1414 = vld [vmem:[#allocation3 + $0x48] sm:$0xff]
  %v1415 = vadd.f32 %v1411, %v1413
  %v1416 = vadd.f32 %v1412, %v1414
  %v1417 = vld [vmem:[#allocation2 + $0x50] sm:$0xff]
  %v1418 = vld [vmem:[#allocation2 + $0x58] sm:$0xff]
  %v1419 = vmul.f32 %v1417, %v1415
  %v1420 = vmul.f32 %v1418, %v1416
  %v1421 = vld [vmem:[#allocation3 + $0x50] sm:$0xff]
  %v1422 = vld [vmem:[#allocation3 + $0x58] sm:$0xff]
  %v1423 = vadd.f32 %v1419, %v1421
  %v1424 = vadd.f32 %v1420, %v1422
  %v1425 = vld [vmem:[#allocation2 + $0x60] sm:$0xff]
  %v1426 = vld [vmem:[#allocation2 + $0x68] sm:$0xff]
  %v1427 = vmul.f32 %v1425, %v1423
  %v1428 = vmul.f32 %v1426, %v1424
  %v1429 = vld [vmem:[#allocation3 + $0x60] sm:$0xff]
  %v1430 = vld [vmem:[#allocation3 + $0x68] sm:$0xff]
  %v1431 = vadd.f32 %v1427, %v1429
  %v1432 = vadd.f32 %v1428, %v1430
  %v1433 = vld [vmem:[#allocation2 + $0x70] sm:$0xff]
  %v1434 = vld [vmem:[#allocation2 + $0x78] sm:$0xff]
  %v1435 = vmul.f32 %v1433, %v1431
  %v1436 = vmul.f32 %v1434, %v1432
  %v1437 = vld [vmem:[#allocation3 + $0x70] sm:$0xff]
  %v1438 = vld [vmem:[#allocation3 + $0x78] sm:$0xff]
  %v1439 = vadd.f32 %v1435, %v1437
  %v1440 = vadd.f32 %v1436, %v1438
  %v1441 = vmul.f32 %v1383, %v1234
  %v1442 = vmul.f32 %v1384, %v1236
  %v1443 = vmul.f32 %v1391, %v1238
  %v1444 = vmul.f32 %v1392, %v1240
  %v1445 = vmul.f32 %v1399, %v1242
  %v1446 = vmul.f32 %v1400, %v1244
  %v1447 = vmul.f32 %v1407, %v1246
  %v1448 = vmul.f32 %v1408, %v1248
  %v1449 = vmul.f32 %v1415, %v1250
  %v1450 = vmul.f32 %v1416, %v1252
  %v1451 = vmul.f32 %v1423, %v1254
  %v1452 = vmul.f32 %v1424, %v1256
  %v1453 = vmul.f32 %v1431, %v1258
  %v1454 = vmul.f32 %v1432, %v1260
  %v1455 = vmul.f32 %v1439, %v1262
  %v1456 = vmul.f32 %v1440, %v1264
  %v1457 = vlaneseq
  %v1458 = vshrl.u32 %v1457, 7
  %v1459 = vsub.s32 7, %v1458
  %v1460 = vrot.slane %v303, %v1459
  %v1461 = vmul.f32 %v1460, %v420
  %1462 = vmatprep.subr.mxu0 0.0
  %1463 = vmatpush1.msra.mxu0 %v1456
  %1464 = vmatprep.subr.mxu0 0.0
  %1465 = vmatpush1.msra.mxu0 %v1455
  %1466 = vmatprep.subr.mxu0 0.0
  %1467 = vmatpush1.msra.mxu0 %v1454
  %1468 = vmatprep.subr.mxu0 0.0
  %1469 = vmatpush1.msra.mxu0 %v1453
  %1470 = vmatprep.subr.mxu0 0.0
  %1471 = vmatpush1.msra.mxu0 %v1452
  %1472 = vmatprep.subr.mxu0 0.0
  %1473 = vmatpush1.msra.mxu0 %v1451
  %1474 = vmatprep.subr.mxu0 0.0
  %1475 = vmatpush1.msra.mxu0 %v1450
  %1476 = vmatprep.subr.mxu0 0.0
  %1477 = vmatpush1.msra.mxu0 %v1449
  %1478 = vmatprep.subr.mxu0 0.0
  %1479 = vmatpush1.msra.mxu0 %v1448
  %1480 = vmatprep.subr.mxu0 0.0
  %1481 = vmatpush1.msra.mxu0 %v1447
  %1482 = vmatprep.subr.mxu0 0.0
  %1483 = vmatpush1.msra.mxu0 %v1446
  %1484 = vmatprep.subr.mxu0 0.0
  %1485 = vmatpush1.msra.mxu0 %v1445
  %1486 = vmatprep.subr.mxu0 0.0
  %1487 = vmatpush1.msra.mxu0 %v1444
  %1488 = vmatprep.subr.mxu0 0.0
  %1489 = vmatpush1.msra.mxu0 %v1443
  %1490 = vmatprep.subr.mxu0 0.0
  %1491 = vmatpush1.msra.mxu0 %v1442
  %1492 = vmatprep.subr.mxu0 0.0
  %1493 = vmatpush1.msra.mxu0 %v1441
  %1494 = vmatprep.subr.mxu0 0.0
  %1495 = vmatpush2.msra.mxu0 0.0
  %1496 = vmatprep.subr.mxu0 0.0
  %1497 = vmatpush2.msra.mxu0 0.0
  %1498 = vmatprep.subr.mxu0 0.0
  %1499 = vmatpush2.msra.mxu0 0.0
  %1500 = vmatprep.subr.mxu0 0.0
  %1501 = vmatpush2.msra.mxu0 0.0
  %1502 = vmatprep.subr.mxu0 0.0
  %1503 = vmatpush2.msra.mxu0 0.0
  %1504 = vmatprep.subr.mxu0 0.0
  %1505 = vmatpush2.msra.mxu0 0.0
  %1506 = vmatprep.subr.mxu0 0.0
  %1507 = vmatpush2.msra.mxu0 0.0
  %1508 = vmatprep.subr.mxu0 0.0
  %1509 = vmatpush2.msra.mxu0 0.0
  %1510 = vmatprep.subr.mxu0 0.0
  %1511 = vmatpush2.msra.mxu0 0.0
  %1512 = vmatprep.subr.mxu0 0.0
  %1513 = vmatpush2.msra.mxu0 0.0
  %1514 = vmatprep.subr.mxu0 0.0
  %1515 = vmatpush2.msra.mxu0 0.0
  %1516 = vmatprep.subr.mxu0 0.0
  %1517 = vmatpush2.msra.mxu0 0.0
  %1518 = vmatprep.subr.mxu0 0.0
  %1519 = vmatpush2.msra.mxu0 0.0
  %1520 = vmatprep.subr.mxu0 0.0
  %1521 = vmatpush2.msra.mxu0 0.0
  %1522 = vmatprep.subr.mxu0 0.0
  %1523 = vmatpush2.msra.mxu0 0.0
  %1524 = vmatprep.subr.mxu0 0.0
  %1525 = vmatpush2.msra.mxu0 0.0
  %1526 = vmatprep.mubr.f32.mxu0 0.0
  %1527 = vmatmul.mubr.f32.gmra.mxu0 %v227
  %v1528 = vpop.f32.mrf.mxu0
  %v1529 = vadd.f32 %v1461, %v1528
  %v1530 = vpop.f32.mrf.mxu0
  %1531 = vdwg.mxu0
  %v1532 = vxor.u32 %v372, 2147483648
  %v1533 = vmul.f32 %v1532, 1.442695
  %v1534 = vpow.pop %v1533
  %v1535 = vadd.f32 %v1534, 1.0
  %v1536 = vrcp.pop %v1535
  %v1537 = vmul.f32 1.0, %v1536
  %v1538 = vmul.f32 %v372, %v1537
  %1540 = vrot.lane.b32.xlu0 %v1538, 64
  %v1541 = vpop.permute.xlu0 %1540
  %v1543 = vmul.f32 %v1529, %v1541
  %v1544 = vpack.c.bf16 %v1543, %v1543
  %v1545 = vld [vmem:[%s6] sm:$0xf]
  %v1546 = vld [vmem:[%s6 + $0x4] sm:$0xf]
  %v1547 = vld [vmem:[%s6 + $0x8] sm:$0xf]
  %v1548 = vld [vmem:[%s6 + $0xc] sm:$0xf]
  %v1549 = vld [vmem:[%s6 + $0x10] sm:$0xf]
  %v1550 = vld [vmem:[%s6 + $0x14] sm:$0xf]
  %v1551 = vld [vmem:[%s6 + $0x18] sm:$0xf]
  %v1552 = vld [vmem:[%s6 + $0x1c] sm:$0xf]
  %v1561 = vunpack.c.l.b16 %v1545
  %v1562 = vunpack.c.l.b16 %v1546
  %v1563 = vunpack.c.l.b16 %v1547
  %v1564 = vunpack.c.l.b16 %v1548
  %v1565 = vunpack.c.l.b16 %v1549
  %v1566 = vunpack.c.l.b16 %v1550
  %v1567 = vunpack.c.l.b16 %v1551
  %v1568 = vunpack.c.l.b16 %v1552
  %v1569 = vpack.c.b16 %v1562, %v1561
  %v1570 = vpack.c.b16 %v1564, %v1563
  %v1571 = vpack.c.b16 %v1566, %v1565
  %v1572 = vpack.c.b16 %v1568, %v1567
  %v1578 = vsel %vm458, %v1544, 0
  %1580 = vmatprep.subr.bf16.mxu0 0
  %1581 = vmatpush1.bf16.msra.mxu0 0
  %1582 = vmatprep.subr.bf16.mxu0 0
  %1583 = vmatpush1.bf16.msra.mxu0 0
  %1584 = vmatprep.subr.bf16.mxu0 0
  %1585 = vmatpush1.bf16.msra.mxu0 0
  %1586 = vmatprep.subr.bf16.mxu0 0
  %1587 = vmatpush1.bf16.msra.mxu0 0
  %1588 = vmatprep.subr.bf16.mxu0 0
  %1589 = vmatpush1.bf16.msra.mxu0 %v1572
  %1590 = vmatprep.subr.bf16.mxu0 0
  %1591 = vmatpush1.bf16.msra.mxu0 %v1571
  %1592 = vmatprep.subr.bf16.mxu0 0
  %1593 = vmatpush1.bf16.msra.mxu0 %v1570
  %1594 = vmatprep.subr.bf16.mxu0 0
  %1595 = vmatpush1.bf16.msra.mxu0 %v1569
  %1596 = vmatprep.subr.bf16.mxu0 0
  %1597 = vmatpush2.bf16.msra.mxu0 0
  %1598 = vmatprep.subr.bf16.mxu0 0
  %1599 = vmatpush2.bf16.msra.mxu0 0
  %1600 = vmatprep.subr.bf16.mxu0 0
  %1601 = vmatpush2.bf16.msra.mxu0 0
  %1602 = vmatprep.subr.bf16.mxu0 0
  %1603 = vmatpush2.bf16.msra.mxu0 0
  %1604 = vmatprep.subr.bf16.mxu0 0
  %1605 = vmatpush2.bf16.msra.mxu0 0
  %1606 = vmatprep.subr.bf16.mxu0 0
  %1607 = vmatpush2.bf16.msra.mxu0 0
  %1608 = vmatprep.subr.bf16.mxu0 0
  %1609 = vmatpush2.bf16.msra.mxu0 0
  %1610 = vmatprep.subr.bf16.mxu0 0
  %1611 = vmatpush2.bf16.msra.mxu0 0
  %1612 = vmatprep.mubr.bf16.mxu0 0
  %1613 = vmatmul.mubr.bf16.gmra.mxu0 %v1578
  %v1614 = vpop.f32.mrf.mxu0
  %v1615 = vadd.f32 %v134, %v1614
  %v1616 = vpop.f32.mrf.mxu0
  %v1617 = vpop.f32.mrf.mxu0
  %v1618 = vpop.f32.mrf.mxu0
  %1619 = vdwg.mxu0
  %s1620 = scalar_lea.vmem %s7, 8
  %v1621 = vld [vmem:[%s1620] sm:$0xff]
  %v1622 = vmul.f32 %v1615, %v1615
  %v1623 = vsel %vm101, %v1622, 0.0
  %1624 = vadd.xlane.f32.xlu0 %v1623
  %v1625 = vpop.xlane.xlu0 %1624
  %v1626 = vmul.f32 %v1625, %v105
  %v1627 = vadd.f32 %v1626, 1e-05
  %v1628 = vrsqrt.pop %v1627
  %v1629 = vmul.f32 %v1615, %v1628
  %v1630 = vlaneseq
  %v1631 = vshrl.u32 %v1630, 7
  %v1632 = vsub.s32 0, %v1631
  %v1633 = vrot.slane %v1621, %v1632
  %v1634 = vmul.f32 %v1629, %v1633
  %v1635 = vpack.c.bf16 %v1634, %v1634
  %s1636 = scalar_lea.vmem %s3, 16
  %v1637 = vld [vmem:[%s1636] sm:$0xf]
  %v1638 = vld [vmem:[%s1636 + $0x4] sm:$0xf]
  %v1639 = vld [vmem:[%s1636 + $0x8] sm:$0xf]
  %v1640 = vld [vmem:[%s1636 + $0xc] sm:$0xf]
  %v1645 = vunpack.c.l.b16 %v1637
  %v1646 = vunpack.c.l.b16 %v1638
  %v1647 = vunpack.c.l.b16 %v1639
  %v1648 = vunpack.c.l.b16 %v1640
  %v1649 = vpack.c.b16 %v1646, %v1645
  %v1650 = vpack.c.b16 %v1648, %v1647
  %v1654 = vsel %vm101, %v1635, 0
  %1656 = vmatprep.subr.bf16.mxu0 0
  %1657 = vmatpush1.bf16.msra.mxu0 0
  %1658 = vmatprep.subr.bf16.mxu0 0
  %1659 = vmatpush1.bf16.msra.mxu0 0
  %1660 = vmatprep.subr.bf16.mxu0 0
  %1661 = vmatpush1.bf16.msra.mxu0 0
  %1662 = vmatprep.subr.bf16.mxu0 0
  %1663 = vmatpush1.bf16.msra.mxu0 0
  %1664 = vmatprep.subr.bf16.mxu0 0
  %1665 = vmatpush1.bf16.msra.mxu0 0
  %1666 = vmatprep.subr.bf16.mxu0 0
  %1667 = vmatpush1.bf16.msra.mxu0 0
  %1668 = vmatprep.subr.bf16.mxu0 0
  %1669 = vmatpush1.bf16.msra.mxu0 %v1650
  %1670 = vmatprep.subr.bf16.mxu0 0
  %1671 = vmatpush1.bf16.msra.mxu0 %v1649
  %1672 = vmatprep.subr.bf16.mxu0 0
  %1673 = vmatpush2.bf16.msra.mxu0 0
  %1674 = vmatprep.subr.bf16.mxu0 0
  %1675 = vmatpush2.bf16.msra.mxu0 0
  %1676 = vmatprep.subr.bf16.mxu0 0
  %1677 = vmatpush2.bf16.msra.mxu0 0
  %1678 = vmatprep.subr.bf16.mxu0 0
  %1679 = vmatpush2.bf16.msra.mxu0 0
  %1680 = vmatprep.subr.bf16.mxu0 0
  %1681 = vmatpush2.bf16.msra.mxu0 0
  %1682 = vmatprep.subr.bf16.mxu0 0
  %1683 = vmatpush2.bf16.msra.mxu0 0
  %1684 = vmatprep.subr.bf16.mxu0 0
  %1685 = vmatpush2.bf16.msra.mxu0 0
  %1686 = vmatprep.subr.bf16.mxu0 0
  %1687 = vmatpush2.bf16.msra.mxu0 0
  %1688 = vmatprep.mubr.bf16.mxu0 0
  %1689 = vmatmul.mubr.bf16.gmra.mxu0 %v1654
  %v1690 = vpop.f32.mrf.mxu0
  %v1691 = vadd.f32 0.0, %v1690
  %v1692 = vpop.f32.mrf.mxu0
  %v1693 = vpop.f32.mrf.mxu0
  %v1694 = vpop.f32.mrf.mxu0
  %1695 = vdwg.mxu0
  %v1696 = vlaneseq
  %v1697 = vshrl.u32 %v1696, 7
  %v1698 = vsub.s32 4, %v1697
  %v1699 = vrot.slane %v1621, %v1698
  %v1700 = vmul.f32 %v1691, %v1699
  %v1701 = vlaneseq
  %v1702 = vshrl.u32 %v1701, 7
  %v1703 = vsub.s32 5, %v1702
  %v1704 = vrot.slane %v1621, %v1703
  %v1705 = vadd.f32 %v1704, %v1700
  %v1706 = vrot.slane %v1691, 7
  %v1707 = vsel %vm387, %v1706, 0.0
  %v1708 = vlaneseq
  %v1709 = vshrl.u32 %v1708, 7
  %v1710 = vsub.s32 3, %v1709
  %v1711 = vrot.slane %v1621, %v1710
  %v1712 = vmul.f32 %v1707, %v1711
  %v1713 = vadd.f32 %v1705, %v1712
  %v1714 = vrot.slane %v1691, 6
  %v1715 = vsel %vm396, %v1714, 0.0
  %v1716 = vlaneseq
  %v1717 = vshrl.u32 %v1716, 7
  %v1718 = vsub.s32 2, %v1717
  %v1719 = vrot.slane %v1621, %v1718
  %v1720 = vmul.f32 %v1715, %v1719
  %v1721 = vadd.f32 %v1713, %v1720
  %v1722 = vrot.slane %v1691, 5
  %v1723 = vsel %vm405, %v1722, 0.0
  %v1724 = vlaneseq
  %v1725 = vshrl.u32 %v1724, 7
  %v1726 = vsub.s32 1, %v1725
  %v1727 = vrot.slane %v1621, %v1726
  %v1728 = vmul.f32 %v1723, %v1727
  %v1729 = vadd.f32 %v1721, %v1728
  %v1730 = vxor.u32 %v1729, 2147483648
  %v1731 = vmul.f32 %v1730, 1.442695
  %v1732 = vpow.pop %v1731
  %v1733 = vadd.f32 %v1732, 1.0
  %v1734 = vrcp.pop %v1733
  %v1735 = vmul.f32 1.0, %v1734
  %v1736 = vmul.f32 %v1729, %v1735
  %v1737 = vpack.c.bf16 %v1736, %v1736
  %s1738 = scalar_lea.vmem %s4, 32
  %v1739 = vld [vmem:[%s1738] sm:$0xf]
  %v1740 = vld [vmem:[%s1738 + $0x4] sm:$0xf]
  %v1741 = vld [vmem:[%s1738 + $0x8] sm:$0xf]
  %v1742 = vld [vmem:[%s1738 + $0xc] sm:$0xf]
  %v1743 = vld [vmem:[%s1738 + $0x10] sm:$0xf]
  %v1744 = vld [vmem:[%s1738 + $0x14] sm:$0xf]
  %v1745 = vld [vmem:[%s1738 + $0x18] sm:$0xf]
  %v1746 = vld [vmem:[%s1738 + $0x1c] sm:$0xf]
  %v1747 = vlaneseq
  %v1748 = vshrl.u32 %v1747, 7
  %v1749 = vsub.s32 6, %v1748
  %v1750 = vrot.slane %v1621, %v1749
  %v1759 = vunpack.c.l.b16 %v1739
  %v1760 = vunpack.c.l.b16 %v1740
  %v1761 = vunpack.c.l.b16 %v1741
  %v1762 = vunpack.c.l.b16 %v1742
  %v1763 = vunpack.c.l.b16 %v1743
  %v1764 = vunpack.c.l.b16 %v1744
  %v1765 = vunpack.c.l.b16 %v1745
  %v1766 = vunpack.c.l.b16 %v1746
  %v1767 = vpack.c.b16 %v1760, %v1759
  %v1768 = vpack.c.b16 %v1762, %v1761
  %v1769 = vpack.c.b16 %v1764, %v1763
  %v1770 = vpack.c.b16 %v1766, %v1765
  %v1776 = vsel %vm458, %v1737, 0
  %1778 = vmatprep.subr.bf16.mxu0 0
  %1779 = vmatpush1.bf16.msra.mxu0 0
  %1780 = vmatprep.subr.bf16.mxu0 0
  %1781 = vmatpush1.bf16.msra.mxu0 0
  %1782 = vmatprep.subr.bf16.mxu0 0
  %1783 = vmatpush1.bf16.msra.mxu0 0
  %1784 = vmatprep.subr.bf16.mxu0 0
  %1785 = vmatpush1.bf16.msra.mxu0 0
  %1786 = vmatprep.subr.bf16.mxu0 0
  %1787 = vmatpush1.bf16.msra.mxu0 %v1770
  %1788 = vmatprep.subr.bf16.mxu0 0
  %1789 = vmatpush1.bf16.msra.mxu0 %v1769
  %1790 = vmatprep.subr.bf16.mxu0 0
  %1791 = vmatpush1.bf16.msra.mxu0 %v1768
  %1792 = vmatprep.subr.bf16.mxu0 0
  %1793 = vmatpush1.bf16.msra.mxu0 %v1767
  %1794 = vmatprep.subr.bf16.mxu0 0
  %1795 = vmatpush2.bf16.msra.mxu0 0
  %1796 = vmatprep.subr.bf16.mxu0 0
  %1797 = vmatpush2.bf16.msra.mxu0 0
  %1798 = vmatprep.subr.bf16.mxu0 0
  %1799 = vmatpush2.bf16.msra.mxu0 0
  %1800 = vmatprep.subr.bf16.mxu0 0
  %1801 = vmatpush2.bf16.msra.mxu0 0
  %1802 = vmatprep.subr.bf16.mxu0 0
  %1803 = vmatpush2.bf16.msra.mxu0 0
  %1804 = vmatprep.subr.bf16.mxu0 0
  %1805 = vmatpush2.bf16.msra.mxu0 0
  %1806 = vmatprep.subr.bf16.mxu0 0
  %1807 = vmatpush2.bf16.msra.mxu0 0
  %1808 = vmatprep.subr.bf16.mxu0 0
  %1809 = vmatpush2.bf16.msra.mxu0 0
  %1810 = vmatprep.mubr.bf16.mxu0 0
  %1811 = vmatmul.mubr.bf16.gmra.mxu0 %v1776
  %v1812 = vpop.f32.mrf.mxu0
  %v1813 = vadd.f32 %v1750, %v1812
  %v1814 = vpop.f32.mrf.mxu0
  %v1815 = vpop.f32.mrf.mxu0
  %v1816 = vpop.f32.mrf.mxu0
  %1817 = vdwg.mxu0
  %v1818 = vmax.f32 %v1813, 0.0
  %v1819 = vand.u32 2147483647, %v1813
  %v1820 = vsub.f32 0.0, %v1819
  %v1821 = vmul.f32 %v1820, 1.442695
  %v1822 = vpow.pop %v1821
  %v1823 = vadd.f32 %v1822, 1.0
  %v1824 = vlog2.pop %v1823
  %v1825 = vmul.f32 %v1824, 0.6931472
  %v1826 = vadd.f32 %v1818, %v1825
  %s1827 = scalar_lea.vmem %s5, 32
  %v1828 = vld [vmem:[%s1827] sm:$0xf]
  %v1829 = vld [vmem:[%s1827 + $0x4] sm:$0xf]
  %v1830 = vld [vmem:[%s1827 + $0x8] sm:$0xf]
  %v1831 = vld [vmem:[%s1827 + $0xc] sm:$0xf]
  %v1832 = vld [vmem:[%s1827 + $0x10] sm:$0xf]
  %v1833 = vld [vmem:[%s1827 + $0x14] sm:$0xf]
  %v1834 = vld [vmem:[%s1827 + $0x18] sm:$0xf]
  %v1835 = vld [vmem:[%s1827 + $0x1c] sm:$0xf]
  %v1844 = vunpack.c.l.b16 %v1828
  %v1845 = vunpack.c.l.b16 %v1829
  %v1846 = vunpack.c.l.b16 %v1830
  %v1847 = vunpack.c.l.b16 %v1831
  %v1848 = vunpack.c.l.b16 %v1832
  %v1849 = vunpack.c.l.b16 %v1833
  %v1850 = vunpack.c.l.b16 %v1834
  %v1851 = vunpack.c.l.b16 %v1835
  %v1852 = vpack.c.b16 %v1845, %v1844
  %v1853 = vpack.c.b16 %v1847, %v1846
  %v1854 = vpack.c.b16 %v1849, %v1848
  %v1855 = vpack.c.b16 %v1851, %v1850
  %1860 = vmatprep.subr.bf16.mxu0 0
  %1861 = vmatpush1.bf16.msra.mxu0 0
  %1862 = vmatprep.subr.bf16.mxu0 0
  %1863 = vmatpush1.bf16.msra.mxu0 0
  %1864 = vmatprep.subr.bf16.mxu0 0
  %1865 = vmatpush1.bf16.msra.mxu0 0
  %1866 = vmatprep.subr.bf16.mxu0 0
  %1867 = vmatpush1.bf16.msra.mxu0 0
  %1868 = vmatprep.subr.bf16.mxu0 0
  %1869 = vmatpush1.bf16.msra.mxu0 %v1855
  %1870 = vmatprep.subr.bf16.mxu0 0
  %1871 = vmatpush1.bf16.msra.mxu0 %v1854
  %1872 = vmatprep.subr.bf16.mxu0 0
  %1873 = vmatpush1.bf16.msra.mxu0 %v1853
  %1874 = vmatprep.subr.bf16.mxu0 0
  %1875 = vmatpush1.bf16.msra.mxu0 %v1852
  %1876 = vmatprep.subr.bf16.mxu0 0
  %1877 = vmatpush2.bf16.msra.mxu0 0
  %1878 = vmatprep.subr.bf16.mxu0 0
  %1879 = vmatpush2.bf16.msra.mxu0 0
  %1880 = vmatprep.subr.bf16.mxu0 0
  %1881 = vmatpush2.bf16.msra.mxu0 0
  %1882 = vmatprep.subr.bf16.mxu0 0
  %1883 = vmatpush2.bf16.msra.mxu0 0
  %1884 = vmatprep.subr.bf16.mxu0 0
  %1885 = vmatpush2.bf16.msra.mxu0 0
  %1886 = vmatprep.subr.bf16.mxu0 0
  %1887 = vmatpush2.bf16.msra.mxu0 0
  %1888 = vmatprep.subr.bf16.mxu0 0
  %1889 = vmatpush2.bf16.msra.mxu0 0
  %1890 = vmatprep.subr.bf16.mxu0 0
  %1891 = vmatpush2.bf16.msra.mxu0 0
  %1892 = vmatprep.mubr.bf16.mxu0 0
  %1893 = vmatmul.mubr.bf16.gmra.mxu0 %v1776
  %v1894 = vpop.f32.mrf.mxu0
  %v1895 = vadd.f32 0.0, %v1894
  %v1896 = vpop.f32.mrf.mxu0
  %v1897 = vpop.f32.mrf.mxu0
  %v1898 = vpop.f32.mrf.mxu0
  %1899 = vdwg.mxu0
  %v1900 = vmul.f32 %v1826, %v1736
  %1902 = vrot.lane.b32.xlu0 %v1900, 64
  %v1903 = vpop.permute.xlu0 %1902
  %v1905 = vsel %vm458, %v1826, %v1903
  %1906 = vmatprep.subr.mxu0 0.0
  %1907 = vmatpush1.msra.mxu0 0.0
  %1908 = vmatprep.subr.mxu0 0.0
  %1909 = vmatpush1.msra.mxu0 0.0
  %1910 = vmatprep.subr.mxu0 0.0
  %1911 = vmatpush1.msra.mxu0 0.0
  %1912 = vmatprep.subr.mxu0 0.0
  %1913 = vmatpush1.msra.mxu0 0.0
  %1914 = vmatprep.subr.mxu0 0.0
  %1915 = vmatpush1.msra.mxu0 0.0
  %1916 = vmatprep.subr.mxu0 0.0
  %1917 = vmatpush1.msra.mxu0 0.0
  %1918 = vmatprep.subr.mxu0 0.0
  %1919 = vmatpush1.msra.mxu0 0.0
  %1920 = vmatprep.subr.mxu0 0.0
  %1921 = vmatpush1.msra.mxu0 0.0
  %1922 = vmatprep.subr.mxu0 0.0
  %1923 = vmatpush1.msra.mxu0 0.0
  %1924 = vmatprep.subr.mxu0 0.0
  %1925 = vmatpush1.msra.mxu0 0.0
  %1926 = vmatprep.subr.mxu0 0.0
  %1927 = vmatpush1.msra.mxu0 0.0
  %1928 = vmatprep.subr.mxu0 0.0
  %1929 = vmatpush1.msra.mxu0 0.0
  %1930 = vmatprep.subr.mxu0 0.0
  %1931 = vmatpush1.msra.mxu0 0.0
  %1932 = vmatprep.subr.mxu0 0.0
  %1933 = vmatpush1.msra.mxu0 0.0
  %1934 = vmatprep.subr.mxu0 0.0
  %1935 = vmatpush1.msra.mxu0 0.0
  %1936 = vmatprep.subr.mxu0 0.0
  %1937 = vmatpush1.msra.mxu0 %v1905
  %1938 = vmatprep.subr.mxu0 0.0
  %1939 = vmatpush2.msra.mxu0 0.0
  %1940 = vmatprep.subr.mxu0 0.0
  %1941 = vmatpush2.msra.mxu0 0.0
  %1942 = vmatprep.subr.mxu0 0.0
  %1943 = vmatpush2.msra.mxu0 0.0
  %1944 = vmatprep.subr.mxu0 0.0
  %1945 = vmatpush2.msra.mxu0 0.0
  %1946 = vmatprep.subr.mxu0 0.0
  %1947 = vmatpush2.msra.mxu0 0.0
  %1948 = vmatprep.subr.mxu0 0.0
  %1949 = vmatpush2.msra.mxu0 0.0
  %1950 = vmatprep.subr.mxu0 0.0
  %1951 = vmatpush2.msra.mxu0 0.0
  %1952 = vmatprep.subr.mxu0 0.0
  %1953 = vmatpush2.msra.mxu0 0.0
  %1954 = vmatprep.subr.mxu0 0.0
  %1955 = vmatpush2.msra.mxu0 0.0
  %1956 = vmatprep.subr.mxu0 0.0
  %1957 = vmatpush2.msra.mxu0 0.0
  %1958 = vmatprep.subr.mxu0 0.0
  %1959 = vmatpush2.msra.mxu0 0.0
  %1960 = vmatprep.subr.mxu0 0.0
  %1961 = vmatpush2.msra.mxu0 0.0
  %1962 = vmatprep.subr.mxu0 0.0
  %1963 = vmatpush2.msra.mxu0 0.0
  %1964 = vmatprep.subr.mxu0 0.0
  %1965 = vmatpush2.msra.mxu0 0.0
  %1966 = vmatprep.subr.mxu0 0.0
  %1967 = vmatpush2.msra.mxu0 0.0
  %1968 = vmatprep.subr.mxu0 0.0
  %1969 = vmatpush2.msra.mxu0 0.0
  %1970 = vmatprep.mubr.f32.mxu0 0.0
  %1971 = vmatmul.mubr.f32.gmra.mxu0 %v591
  %v1972 = vpop.f32.mrf.mxu0
  %v1973 = vadd.f32 0.0, %v1972
  %v1974 = vpop.f32.mrf.mxu0
  %1975 = vmatprep.mubr.f32.mxu0 0.0
  %1976 = vmatmul.mubr.f32.gmra.mxu0 %v594
  %v1977 = vpop.f32.mrf.mxu0
  %v1978 = vadd.f32 0.0, %v1977
  %v1979 = vpop.f32.mrf.mxu0
  %1980 = vmatprep.mubr.f32.mxu0 0.0
  %1981 = vmatmul.mubr.f32.gmra.mxu0 %v597
  %v1982 = vpop.f32.mrf.mxu0
  %v1983 = vadd.f32 0.0, %v1982
  %v1984 = vpop.f32.mrf.mxu0
  %1985 = vmatprep.mubr.f32.mxu0 0.0
  %1986 = vmatmul.mubr.f32.gmra.mxu0 %v600
  %v1987 = vpop.f32.mrf.mxu0
  %v1988 = vadd.f32 0.0, %v1987
  %v1989 = vpop.f32.mrf.mxu0
  %1990 = vmatprep.mubr.f32.mxu0 0.0
  %1991 = vmatmul.mubr.f32.gmra.mxu0 %v603
  %v1992 = vpop.f32.mrf.mxu0
  %v1993 = vadd.f32 0.0, %v1992
  %v1994 = vpop.f32.mrf.mxu0
  %1995 = vmatprep.mubr.f32.mxu0 0.0
  %1996 = vmatmul.mubr.f32.gmra.mxu0 %v606
  %v1997 = vpop.f32.mrf.mxu0
  %v1998 = vadd.f32 0.0, %v1997
  %v1999 = vpop.f32.mrf.mxu0
  %2000 = vmatprep.mubr.f32.mxu0 0.0
  %2001 = vmatmul.mubr.f32.gmra.mxu0 %v609
  %v2002 = vpop.f32.mrf.mxu0
  %v2003 = vadd.f32 0.0, %v2002
  %v2004 = vpop.f32.mrf.mxu0
  %2005 = vmatprep.mubr.f32.mxu0 0.0
  %2006 = vmatmul.mubr.f32.gmra.mxu0 %v612
  %v2007 = vpop.f32.mrf.mxu0
  %v2008 = vadd.f32 0.0, %v2007
  %v2009 = vpop.f32.mrf.mxu0
  %2010 = vmatprep.mubr.f32.mxu0 0.0
  %2011 = vmatmul.mubr.f32.gmra.mxu0 %v615
  %v2012 = vpop.f32.mrf.mxu0
  %v2013 = vadd.f32 0.0, %v2012
  %v2014 = vpop.f32.mrf.mxu0
  %2015 = vmatprep.mubr.f32.mxu0 0.0
  %2016 = vmatmul.mubr.f32.gmra.mxu0 %v618
  %v2017 = vpop.f32.mrf.mxu0
  %v2018 = vadd.f32 0.0, %v2017
  %v2019 = vpop.f32.mrf.mxu0
  %2020 = vmatprep.mubr.f32.mxu0 0.0
  %2021 = vmatmul.mubr.f32.gmra.mxu0 %v621
  %v2022 = vpop.f32.mrf.mxu0
  %v2023 = vadd.f32 0.0, %v2022
  %v2024 = vpop.f32.mrf.mxu0
  %2025 = vmatprep.mubr.f32.mxu0 0.0
  %2026 = vmatmul.mubr.f32.gmra.mxu0 %v624
  %v2027 = vpop.f32.mrf.mxu0
  %v2028 = vadd.f32 0.0, %v2027
  %v2029 = vpop.f32.mrf.mxu0
  %2030 = vmatprep.mubr.f32.mxu0 0.0
  %2031 = vmatmul.mubr.f32.gmra.mxu0 %v627
  %v2032 = vpop.f32.mrf.mxu0
  %v2033 = vadd.f32 0.0, %v2032
  %v2034 = vpop.f32.mrf.mxu0
  %2035 = vmatprep.mubr.f32.mxu0 0.0
  %2036 = vmatmul.mubr.f32.gmra.mxu0 %v630
  %v2037 = vpop.f32.mrf.mxu0
  %v2038 = vadd.f32 0.0, %v2037
  %v2039 = vpop.f32.mrf.mxu0
  %2040 = vmatprep.mubr.f32.mxu0 0.0
  %2041 = vmatmul.mubr.f32.gmra.mxu0 %v633
  %v2042 = vpop.f32.mrf.mxu0
  %v2043 = vadd.f32 0.0, %v2042
  %v2044 = vpop.f32.mrf.mxu0
  %2045 = vmatprep.mubr.f32.mxu0 0.0
  %2046 = vmatmul.mubr.f32.gmra.mxu0 %v636
  %v2047 = vpop.f32.mrf.mxu0
  %v2048 = vadd.f32 0.0, %v2047
  %v2049 = vpop.f32.mrf.mxu0
  %2050 = vdwg.mxu0
  %2051 = vmatprep.subr.mxu0 0.0
  %2052 = vmatpush1.msra.mxu0 0.0
  %2053 = vmatprep.subr.mxu0 0.0
  %2054 = vmatpush1.msra.mxu0 0.0
  %2055 = vmatprep.subr.mxu0 0.0
  %2056 = vmatpush1.msra.mxu0 0.0
  %2057 = vmatprep.subr.mxu0 0.0
  %2058 = vmatpush1.msra.mxu0 0.0
  %2059 = vmatprep.subr.mxu0 0.0
  %2060 = vmatpush1.msra.mxu0 0.0
  %2061 = vmatprep.subr.mxu0 0.0
  %2062 = vmatpush1.msra.mxu0 0.0
  %2063 = vmatprep.subr.mxu0 0.0
  %2064 = vmatpush1.msra.mxu0 0.0
  %2065 = vmatprep.subr.mxu0 0.0
  %2066 = vmatpush1.msra.mxu0 0.0
  %2067 = vmatprep.subr.mxu0 0.0
  %2068 = vmatpush1.msra.mxu0 0.0
  %2069 = vmatprep.subr.mxu0 0.0
  %2070 = vmatpush1.msra.mxu0 0.0
  %2071 = vmatprep.subr.mxu0 0.0
  %2072 = vmatpush1.msra.mxu0 0.0
  %2073 = vmatprep.subr.mxu0 0.0
  %2074 = vmatpush1.msra.mxu0 0.0
  %2075 = vmatprep.subr.mxu0 0.0
  %2076 = vmatpush1.msra.mxu0 0.0
  %2077 = vmatprep.subr.mxu0 0.0
  %2078 = vmatpush1.msra.mxu0 0.0
  %2079 = vmatprep.subr.mxu0 0.0
  %2080 = vmatpush1.msra.mxu0 0.0
  %2081 = vmatprep.subr.mxu0 0.0
  %2082 = vmatpush1.msra.mxu0 %v1895
  %2083 = vmatprep.subr.mxu0 0.0
  %2084 = vmatpush2.msra.mxu0 0.0
  %2085 = vmatprep.subr.mxu0 0.0
  %2086 = vmatpush2.msra.mxu0 0.0
  %2087 = vmatprep.subr.mxu0 0.0
  %2088 = vmatpush2.msra.mxu0 0.0
  %2089 = vmatprep.subr.mxu0 0.0
  %2090 = vmatpush2.msra.mxu0 0.0
  %2091 = vmatprep.subr.mxu0 0.0
  %2092 = vmatpush2.msra.mxu0 0.0
  %2093 = vmatprep.subr.mxu0 0.0
  %2094 = vmatpush2.msra.mxu0 0.0
  %2095 = vmatprep.subr.mxu0 0.0
  %2096 = vmatpush2.msra.mxu0 0.0
  %2097 = vmatprep.subr.mxu0 0.0
  %2098 = vmatpush2.msra.mxu0 0.0
  %2099 = vmatprep.subr.mxu0 0.0
  %2100 = vmatpush2.msra.mxu0 0.0
  %2101 = vmatprep.subr.mxu0 0.0
  %2102 = vmatpush2.msra.mxu0 0.0
  %2103 = vmatprep.subr.mxu0 0.0
  %2104 = vmatpush2.msra.mxu0 0.0
  %2105 = vmatprep.subr.mxu0 0.0
  %2106 = vmatpush2.msra.mxu0 0.0
  %2107 = vmatprep.subr.mxu0 0.0
  %2108 = vmatpush2.msra.mxu0 0.0
  %2109 = vmatprep.subr.mxu0 0.0
  %2110 = vmatpush2.msra.mxu0 0.0
  %2111 = vmatprep.subr.mxu0 0.0
  %2112 = vmatpush2.msra.mxu0 0.0
  %2113 = vmatprep.subr.mxu0 0.0
  %2114 = vmatpush2.msra.mxu0 0.0
  %2115 = vmatprep.mubr.f32.mxu0 0.0
  %2116 = vmatmul.mubr.f32.gmra.mxu0 %v591
  %v2117 = vpop.f32.mrf.mxu0
  %v2118 = vadd.f32 0.0, %v2117
  %v2119 = vpop.f32.mrf.mxu0
  %2120 = vmatprep.mubr.f32.mxu0 0.0
  %2121 = vmatmul.mubr.f32.gmra.mxu0 %v594
  %v2122 = vpop.f32.mrf.mxu0
  %v2123 = vadd.f32 0.0, %v2122
  %v2124 = vpop.f32.mrf.mxu0
  %2125 = vmatprep.mubr.f32.mxu0 0.0
  %2126 = vmatmul.mubr.f32.gmra.mxu0 %v597
  %v2127 = vpop.f32.mrf.mxu0
  %v2128 = vadd.f32 0.0, %v2127
  %v2129 = vpop.f32.mrf.mxu0
  %2130 = vmatprep.mubr.f32.mxu0 0.0
  %2131 = vmatmul.mubr.f32.gmra.mxu0 %v600
  %v2132 = vpop.f32.mrf.mxu0
  %v2133 = vadd.f32 0.0, %v2132
  %v2134 = vpop.f32.mrf.mxu0
  %2135 = vmatprep.mubr.f32.mxu0 0.0
  %2136 = vmatmul.mubr.f32.gmra.mxu0 %v603
  %v2137 = vpop.f32.mrf.mxu0
  %v2138 = vadd.f32 0.0, %v2137
  %v2139 = vpop.f32.mrf.mxu0
  %2140 = vmatprep.mubr.f32.mxu0 0.0
  %2141 = vmatmul.mubr.f32.gmra.mxu0 %v606
  %v2142 = vpop.f32.mrf.mxu0
  %v2143 = vadd.f32 0.0, %v2142
  %v2144 = vpop.f32.mrf.mxu0
  %2145 = vmatprep.mubr.f32.mxu0 0.0
  %2146 = vmatmul.mubr.f32.gmra.mxu0 %v609
  %v2147 = vpop.f32.mrf.mxu0
  %v2148 = vadd.f32 0.0, %v2147
  %v2149 = vpop.f32.mrf.mxu0
  %2150 = vmatprep.mubr.f32.mxu0 0.0
  %2151 = vmatmul.mubr.f32.gmra.mxu0 %v612
  %v2152 = vpop.f32.mrf.mxu0
  %v2153 = vadd.f32 0.0, %v2152
  %v2154 = vpop.f32.mrf.mxu0
  %2155 = vmatprep.mubr.f32.mxu0 0.0
  %2156 = vmatmul.mubr.f32.gmra.mxu0 %v615
  %v2157 = vpop.f32.mrf.mxu0
  %v2158 = vadd.f32 0.0, %v2157
  %v2159 = vpop.f32.mrf.mxu0
  %2160 = vmatprep.mubr.f32.mxu0 0.0
  %2161 = vmatmul.mubr.f32.gmra.mxu0 %v618
  %v2162 = vpop.f32.mrf.mxu0
  %v2163 = vadd.f32 0.0, %v2162
  %v2164 = vpop.f32.mrf.mxu0
  %2165 = vmatprep.mubr.f32.mxu0 0.0
  %2166 = vmatmul.mubr.f32.gmra.mxu0 %v621
  %v2167 = vpop.f32.mrf.mxu0
  %v2168 = vadd.f32 0.0, %v2167
  %v2169 = vpop.f32.mrf.mxu0
  %2170 = vmatprep.mubr.f32.mxu0 0.0
  %2171 = vmatmul.mubr.f32.gmra.mxu0 %v624
  %v2172 = vpop.f32.mrf.mxu0
  %v2173 = vadd.f32 0.0, %v2172
  %v2174 = vpop.f32.mrf.mxu0
  %2175 = vmatprep.mubr.f32.mxu0 0.0
  %2176 = vmatmul.mubr.f32.gmra.mxu0 %v627
  %v2177 = vpop.f32.mrf.mxu0
  %v2178 = vadd.f32 0.0, %v2177
  %v2179 = vpop.f32.mrf.mxu0
  %2180 = vmatprep.mubr.f32.mxu0 0.0
  %2181 = vmatmul.mubr.f32.gmra.mxu0 %v630
  %v2182 = vpop.f32.mrf.mxu0
  %v2183 = vadd.f32 0.0, %v2182
  %v2184 = vpop.f32.mrf.mxu0
  %2185 = vmatprep.mubr.f32.mxu0 0.0
  %2186 = vmatmul.mubr.f32.gmra.mxu0 %v633
  %v2187 = vpop.f32.mrf.mxu0
  %v2188 = vadd.f32 0.0, %v2187
  %v2189 = vpop.f32.mrf.mxu0
  %2190 = vmatprep.mubr.f32.mxu0 0.0
  %2191 = vmatmul.mubr.f32.gmra.mxu0 %v636
  %v2192 = vpop.f32.mrf.mxu0
  %v2193 = vadd.f32 0.0, %v2192
  %v2194 = vpop.f32.mrf.mxu0
  %2195 = vdwg.mxu0
  %v2196 = vmul.f32 %v2118, %v261
  %v2197 = vmul.f32 %v2123, %v262
  %v2198 = vmul.f32 %v2128, %v263
  %v2199 = vmul.f32 %v2133, %v264
  %v2200 = vmul.f32 %v2138, %v265
  %v2201 = vmul.f32 %v2143, %v266
  %v2202 = vmul.f32 %v2148, %v267
  %v2203 = vmul.f32 %v2153, %v268
  %v2204 = vmul.f32 %v2158, %v269
  %v2205 = vmul.f32 %v2163, %v270
  %v2206 = vmul.f32 %v2168, %v271
  %v2207 = vmul.f32 %v2173, %v272
  %v2208 = vmul.f32 %v2178, %v273
  %v2209 = vmul.f32 %v2183, %v274
  %v2210 = vmul.f32 %v2188, %v275
  %v2211 = vmul.f32 %v2193, %v276
  %v2213 = vsel %vm101, %v2196, 0
  %v2216 = vsel %vm101, %v2197, 0
  %v2219 = vsel %vm101, %v2198, 0
  %v2222 = vsel %vm101, %v2199, 0
  %v2225 = vsel %vm101, %v2200, 0
  %v2228 = vsel %vm101, %v2201, 0
  %v2231 = vsel %vm101, %v2202, 0
  %v2234 = vsel %vm101, %v2203, 0
  %v2237 = vsel %vm101, %v2204, 0
  %v2240 = vsel %vm101, %v2205, 0
  %v2243 = vsel %vm101, %v2206, 0
  %v2246 = vsel %vm101, %v2207, 0
  %v2249 = vsel %vm101, %v2208, 0
  %v2252 = vsel %vm101, %v2209, 0
  %v2255 = vsel %vm101, %v2210, 0
  %v2258 = vsel %vm101, %v2211, 0
  %2260 = vmatprep.subr.mxu0 0.0
  %2261 = vmatpush1.msra.mxu0 0.0
  %2262 = vmatprep.subr.mxu0 0.0
  %2263 = vmatpush1.msra.mxu0 0.0
  %2264 = vmatprep.subr.mxu0 0.0
  %2265 = vmatpush1.msra.mxu0 0.0
  %2266 = vmatprep.subr.mxu0 0.0
  %2267 = vmatpush1.msra.mxu0 0.0
  %2268 = vmatprep.subr.mxu0 0.0
  %2269 = vmatpush1.msra.mxu0 0.0
  %2270 = vmatprep.subr.mxu0 0.0
  %2271 = vmatpush1.msra.mxu0 0.0
  %2272 = vmatprep.subr.mxu0 0.0
  %2273 = vmatpush1.msra.mxu0 0.0
  %2274 = vmatprep.subr.mxu0 0.0
  %2275 = vmatpush1.msra.mxu0 0.0
  %2276 = vmatprep.subr.mxu0 0.0
  %2277 = vmatpush1.msra.mxu0 0.0
  %2278 = vmatprep.subr.mxu0 0.0
  %2279 = vmatpush1.msra.mxu0 0.0
  %2280 = vmatprep.subr.mxu0 0.0
  %2281 = vmatpush1.msra.mxu0 0.0
  %2282 = vmatprep.subr.mxu0 0.0
  %2283 = vmatpush1.msra.mxu0 0.0
  %2284 = vmatprep.subr.mxu0 0.0
  %2285 = vmatpush1.msra.mxu0 %v302
  %2286 = vmatprep.subr.mxu0 0.0
  %2287 = vmatpush1.msra.mxu0 %v301
  %2288 = vmatprep.subr.mxu0 0.0
  %2289 = vmatpush1.msra.mxu0 %v300
  %2290 = vmatprep.subr.mxu0 0.0
  %2291 = vmatpush1.msra.mxu0 %v299
  %2292 = vmatprep.subr.mxu0 0.0
  %2293 = vmatpush2.msra.mxu0 0.0
  %2294 = vmatprep.subr.mxu0 0.0
  %2295 = vmatpush2.msra.mxu0 0.0
  %2296 = vmatprep.subr.mxu0 0.0
  %2297 = vmatpush2.msra.mxu0 0.0
  %2298 = vmatprep.subr.mxu0 0.0
  %2299 = vmatpush2.msra.mxu0 0.0
  %2300 = vmatprep.subr.mxu0 0.0
  %2301 = vmatpush2.msra.mxu0 0.0
  %2302 = vmatprep.subr.mxu0 0.0
  %2303 = vmatpush2.msra.mxu0 0.0
  %2304 = vmatprep.subr.mxu0 0.0
  %2305 = vmatpush2.msra.mxu0 0.0
  %2306 = vmatprep.subr.mxu0 0.0
  %2307 = vmatpush2.msra.mxu0 0.0
  %2308 = vmatprep.subr.mxu0 0.0
  %2309 = vmatpush2.msra.mxu0 0.0
  %2310 = vmatprep.subr.mxu0 0.0
  %2311 = vmatpush2.msra.mxu0 0.0
  %2312 = vmatprep.subr.mxu0 0.0
  %2313 = vmatpush2.msra.mxu0 0.0
  %2314 = vmatprep.subr.mxu0 0.0
  %2315 = vmatpush2.msra.mxu0 0.0
  %2316 = vmatprep.subr.mxu0 0.0
  %2317 = vmatpush2.msra.mxu0 0.0
  %2318 = vmatprep.subr.mxu0 0.0
  %2319 = vmatpush2.msra.mxu0 0.0
  %2320 = vmatprep.subr.mxu0 0.0
  %2321 = vmatpush2.msra.mxu0 0.0
  %2322 = vmatprep.subr.mxu0 0.0
  %2323 = vmatpush2.msra.mxu0 0.0
  %2324 = vmatprep.mubr.f32.mxu0 0.0
  %2325 = vmatmul.mubr.f32.gmra.mxu0 %v2213
  %v2326 = vpop.f32.mrf.mxu0
  %v2327 = vadd.f32 0.0, %v2326
  %v2328 = vpop.f32.mrf.mxu0
  %2329 = vmatprep.mubr.f32.mxu0 0.0
  %2330 = vmatmul.mubr.f32.gmra.mxu0 %v2216
  %v2331 = vpop.f32.mrf.mxu0
  %v2332 = vadd.f32 0.0, %v2331
  %v2333 = vpop.f32.mrf.mxu0
  %2334 = vmatprep.mubr.f32.mxu0 0.0
  %2335 = vmatmul.mubr.f32.gmra.mxu0 %v2219
  %v2336 = vpop.f32.mrf.mxu0
  %v2337 = vadd.f32 0.0, %v2336
  %v2338 = vpop.f32.mrf.mxu0
  %2339 = vmatprep.mubr.f32.mxu0 0.0
  %2340 = vmatmul.mubr.f32.gmra.mxu0 %v2222
  %v2341 = vpop.f32.mrf.mxu0
  %v2342 = vadd.f32 0.0, %v2341
  %v2343 = vpop.f32.mrf.mxu0
  %2344 = vmatprep.mubr.f32.mxu0 0.0
  %2345 = vmatmul.mubr.f32.gmra.mxu0 %v2225
  %v2346 = vpop.f32.mrf.mxu0
  %v2347 = vadd.f32 0.0, %v2346
  %v2348 = vpop.f32.mrf.mxu0
  %2349 = vmatprep.mubr.f32.mxu0 0.0
  %2350 = vmatmul.mubr.f32.gmra.mxu0 %v2228
  %v2351 = vpop.f32.mrf.mxu0
  %v2352 = vadd.f32 0.0, %v2351
  %v2353 = vpop.f32.mrf.mxu0
  %2354 = vmatprep.mubr.f32.mxu0 0.0
  %2355 = vmatmul.mubr.f32.gmra.mxu0 %v2231
  %v2356 = vpop.f32.mrf.mxu0
  %v2357 = vadd.f32 0.0, %v2356
  %v2358 = vpop.f32.mrf.mxu0
  %2359 = vmatprep.mubr.f32.mxu0 0.0
  %2360 = vmatmul.mubr.f32.gmra.mxu0 %v2234
  %v2361 = vpop.f32.mrf.mxu0
  %v2362 = vadd.f32 0.0, %v2361
  %v2363 = vpop.f32.mrf.mxu0
  %2364 = vmatprep.mubr.f32.mxu0 0.0
  %2365 = vmatmul.mubr.f32.gmra.mxu0 %v2237
  %v2366 = vpop.f32.mrf.mxu0
  %v2367 = vadd.f32 0.0, %v2366
  %v2368 = vpop.f32.mrf.mxu0
  %2369 = vmatprep.mubr.f32.mxu0 0.0
  %2370 = vmatmul.mubr.f32.gmra.mxu0 %v2240
  %v2371 = vpop.f32.mrf.mxu0
  %v2372 = vadd.f32 0.0, %v2371
  %v2373 = vpop.f32.mrf.mxu0
  %2374 = vmatprep.mubr.f32.mxu0 0.0
  %2375 = vmatmul.mubr.f32.gmra.mxu0 %v2243
  %v2376 = vpop.f32.mrf.mxu0
  %v2377 = vadd.f32 0.0, %v2376
  %v2378 = vpop.f32.mrf.mxu0
  %2379 = vmatprep.mubr.f32.mxu0 0.0
  %2380 = vmatmul.mubr.f32.gmra.mxu0 %v2246
  %v2381 = vpop.f32.mrf.mxu0
  %v2382 = vadd.f32 0.0, %v2381
  %v2383 = vpop.f32.mrf.mxu0
  %2384 = vmatprep.mubr.f32.mxu0 0.0
  %2385 = vmatmul.mubr.f32.gmra.mxu0 %v2249
  %v2386 = vpop.f32.mrf.mxu0
  %v2387 = vadd.f32 0.0, %v2386
  %v2388 = vpop.f32.mrf.mxu0
  %2389 = vmatprep.mubr.f32.mxu0 0.0
  %2390 = vmatmul.mubr.f32.gmra.mxu0 %v2252
  %v2391 = vpop.f32.mrf.mxu0
  %v2392 = vadd.f32 0.0, %v2391
  %v2393 = vpop.f32.mrf.mxu0
  %2394 = vmatprep.mubr.f32.mxu0 0.0
  %2395 = vmatmul.mubr.f32.gmra.mxu0 %v2255
  %v2396 = vpop.f32.mrf.mxu0
  %v2397 = vadd.f32 0.0, %v2396
  %v2398 = vpop.f32.mrf.mxu0
  %2399 = vmatprep.mubr.f32.mxu0 0.0
  %2400 = vmatmul.mubr.f32.gmra.mxu0 %v2258
  %v2401 = vpop.f32.mrf.mxu0
  %v2402 = vadd.f32 0.0, %v2401
  %v2403 = vpop.f32.mrf.mxu0
  %2404 = vdwg.mxu0
  %s2405 = scalar_lea.vmem %s8, 128
  %v2406 = vld [vmem:[%s2405] sm:$0xff]
  %v2407 = vld [vmem:[%s2405 + $0x8] sm:$0xff]
  %v2408 = vld [vmem:[%s2405 + $0x10] sm:$0xff]
  %v2409 = vld [vmem:[%s2405 + $0x18] sm:$0xff]
  %v2410 = vld [vmem:[%s2405 + $0x20] sm:$0xff]
  %v2411 = vld [vmem:[%s2405 + $0x28] sm:$0xff]
  %v2412 = vld [vmem:[%s2405 + $0x30] sm:$0xff]
  %v2413 = vld [vmem:[%s2405 + $0x38] sm:$0xff]
  %v2414 = vld [vmem:[%s2405 + $0x40] sm:$0xff]
  %v2415 = vld [vmem:[%s2405 + $0x48] sm:$0xff]
  %v2416 = vld [vmem:[%s2405 + $0x50] sm:$0xff]
  %v2417 = vld [vmem:[%s2405 + $0x58] sm:$0xff]
  %v2418 = vld [vmem:[%s2405 + $0x60] sm:$0xff]
  %v2419 = vld [vmem:[%s2405 + $0x68] sm:$0xff]
  %v2420 = vld [vmem:[%s2405 + $0x70] sm:$0xff]
  %v2421 = vld [vmem:[%s2405 + $0x78] sm:$0xff]
  %v2422 = vmul.f32 %v1973, %v2406
  %v2423 = vmul.f32 %v1978, %v2407
  %v2424 = vmul.f32 %v1983, %v2408
  %v2425 = vmul.f32 %v1988, %v2409
  %v2426 = vmul.f32 %v1993, %v2410
  %v2427 = vmul.f32 %v1998, %v2411
  %v2428 = vmul.f32 %v2003, %v2412
  %v2429 = vmul.f32 %v2008, %v2413
  %v2430 = vmul.f32 %v2013, %v2414
  %v2431 = vmul.f32 %v2018, %v2415
  %v2432 = vmul.f32 %v2023, %v2416
  %v2433 = vmul.f32 %v2028, %v2417
  %v2434 = vmul.f32 %v2033, %v2418
  %v2435 = vmul.f32 %v2038, %v2419
  %v2436 = vmul.f32 %v2043, %v2420
  %v2437 = vmul.f32 %v2048, %v2421
  %v2438 = vmul.f32 %v2422, 1.442695
  %v2439 = vpow.pop %v2438
  %v2440 = vmul.f32 %v2423, 1.442695
  %v2441 = vpow.pop %v2440
  %v2442 = vmul.f32 %v2424, 1.442695
  %v2443 = vpow.pop %v2442
  %v2444 = vmul.f32 %v2425, 1.442695
  %v2445 = vpow.pop %v2444
  %v2446 = vmul.f32 %v2426, 1.442695
  %v2447 = vpow.pop %v2446
  %v2448 = vmul.f32 %v2427, 1.442695
  %v2449 = vpow.pop %v2448
  %v2450 = vmul.f32 %v2428, 1.442695
  %v2451 = vpow.pop %v2450
  %v2452 = vmul.f32 %v2429, 1.442695
  %v2453 = vpow.pop %v2452
  %v2454 = vmul.f32 %v2430, 1.442695
  %v2455 = vpow.pop %v2454
  %v2456 = vmul.f32 %v2431, 1.442695
  %v2457 = vpow.pop %v2456
  %v2458 = vmul.f32 %v2432, 1.442695
  %v2459 = vpow.pop %v2458
  %v2460 = vmul.f32 %v2433, 1.442695
  %v2461 = vpow.pop %v2460
  %v2462 = vmul.f32 %v2434, 1.442695
  %v2463 = vpow.pop %v2462
  %v2464 = vmul.f32 %v2435, 1.442695
  %v2465 = vpow.pop %v2464
  %v2466 = vmul.f32 %v2436, 1.442695
  %v2467 = vpow.pop %v2466
  %v2468 = vmul.f32 %v2437, 1.442695
  %v2469 = vpow.pop %v2468
  %2470 = vst.msk [vmem:[#allocation2] sm:$0xff] %vm458, %v2439
  %2471 = vst.msk [vmem:[#allocation2 + $0x8] sm:$0xff] %vm458, %v2441
  %2472 = vst.msk [vmem:[#allocation2 + $0x10] sm:$0xff] %vm458, %v2443
  %2473 = vst.msk [vmem:[#allocation2 + $0x18] sm:$0xff] %vm458, %v2445
  %2474 = vst.msk [vmem:[#allocation2 + $0x20] sm:$0xff] %vm458, %v2447
  %2475 = vst.msk [vmem:[#allocation2 + $0x28] sm:$0xff] %vm458, %v2449
  %2476 = vst.msk [vmem:[#allocation2 + $0x30] sm:$0xff] %vm458, %v2451
  %2477 = vst.msk [vmem:[#allocation2 + $0x38] sm:$0xff] %vm458, %v2453
  %2478 = vst.msk [vmem:[#allocation2 + $0x40] sm:$0xff] %vm458, %v2455
  %2479 = vst.msk [vmem:[#allocation2 + $0x48] sm:$0xff] %vm458, %v2457
  %2480 = vst.msk [vmem:[#allocation2 + $0x50] sm:$0xff] %vm458, %v2459
  %2481 = vst.msk [vmem:[#allocation2 + $0x58] sm:$0xff] %vm458, %v2461
  %2482 = vst.msk [vmem:[#allocation2 + $0x60] sm:$0xff] %vm458, %v2463
  %2483 = vst.msk [vmem:[#allocation2 + $0x68] sm:$0xff] %vm458, %v2465
  %2484 = vst.msk [vmem:[#allocation2 + $0x70] sm:$0xff] %vm458, %v2467
  %2485 = vst.msk [vmem:[#allocation2 + $0x78] sm:$0xff] %vm458, %v2469
  %2502 = vrot.lane.b32.xlu0 %v2327, 64
  %v2503 = vpop.permute.xlu0 %2502
  %2504 = vrot.lane.b32.xlu0 %v2332, 64
  %v2505 = vpop.permute.xlu0 %2504
  %2506 = vrot.lane.b32.xlu0 %v2337, 64
  %v2507 = vpop.permute.xlu0 %2506
  %2508 = vrot.lane.b32.xlu0 %v2342, 64
  %v2509 = vpop.permute.xlu0 %2508
  %2510 = vrot.lane.b32.xlu0 %v2347, 64
  %v2511 = vpop.permute.xlu0 %2510
  %2512 = vrot.lane.b32.xlu0 %v2352, 64
  %v2513 = vpop.permute.xlu0 %2512
  %2514 = vrot.lane.b32.xlu0 %v2357, 64
  %v2515 = vpop.permute.xlu0 %2514
  %2516 = vrot.lane.b32.xlu0 %v2362, 64
  %v2517 = vpop.permute.xlu0 %2516
  %2518 = vrot.lane.b32.xlu0 %v2367, 64
  %v2519 = vpop.permute.xlu0 %2518
  %2520 = vrot.lane.b32.xlu0 %v2372, 64
  %v2521 = vpop.permute.xlu0 %2520
  %2522 = vrot.lane.b32.xlu0 %v2377, 64
  %v2523 = vpop.permute.xlu0 %2522
  %2524 = vrot.lane.b32.xlu0 %v2382, 64
  %v2525 = vpop.permute.xlu0 %2524
  %2526 = vrot.lane.b32.xlu0 %v2387, 64
  %v2527 = vpop.permute.xlu0 %2526
  %2528 = vrot.lane.b32.xlu0 %v2392, 64
  %v2529 = vpop.permute.xlu0 %2528
  %2530 = vrot.lane.b32.xlu0 %v2397, 64
  %v2531 = vpop.permute.xlu0 %2530
  %2532 = vrot.lane.b32.xlu0 %v2402, 64
  %v2533 = vpop.permute.xlu0 %2532
  %v2550 = vmul.f32 %v1973, %v2503
  %v2551 = vmul.f32 %v1978, %v2505
  %v2552 = vmul.f32 %v1983, %v2507
  %v2553 = vmul.f32 %v1988, %v2509
  %v2554 = vmul.f32 %v1993, %v2511
  %v2555 = vmul.f32 %v1998, %v2513
  %v2556 = vmul.f32 %v2003, %v2515
  %v2557 = vmul.f32 %v2008, %v2517
  %v2558 = vmul.f32 %v2013, %v2519
  %v2559 = vmul.f32 %v2018, %v2521
  %v2560 = vmul.f32 %v2023, %v2523
  %v2561 = vmul.f32 %v2028, %v2525
  %v2562 = vmul.f32 %v2033, %v2527
  %v2563 = vmul.f32 %v2038, %v2529
  %v2564 = vmul.f32 %v2043, %v2531
  %v2565 = vmul.f32 %v2048, %v2533
  %2582 = vrot.lane.b32.xlu0 %v2550, 64
  %v2583 = vpop.permute.xlu0 %2582
  %2584 = vrot.lane.b32.xlu0 %v2551, 64
  %v2585 = vpop.permute.xlu0 %2584
  %2586 = vrot.lane.b32.xlu0 %v2552, 64
  %v2587 = vpop.permute.xlu0 %2586
  %2588 = vrot.lane.b32.xlu0 %v2553, 64
  %v2589 = vpop.permute.xlu0 %2588
  %2590 = vrot.lane.b32.xlu0 %v2554, 64
  %v2591 = vpop.permute.xlu0 %2590
  %2592 = vrot.lane.b32.xlu0 %v2555, 64
  %v2593 = vpop.permute.xlu0 %2592
  %2594 = vrot.lane.b32.xlu0 %v2556, 64
  %v2595 = vpop.permute.xlu0 %2594
  %2596 = vrot.lane.b32.xlu0 %v2557, 64
  %v2597 = vpop.permute.xlu0 %2596
  %2598 = vrot.lane.b32.xlu0 %v2558, 64
  %v2599 = vpop.permute.xlu0 %2598
  %2600 = vrot.lane.b32.xlu0 %v2559, 64
  %v2601 = vpop.permute.xlu0 %2600
  %2602 = vrot.lane.b32.xlu0 %v2560, 64
  %v2603 = vpop.permute.xlu0 %2602
  %2604 = vrot.lane.b32.xlu0 %v2561, 64
  %v2605 = vpop.permute.xlu0 %2604
  %2606 = vrot.lane.b32.xlu0 %v2562, 64
  %v2607 = vpop.permute.xlu0 %2606
  %2608 = vrot.lane.b32.xlu0 %v2563, 64
  %v2609 = vpop.permute.xlu0 %2608
  %2610 = vrot.lane.b32.xlu0 %v2564, 64
  %v2611 = vpop.permute.xlu0 %2610
  %2612 = vrot.lane.b32.xlu0 %v2565, 64
  %v2613 = vpop.permute.xlu0 %2612
  %2630 = vst.msk [vmem:[#allocation3] sm:$0xff] %vm458, %v2583
  %2631 = vst.msk [vmem:[#allocation3 + $0x8] sm:$0xff] %vm458, %v2585
  %2632 = vst.msk [vmem:[#allocation3 + $0x10] sm:$0xff] %vm458, %v2587
  %2633 = vst.msk [vmem:[#allocation3 + $0x18] sm:$0xff] %vm458, %v2589
  %2634 = vst.msk [vmem:[#allocation3 + $0x20] sm:$0xff] %vm458, %v2591
  %2635 = vst.msk [vmem:[#allocation3 + $0x28] sm:$0xff] %vm458, %v2593
  %2636 = vst.msk [vmem:[#allocation3 + $0x30] sm:$0xff] %vm458, %v2595
  %2637 = vst.msk [vmem:[#allocation3 + $0x38] sm:$0xff] %vm458, %v2597
  %2638 = vst.msk [vmem:[#allocation3 + $0x40] sm:$0xff] %vm458, %v2599
  %2639 = vst.msk [vmem:[#allocation3 + $0x48] sm:$0xff] %vm458, %v2601
  %2640 = vst.msk [vmem:[#allocation3 + $0x50] sm:$0xff] %vm458, %v2603
  %2641 = vst.msk [vmem:[#allocation3 + $0x58] sm:$0xff] %vm458, %v2605
  %2642 = vst.msk [vmem:[#allocation3 + $0x60] sm:$0xff] %vm458, %v2607
  %2643 = vst.msk [vmem:[#allocation3 + $0x68] sm:$0xff] %vm458, %v2609
  %2644 = vst.msk [vmem:[#allocation3 + $0x70] sm:$0xff] %vm458, %v2611
  %2645 = vst.msk [vmem:[#allocation3 + $0x78] sm:$0xff] %vm458, %v2613
  %v2646 = vld [vmem:[#allocation2] sm:$0xff]
  %v2647 = vld [vmem:[#allocation2 + $0x8] sm:$0xff]
  %v2648 = vmul.f32 %v2646, 0.0
  %v2649 = vmul.f32 %v2647, 0.0
  %v2650 = vld [vmem:[#allocation3] sm:$0xff]
  %v2651 = vld [vmem:[#allocation3 + $0x8] sm:$0xff]
  %v2652 = vadd.f32 %v2648, %v2650
  %v2653 = vadd.f32 %v2649, %v2651
  %v2654 = vld [vmem:[#allocation2 + $0x10] sm:$0xff]
  %v2655 = vld [vmem:[#allocation2 + $0x18] sm:$0xff]
  %v2656 = vmul.f32 %v2654, %v2652
  %v2657 = vmul.f32 %v2655, %v2653
  %v2658 = vld [vmem:[#allocation3 + $0x10] sm:$0xff]
  %v2659 = vld [vmem:[#allocation3 + $0x18] sm:$0xff]
  %v2660 = vadd.f32 %v2656, %v2658
  %v2661 = vadd.f32 %v2657, %v2659
  %v2662 = vld [vmem:[#allocation2 + $0x20] sm:$0xff]
  %v2663 = vld [vmem:[#allocation2 + $0x28] sm:$0xff]
  %v2664 = vmul.f32 %v2662, %v2660
  %v2665 = vmul.f32 %v2663, %v2661
  %v2666 = vld [vmem:[#allocation3 + $0x20] sm:$0xff]
  %v2667 = vld [vmem:[#allocation3 + $0x28] sm:$0xff]
  %v2668 = vadd.f32 %v2664, %v2666
  %v2669 = vadd.f32 %v2665, %v2667
  %v2670 = vld [vmem:[#allocation2 + $0x30] sm:$0xff]
  %v2671 = vld [vmem:[#allocation2 + $0x38] sm:$0xff]
  %v2672 = vmul.f32 %v2670, %v2668
  %v2673 = vmul.f32 %v2671, %v2669
  %v2674 = vld [vmem:[#allocation3 + $0x30] sm:$0xff]
  %v2675 = vld [vmem:[#allocation3 + $0x38] sm:$0xff]
  %v2676 = vadd.f32 %v2672, %v2674
  %v2677 = vadd.f32 %v2673, %v2675
  %v2678 = vld [vmem:[#allocation2 + $0x40] sm:$0xff]
  %v2679 = vld [vmem:[#allocation2 + $0x48] sm:$0xff]
  %v2680 = vmul.f32 %v2678, %v2676
  %v2681 = vmul.f32 %v2679, %v2677
  %v2682 = vld [vmem:[#allocation3 + $0x40] sm:$0xff]
  %v2683 = vld [vmem:[#allocation3 + $0x48] sm:$0xff]
  %v2684 = vadd.f32 %v2680, %v2682
  %v2685 = vadd.f32 %v2681, %v2683
  %v2686 = vld [vmem:[#allocation2 + $0x50] sm:$0xff]
  %v2687 = vld [vmem:[#allocation2 + $0x58] sm:$0xff]
  %v2688 = vmul.f32 %v2686, %v2684
  %v2689 = vmul.f32 %v2687, %v2685
  %v2690 = vld [vmem:[#allocation3 + $0x50] sm:$0xff]
  %v2691 = vld [vmem:[#allocation3 + $0x58] sm:$0xff]
  %v2692 = vadd.f32 %v2688, %v2690
  %v2693 = vadd.f32 %v2689, %v2691
  %v2694 = vld [vmem:[#allocation2 + $0x60] sm:$0xff]
  %v2695 = vld [vmem:[#allocation2 + $0x68] sm:$0xff]
  %v2696 = vmul.f32 %v2694, %v2692
  %v2697 = vmul.f32 %v2695, %v2693
  %v2698 = vld [vmem:[#allocation3 + $0x60] sm:$0xff]
  %v2699 = vld [vmem:[#allocation3 + $0x68] sm:$0xff]
  %v2700 = vadd.f32 %v2696, %v2698
  %v2701 = vadd.f32 %v2697, %v2699
  %v2702 = vld [vmem:[#allocation2 + $0x70] sm:$0xff]
  %v2703 = vld [vmem:[#allocation2 + $0x78] sm:$0xff]
  %v2704 = vmul.f32 %v2702, %v2700
  %v2705 = vmul.f32 %v2703, %v2701
  %v2706 = vld [vmem:[#allocation3 + $0x70] sm:$0xff]
  %v2707 = vld [vmem:[#allocation3 + $0x78] sm:$0xff]
  %v2708 = vadd.f32 %v2704, %v2706
  %v2709 = vadd.f32 %v2705, %v2707
  %v2710 = vmul.f32 %v2652, %v2503
  %v2711 = vmul.f32 %v2653, %v2505
  %v2712 = vmul.f32 %v2660, %v2507
  %v2713 = vmul.f32 %v2661, %v2509
  %v2714 = vmul.f32 %v2668, %v2511
  %v2715 = vmul.f32 %v2669, %v2513
  %v2716 = vmul.f32 %v2676, %v2515
  %v2717 = vmul.f32 %v2677, %v2517
  %v2718 = vmul.f32 %v2684, %v2519
  %v2719 = vmul.f32 %v2685, %v2521
  %v2720 = vmul.f32 %v2692, %v2523
  %v2721 = vmul.f32 %v2693, %v2525
  %v2722 = vmul.f32 %v2700, %v2527
  %v2723 = vmul.f32 %v2701, %v2529
  %v2724 = vmul.f32 %v2708, %v2531
  %v2725 = vmul.f32 %v2709, %v2533
  %v2726 = vlaneseq
  %v2727 = vshrl.u32 %v2726, 7
  %v2728 = vsub.s32 7, %v2727
  %v2729 = vrot.slane %v1621, %v2728
  %v2730 = vmul.f32 %v2729, %v1736
  %2731 = vmatprep.subr.mxu0 0.0
  %2732 = vmatpush1.msra.mxu0 %v2725
  %2733 = vmatprep.subr.mxu0 0.0
  %2734 = vmatpush1.msra.mxu0 %v2724
  %2735 = vmatprep.subr.mxu0 0.0
  %2736 = vmatpush1.msra.mxu0 %v2723
  %2737 = vmatprep.subr.mxu0 0.0
  %2738 = vmatpush1.msra.mxu0 %v2722
  %2739 = vmatprep.subr.mxu0 0.0
  %2740 = vmatpush1.msra.mxu0 %v2721
  %2741 = vmatprep.subr.mxu0 0.0
  %2742 = vmatpush1.msra.mxu0 %v2720
  %2743 = vmatprep.subr.mxu0 0.0
  %2744 = vmatpush1.msra.mxu0 %v2719
  %2745 = vmatprep.subr.mxu0 0.0
  %2746 = vmatpush1.msra.mxu0 %v2718
  %2747 = vmatprep.subr.mxu0 0.0
  %2748 = vmatpush1.msra.mxu0 %v2717
  %2749 = vmatprep.subr.mxu0 0.0
  %2750 = vmatpush1.msra.mxu0 %v2716
  %2751 = vmatprep.subr.mxu0 0.0
  %2752 = vmatpush1.msra.mxu0 %v2715
  %2753 = vmatprep.subr.mxu0 0.0
  %2754 = vmatpush1.msra.mxu0 %v2714
  %2755 = vmatprep.subr.mxu0 0.0
  %2756 = vmatpush1.msra.mxu0 %v2713
  %2757 = vmatprep.subr.mxu0 0.0
  %2758 = vmatpush1.msra.mxu0 %v2712
  %2759 = vmatprep.subr.mxu0 0.0
  %2760 = vmatpush1.msra.mxu0 %v2711
  %2761 = vmatprep.subr.mxu0 0.0
  %2762 = vmatpush1.msra.mxu0 %v2710
  %2763 = vmatprep.subr.mxu0 0.0
  %2764 = vmatpush2.msra.mxu0 0.0
  %2765 = vmatprep.subr.mxu0 0.0
  %2766 = vmatpush2.msra.mxu0 0.0
  %2767 = vmatprep.subr.mxu0 0.0
  %2768 = vmatpush2.msra.mxu0 0.0
  %2769 = vmatprep.subr.mxu0 0.0
  %2770 = vmatpush2.msra.mxu0 0.0
  %2771 = vmatprep.subr.mxu0 0.0
  %2772 = vmatpush2.msra.mxu0 0.0
  %2773 = vmatprep.subr.mxu0 0.0
  %2774 = vmatpush2.msra.mxu0 0.0
  %2775 = vmatprep.subr.mxu0 0.0
  %2776 = vmatpush2.msra.mxu0 0.0
  %2777 = vmatprep.subr.mxu0 0.0
  %2778 = vmatpush2.msra.mxu0 0.0
  %2779 = vmatprep.subr.mxu0 0.0
  %2780 = vmatpush2.msra.mxu0 0.0
  %2781 = vmatprep.subr.mxu0 0.0
  %2782 = vmatpush2.msra.mxu0 0.0
  %2783 = vmatprep.subr.mxu0 0.0
  %2784 = vmatpush2.msra.mxu0 0.0
  %2785 = vmatprep.subr.mxu0 0.0
  %2786 = vmatpush2.msra.mxu0 0.0
  %2787 = vmatprep.subr.mxu0 0.0
  %2788 = vmatpush2.msra.mxu0 0.0
  %2789 = vmatprep.subr.mxu0 0.0
  %2790 = vmatpush2.msra.mxu0 0.0
  %2791 = vmatprep.subr.mxu0 0.0
  %2792 = vmatpush2.msra.mxu0 0.0
  %2793 = vmatprep.subr.mxu0 0.0
  %2794 = vmatpush2.msra.mxu0 0.0
  %2795 = vmatprep.mubr.f32.mxu0 0.0
  %2796 = vmatmul.mubr.f32.gmra.mxu0 %v227
  %v2797 = vpop.f32.mrf.mxu0
  %v2798 = vadd.f32 %v2730, %v2797
  %v2799 = vpop.f32.mrf.mxu0
  %2800 = vdwg.mxu0
  %v2801 = vxor.u32 %v1691, 2147483648
  %v2802 = vmul.f32 %v2801, 1.442695
  %v2803 = vpow.pop %v2802
  %v2804 = vadd.f32 %v2803, 1.0
  %v2805 = vrcp.pop %v2804
  %v2806 = vmul.f32 1.0, %v2805
  %v2807 = vmul.f32 %v1691, %v2806
  %2809 = vrot.lane.b32.xlu0 %v2807, 64
  %v2810 = vpop.permute.xlu0 %2809
  %v2812 = vmul.f32 %v2798, %v2810
  %v2813 = vpack.c.bf16 %v2812, %v2812
  %s2814 = scalar_lea.vmem %s6, 32
  %v2815 = vld [vmem:[%s2814] sm:$0xf]
  %v2816 = vld [vmem:[%s2814 + $0x4] sm:$0xf]
  %v2817 = vld [vmem:[%s2814 + $0x8] sm:$0xf]
  %v2818 = vld [vmem:[%s2814 + $0xc] sm:$0xf]
  %v2819 = vld [vmem:[%s2814 + $0x10] sm:$0xf]
  %v2820 = vld [vmem:[%s2814 + $0x14] sm:$0xf]
  %v2821 = vld [vmem:[%s2814 + $0x18] sm:$0xf]
  %v2822 = vld [vmem:[%s2814 + $0x1c] sm:$0xf]
  %v2831 = vunpack.c.l.b16 %v2815
  %v2832 = vunpack.c.l.b16 %v2816
  %v2833 = vunpack.c.l.b16 %v2817
  %v2834 = vunpack.c.l.b16 %v2818
  %v2835 = vunpack.c.l.b16 %v2819
  %v2836 = vunpack.c.l.b16 %v2820
  %v2837 = vunpack.c.l.b16 %v2821
  %v2838 = vunpack.c.l.b16 %v2822
  %v2839 = vpack.c.b16 %v2832, %v2831
  %v2840 = vpack.c.b16 %v2834, %v2833
  %v2841 = vpack.c.b16 %v2836, %v2835
  %v2842 = vpack.c.b16 %v2838, %v2837
  %v2848 = vsel %vm458, %v2813, 0
  %2850 = vmatprep.subr.bf16.mxu0 0
  %2851 = vmatpush1.bf16.msra.mxu0 0
  %2852 = vmatprep.subr.bf16.mxu0 0
  %2853 = vmatpush1.bf16.msra.mxu0 0
  %2854 = vmatprep.subr.bf16.mxu0 0
  %2855 = vmatpush1.bf16.msra.mxu0 0
  %2856 = vmatprep.subr.bf16.mxu0 0
  %2857 = vmatpush1.bf16.msra.mxu0 0
  %2858 = vmatprep.subr.bf16.mxu0 0
  %2859 = vmatpush1.bf16.msra.mxu0 %v2842
  %2860 = vmatprep.subr.bf16.mxu0 0
  %2861 = vmatpush1.bf16.msra.mxu0 %v2841
  %2862 = vmatprep.subr.bf16.mxu0 0
  %2863 = vmatpush1.bf16.msra.mxu0 %v2840
  %2864 = vmatprep.subr.bf16.mxu0 0
  %2865 = vmatpush1.bf16.msra.mxu0 %v2839
  %2866 = vmatprep.subr.bf16.mxu0 0
  %2867 = vmatpush2.bf16.msra.mxu0 0
  %2868 = vmatprep.subr.bf16.mxu0 0
  %2869 = vmatpush2.bf16.msra.mxu0 0
  %2870 = vmatprep.subr.bf16.mxu0 0
  %2871 = vmatpush2.bf16.msra.mxu0 0
  %2872 = vmatprep.subr.bf16.mxu0 0
  %2873 = vmatpush2.bf16.msra.mxu0 0
  %2874 = vmatprep.subr.bf16.mxu0 0
  %2875 = vmatpush2.bf16.msra.mxu0 0
  %2876 = vmatprep.subr.bf16.mxu0 0
  %2877 = vmatpush2.bf16.msra.mxu0 0
  %2878 = vmatprep.subr.bf16.mxu0 0
  %2879 = vmatpush2.bf16.msra.mxu0 0
  %2880 = vmatprep.subr.bf16.mxu0 0
  %2881 = vmatpush2.bf16.msra.mxu0 0
  %2882 = vmatprep.mubr.bf16.mxu0 0
  %2883 = vmatmul.mubr.bf16.gmra.mxu0 %v2848
  %v2884 = vpop.f32.mrf.mxu0
  %v2885 = vadd.f32 %v1615, %v2884
  %v2886 = vpop.f32.mrf.mxu0
  %v2887 = vpop.f32.mrf.mxu0
  %v2888 = vpop.f32.mrf.mxu0
  %2889 = vdwg.mxu0
  %v2890 = vld [vmem:[%s11] sm:$0x3f]
  %v2891 = vsel %vm101, %v2885, 0.0
  %2892 = vadd.xlane.f32.xlu0 %v2891
  %v2893 = vpop.xlane.xlu0 %2892
  %v2894 = vmul.f32 %v2893, %v105
  %v2895 = vsub.f32 %v2885, %v2894
  %v2896 = vmul.f32 %v2895, %v2895
  %v2897 = vsel %vm101, %v2896, 0.0
  %2898 = vadd.xlane.f32.xlu0 %v2897
  %v2899 = vpop.xlane.xlu0 %2898
  %v2900 = vmul.f32 %v2899, %v105
  %v2901 = vadd.f32 %v2900, 1e-05
  %v2902 = vrsqrt.pop %v2901
  %v2903 = vmul.f32 %v2895, %v2902
  %v2904 = vlaneseq
  %v2905 = vshrl.u32 %v2904, 7
  %v2906 = vsub.s32 0, %v2905
  %v2907 = vrot.slane %v2890, %v2906
  %v2908 = vmul.f32 %v2903, %v2907
  %v2909 = vlaneseq
  %v2910 = vshrl.u32 %v2909, 7
  %v2911 = vsub.s32 1, %v2910
  %v2912 = vrot.slane %v2890, %v2911
  %v2913 = vadd.f32 %v2908, %v2912
  %v2914 = vpack.c.bf16 %v2913, %v2913
  %v2915 = vld [vmem:[%s9] sm:$0xf]
  %v2916 = vld [vmem:[%s9 + $0x4] sm:$0xf]
  %v2917 = vld [vmem:[%s9 + $0x8] sm:$0xf]
  %v2918 = vld [vmem:[%s9 + $0xc] sm:$0xf]
  %v2919 = vlaneseq
  %v2920 = vshrl.u32 %v2919, 7
  %v2921 = vsub.s32 2, %v2920
  %v2922 = vrot.slane %v2890, %v2921
  %v2927 = vunpack.c.l.b16 %v2915
  %v2928 = vunpack.c.l.b16 %v2916
  %v2929 = vunpack.c.l.b16 %v2917
  %v2930 = vunpack.c.l.b16 %v2918
  %v2931 = vpack.c.b16 %v2928, %v2927
  %v2932 = vpack.c.b16 %v2930, %v2929
  %v2936 = vsel %vm101, %v2914, 0
  %2938 = vmatprep.subr.bf16.mxu0 0
  %2939 = vmatpush1.bf16.msra.mxu0 0
  %2940 = vmatprep.subr.bf16.mxu0 0
  %2941 = vmatpush1.bf16.msra.mxu0 0
  %2942 = vmatprep.subr.bf16.mxu0 0
  %2943 = vmatpush1.bf16.msra.mxu0 0
  %2944 = vmatprep.subr.bf16.mxu0 0
  %2945 = vmatpush1.bf16.msra.mxu0 0
  %2946 = vmatprep.subr.bf16.mxu0 0
  %2947 = vmatpush1.bf16.msra.mxu0 0
  %2948 = vmatprep.subr.bf16.mxu0 0
  %2949 = vmatpush1.bf16.msra.mxu0 0
  %2950 = vmatprep.subr.bf16.mxu0 0
  %2951 = vmatpush1.bf16.msra.mxu0 %v2932
  %2952 = vmatprep.subr.bf16.mxu0 0
  %2953 = vmatpush1.bf16.msra.mxu0 %v2931
  %2954 = vmatprep.subr.bf16.mxu0 0
  %2955 = vmatpush2.bf16.msra.mxu0 0
  %2956 = vmatprep.subr.bf16.mxu0 0
  %2957 = vmatpush2.bf16.msra.mxu0 0
  %2958 = vmatprep.subr.bf16.mxu0 0
  %2959 = vmatpush2.bf16.msra.mxu0 0
  %2960 = vmatprep.subr.bf16.mxu0 0
  %2961 = vmatpush2.bf16.msra.mxu0 0
  %2962 = vmatprep.subr.bf16.mxu0 0
  %2963 = vmatpush2.bf16.msra.mxu0 0
  %2964 = vmatprep.subr.bf16.mxu0 0
  %2965 = vmatpush2.bf16.msra.mxu0 0
  %2966 = vmatprep.subr.bf16.mxu0 0
  %2967 = vmatpush2.bf16.msra.mxu0 0
  %2968 = vmatprep.subr.bf16.mxu0 0
  %2969 = vmatpush2.bf16.msra.mxu0 0
  %2970 = vmatprep.mubr.bf16.mxu0 0
  %2971 = vmatmul.mubr.bf16.gmra.mxu0 %v2936
  %v2972 = vpop.f32.mrf.mxu0
  %v2973 = vadd.f32 %v2922, %v2972
  %v2974 = vpop.f32.mrf.mxu0
  %v2975 = vpop.f32.mrf.mxu0
  %v2976 = vpop.f32.mrf.mxu0
  %2977 = vdwg.mxu0
  %v2978 = vmul.f32 %v2973, 0.5
  %v2979 = vmul.f32 %v2973, 0.044715
  %v2980 = vmul.f32 %v2979, %v2973
  %v2981 = vmul.f32 %v2980, %v2973
  %v2982 = vadd.f32 %v2973, %v2981
  %v2983 = vmul.f32 %v2982, 0.7978846
  %v2984 = vtanh.pop %v2983
  %v2985 = vadd.f32 %v2984, 1.0
  %v2986 = vmul.f32 %v2978, %v2985
  %v2987 = vsel %vm57, %v2986, 0.0
  %2988 = vadd.xlane.f32.xlu0 %v2987
  %v2989 = vpop.xlane.xlu0 %2988
  %v2990 = vrcp.pop 16.0
  %v2991 = vmul.f32 %v2989, %v2990
  %v2992 = vsub.f32 %v2986, %v2991
  %v2993 = vmul.f32 %v2992, %v2992
  %v2994 = vsel %vm57, %v2993, 0.0
  %2995 = vadd.xlane.f32.xlu0 %v2994
  %v2996 = vpop.xlane.xlu0 %2995
  %v2997 = vmul.f32 %v2996, %v2990
  %v2998 = vadd.f32 %v2997, 1e-05
  %v2999 = vrsqrt.pop %v2998
  %v3000 = vmul.f32 %v2992, %v2999
  %v3001 = vlaneseq
  %v3002 = vshrl.u32 %v3001, 7
  %v3003 = vsub.s32 3, %v3002
  %v3004 = vrot.slane %v2890, %v3003
  %v3005 = vmul.f32 %v3000, %v3004
  %v3006 = vlaneseq
  %v3007 = vshrl.u32 %v3006, 7
  %v3008 = vsub.s32 4, %v3007
  %v3009 = vrot.slane %v2890, %v3008
  %v3010 = vadd.f32 %v3005, %v3009
  %v3011 = vpack.c.bf16 %v3010, %v3010
  %v3012 = vld [vmem:[%s10] sm:$0xf]
  %v3013 = vld [vmem:[%s10 + $0x4] sm:$0xf]
  %v3014 = vlaneseq
  %v3015 = vshrl.u32 %v3014, 7
  %v3016 = vsub.s32 5, %v3015
  %v3017 = vrot.slane %v2890, %v3016
  %v3020 = vunpack.c.l.b16 %v3012
  %v3021 = vunpack.c.l.b16 %v3013
  %v3022 = vpack.c.b16 %v3021, %v3020
  %v3025 = vsel %vm57, %v3011, 0
  %3027 = vmatprep.subr.bf16.mxu0 0
  %3028 = vmatpush1.bf16.msra.mxu0 0
  %3029 = vmatprep.subr.bf16.mxu0 0
  %3030 = vmatpush1.bf16.msra.mxu0 0
  %3031 = vmatprep.subr.bf16.mxu0 0
  %3032 = vmatpush1.bf16.msra.mxu0 0
  %3033 = vmatprep.subr.bf16.mxu0 0
  %3034 = vmatpush1.bf16.msra.mxu0 0
  %3035 = vmatprep.subr.bf16.mxu0 0
  %3036 = vmatpush1.bf16.msra.mxu0 0
  %3037 = vmatprep.subr.bf16.mxu0 0
  %3038 = vmatpush1.bf16.msra.mxu0 0
  %3039 = vmatprep.subr.bf16.mxu0 0
  %3040 = vmatpush1.bf16.msra.mxu0 0
  %3041 = vmatprep.subr.bf16.mxu0 0
  %3042 = vmatpush1.bf16.msra.mxu0 %v3022
  %3043 = vmatprep.subr.bf16.mxu0 0
  %3044 = vmatpush2.bf16.msra.mxu0 0
  %3045 = vmatprep.subr.bf16.mxu0 0
  %3046 = vmatpush2.bf16.msra.mxu0 0
  %3047 = vmatprep.subr.bf16.mxu0 0
  %3048 = vmatpush2.bf16.msra.mxu0 0
  %3049 = vmatprep.subr.bf16.mxu0 0
  %3050 = vmatpush2.bf16.msra.mxu0 0
  %3051 = vmatprep.subr.bf16.mxu0 0
  %3052 = vmatpush2.bf16.msra.mxu0 0
  %3053 = vmatprep.subr.bf16.mxu0 0
  %3054 = vmatpush2.bf16.msra.mxu0 0
  %3055 = vmatprep.subr.bf16.mxu0 0
  %3056 = vmatpush2.bf16.msra.mxu0 0
  %3057 = vmatprep.subr.bf16.mxu0 0
  %3058 = vmatpush2.bf16.msra.mxu0 0
  %3059 = vmatprep.mubr.bf16.mxu0 0
  %3060 = vmatmul.mubr.bf16.gmra.mxu0 %v3025
  %v3061 = vpop.f32.mrf.mxu0
  %v3062 = vadd.f32 %v3017, %v3061
  %v3063 = vpop.f32.mrf.mxu0
  %v3064 = vpop.f32.mrf.mxu0
  %v3065 = vpop.f32.mrf.mxu0
  %3066 = vdwg.mxu0
  %v3067 = vtanh.pop %v3062
  %3068 = vst [vmem:[%s12] sm:$0xff] %v3067
  // Predicated region
  $region50: #{net_forward.1} parent=0 // pred_check
    _
  $region51: #{net_forward.1} parent=0 // pred_check_branch
    %3070 = sbr.rel (0) target = $region53
  $region52: #{net_forward.1} parent=0 // pred_region
    _
  $region53: #{net_forward.1} parent=0 // pred_fallthru
    _
  // Predicated region
  $region54: #{net_forward.1} parent=0 // pred_check
    _
  $region55: #{net_forward.1} parent=0 // pred_check_branch
    %3072 = sbr.rel (0) target = $region57
  $region56: #{net_forward.1} parent=0 // pred_region
    _
  $region57: #{net_forward.1} parent=0 // pred_fallthru
    _

</llo_original>
